<compile_context>
chip_gen: v5e
topology: v5e:2x2
jax: 0.10.0
libtpu: 0.0.40
codegen_flags: <defaults>
</compile_context>

<pallas_src>
import math

import jax
import jax.numpy as jnp
from jax.experimental import pallas as pl
from jax.experimental.pallas import tpu as pltpu

SQRT_2_OVER_PI = math.sqrt(2.0 / math.pi)


def _gelu_tanh(x):
    # Exact tanh-GELU from the PyTorch module.
    return 0.5 * x * (1.0 + jnp.tanh(SQRT_2_OVER_PI * (x + 0.044715 * x * x * x)))


# ---------------------------------------------------------------------------
# Parameter init (deterministic, PyTorch-Conv2d-like uniform bounds), HWIO.
# ---------------------------------------------------------------------------
def init_conv(key, cin, cout, k):
    kw_, kb_ = jax.random.split(key)
    fan_in = cin * k * k
    bound = 1.0 / math.sqrt(fan_in)
    w = jax.random.uniform(kw_, (k, k, cin, cout), jnp.float32, -bound, bound)
    b = jax.random.uniform(kb_, (cout,), jnp.float32, -bound, bound)
    return w, b


def build_unet_params(key, in_channels, channel_multiplier, num_blocks, conv_kernel):
    # channel signature exactly as in UNet.__init__ (chains only for num_blocks == 3)
    chans = [(in_channels, channel_multiplier)]
    for i in range(1, num_blocks):
        chans.append((channel_multiplier * i, channel_multiplier * 2 * i))
    params = []
    for (cin, cout) in chans:
        layers = []
        for (ci, co) in [(cin, cout), (cout, cout), (cout, cout)]:
            key, sub = jax.random.split(key)
            layers.append(init_conv(sub, ci, co, conv_kernel))
        params.append(layers)
    return params, key


# ---------------------------------------------------------------------------
# Weight preprocessing: block-Toeplitz matrices over the UNPADDED width.
#
#   T_kh[wi*Cin + ci, w*Cout + co] = W[kh, wi - w + pad, ci, co]
#
# whenever the tap index wi - w + pad lies in [0, K); taps that would read the
# zero 'same' padding simply vanish, so the kernel never stages W-direction
# padding (full-lane, lane-offset-0 stores) and the contraction is W*Cin.
#
# If pool_phases is set, the output w-blocks are permuted into pool phase
# groups [w%k==0 | w%k==1 | ...] so the W-direction max-pool becomes a max
# over contiguous lane slices inside the kernel.
# ---------------------------------------------------------------------------
def _toeplitz_weights(w_hwio, w_out, pad, pool_phases=None):
    K, _, cin, cout = w_hwio.shape
    mats = []
    for kh in range(K):
        t = jnp.zeros((w_out, cin, w_out, cout), w_hwio.dtype)
        for kw in range(K):
            # output column w reads input column wi = w + kw - pad
            lo = max(0, pad - kw)
            hi = min(w_out, w_out + pad - kw)
            if lo >= hi:
                continue
            w_idx = jnp.arange(lo, hi)
            wi_idx = w_idx + (kw - pad)
            t = t.at[wi_idx, :, w_idx, :].add(w_hwio[kh, kw][None, :, :])
        if pool_phases is not None:
            perm = jnp.concatenate(
                [jnp.arange(p, w_out, pool_phases) for p in range(pool_phases)])
            t = t[:, :, perm, :]
        mats.append(t.reshape(w_out * cin, w_out * cout))
    return jnp.stack(mats, axis=0)  # (K, W*Cin, W*Cout)


# ---------------------------------------------------------------------------
# Fused kernel: the whole UNet forward for a block of B batch elements per
# grid step.  The batch block is statically unrolled inside the kernel.
# ---------------------------------------------------------------------------
def _make_fused_kernel(plan, batch_block):
    n_conv = len(plan)
    B = batch_block

    def kernel(x_ref, *refs):
        w_refs = refs[0:2 * n_conv:2]
        b_refs = refs[1:2 * n_conv:2]
        out_ref = refs[2 * n_conv]
        pad_refs = refs[2 * n_conv + 1:]

        # Per-image 2D activations (flattened NHWC rows), unrolled over B.
        hs = [x_ref[b] for b in range(B)]

        for j, m in enumerate(plan):
            H, W, Cin, Cout = m["H"], m["W"], m["Cin"], m["Cout"]
            K, pad, pool = m["K"], m["pad"], m["pool_after"]
            Hp = H + 2 * pad
            pr = pad_refs[j]                      # (B, Hp, W*Cin) VMEM scratch

            # Stage the activation with zero top/bottom halo rows.  Only the
            # 2*pad halo rows are (re)zeroed; this is done every step because
            # under "parallel" semantics each TensorCore owns its own scratch
            # copy, so a program_id==0-only fill would be unsafe.  The stores
            # start at lane offset 0 (W padding lives in the Toeplitz weights).
            zrow = jnp.zeros((pad, W * Cin), jnp.float32)
            for b in range(B):
                pr[b, 0:pad, :] = zrow
                pr[b, pad:pad + H, :] = hs[b]
                pr[b, pad + H:Hp, :] = zrow

            new_hs = []
            for b in range(B):
                # K deep row-slab matmuls instead of K*K skinny tap matmuls.
                acc = jnp.zeros((H, W * Cout), jnp.float32)
                for kh in range(K):
                    acc = acc + jnp.dot(pr[b, kh:kh + H, :], w_refs[j][kh],
                                        preferred_element_type=jnp.float32)
                y = _gelu_tanh(acc + b_refs[j][...])   # (H, W*Cout), lane-dense

                if pool is None:
                    new_hs.append(y)
                else:
                    # Fused MaxPool(pool, pool), GELU applied before the max
                    # exactly as in the module.
                    k = pool
                    Ho = H // k
                    half = (W // k) * Cout
                    # W direction: Toeplitz columns were pre-permuted into
                    # `pool` phase groups -> max over contiguous lane slices.
                    r = y[:, 0:half]
                    for p in range(1, k):
                        r = jnp.maximum(r, y[:, p * half:(p + 1) * half])
                    # H direction: reshape-based max over row groups.
                    t = r.reshape(Ho, k, half)
                    z = t[:, 0, :]
                    for p in range(1, k):
                        z = jnp.maximum(z, t[:, p, :])
                    new_hs.append(z)              # (Ho, Wo*Cout)
            hs = new_hs

        for b in range(B):
            out_ref[b] = hs[b].astype(out_ref.dtype)

    return kernel


def _num_tensorcores():
    # v7x has 2 TensorCores per chip; v5e/v6e have 1.  Defensive: default to 1.
    try:
        kind = jax.devices()[0].device_kind.lower()
    except Exception:
        return 1
    return 2 if "v7" in kind else 1


def make_unet_forward(params, *, pool_kernel, pool_stride, height, width):
    """Build a forward(x_nchw) that runs the whole UNet in one pallas_call."""
    # TODO(synk): only the PyTorch-default MaxPool2d case (kernel == stride,
    # evenly divisible spatial dims) is fused; other pooling configs are not
    # implemented.
    assert pool_kernel == pool_stride

    num_blocks = len(params)
    plan, weight_args = [], []
    H, W = height, width
    cin = params[0][0][0].shape[2]
    for bi, block in enumerate(params):
        pooled_block = bi < num_blocks - 1
        for li, (w_hwio, b) in enumerate(block):
            K = w_hwio.shape[0]
            pad = K // 2
            assert w_hwio.shape[2] == cin, "channel chain mismatch"
            cout = w_hwio.shape[3]
            pool_after = pool_kernel if (pooled_block and li == len(block) - 1) else None
            if pool_after is not None:
                assert H % pool_after == 0 and W % pool_after == 0
            plan.append(dict(H=H, W=W, Cin=cin, Cout=cout, K=K, pad=pad,
                             pool_after=pool_after))
            weight_args.append(_toeplitz_weights(w_hwio, W, pad, pool_after))
            # Bias is w-invariant, so tiling it per output column stays correct
            # even for pool-phase-permuted layers (the permutation only moves
            # whole Cout-sized w-blocks).  Do NOT switch to a per-position bias
            # without permuting it the same way.
            weight_args.append(jnp.tile(b, W).reshape(1, W * cout))
            cin = cout
            if pool_after is not None:
                H //= pool_after
                W //= pool_after
    h_f, w_f, c_f = H, W, cin
    h0, w0, c0 = height, width, params[0][0][0].shape[2]
    n_cores = _num_tensorcores()

    def forward(x_nchw, wargs):
        N = x_nchw.shape[0]
        # Batch folding: on 2-TC parts give each core one grid step; on
        # single-TC parts run the whole batch in a single step.  Keep the
        # in-kernel batch unroll bounded for large N.
        G = n_cores if (n_cores > 1 and N % n_cores == 0) else 1
        B = N // G
        while B > 8 and B % 2 == 0:
            B //= 2
            G *= 2
        if B > 16:                 # odd, very large batch: fall back per-image
            B, G = 1, N

        kernel = _make_fused_kernel(plan, B)

        in_specs = [pl.BlockSpec((B, h0, w0 * c0), lambda g: (g, 0, 0))]
        for m in plan:
            w_cin = m["W"] * m["Cin"]
            w_cout = m["W"] * m["Cout"]
            in_specs.append(pl.BlockSpec((m["K"], w_cin, w_cout),
                                         lambda g: (0, 0, 0)))
            in_specs.append(pl.BlockSpec((1, w_cout), lambda g: (0, 0)))
        out_spec = pl.BlockSpec((B, h_f, w_f * c_f), lambda g: (g, 0, 0))
        scratch_shapes = [
            pltpu.VMEM((B, m["H"] + 2 * m["pad"], m["W"] * m["Cin"]), jnp.float32)
            for m in plan
        ]

        # NCHW -> flattened NHWC rows (tiny boundary relayout, stays in XLA).
        x_flat = jnp.transpose(x_nchw, (0, 2, 3, 1)).reshape(N, h0, w0 * c0)
        out_flat = pl.pallas_call(
            kernel,
            out_shape=jax.ShapeDtypeStruct((N, h_f, w_f * c_f), x_nchw.dtype),
            grid=(G,),
            in_specs=in_specs,
            out_specs=out_spec,
            scratch_shapes=scratch_shapes,
            compiler_params=pltpu.CompilerParams(
                dimension_semantics=("parallel",)),  # batch across v7x's 2 TCs
        )(x_flat, *wargs)
        return jnp.transpose(out_flat.reshape(N, h_f, w_f, c_f), (0, 3, 1, 2))

    jitted = jax.jit(forward)
    weight_tuple = tuple(weight_args)

    def run(x_nchw):
        return jitted(x_nchw, weight_tuple)

    return run


# ---------------------------------------------------------------------------
# Pure-JAX reference (f32, NHWC, HIGHEST precision) for the correctness check.
# ---------------------------------------------------------------------------
def _ref_conv_gelu(x, w, b):
    y = jax.lax.conv_general_dilated(
        x, w, window_strides=(1, 1), padding="SAME",
        dimension_numbers=("NHWC", "HWIO", "NHWC"),
        precision=jax.lax.Precision.HIGHEST)
    return _gelu_tanh(y + b)


def _ref_maxpool(x, k, s):
    return jax.lax.reduce_window(
        x, -jnp.inf, jax.lax.max, (1, k, k, 1), (1, s, s, 1), "VALID")


def unet_reference(params, x_nchw, pool_kernel, pool_stride):
    x = jnp.transpose(x_nchw, (0, 2, 3, 1))

    def run_block(blk, h):
        for (w, b) in blk:
            h = _ref_conv_gelu(h, w, b)
        return h

    h = _ref_maxpool(run_block(params[0], x), pool_kernel, pool_stride)
    for i in range(1, len(params) - 1):
        h = _ref_maxpool(run_block(params[i], h), pool_kernel, pool_stride)
    out = run_block(params[-1], h)
    return jnp.transpose(out, (0, 3, 1, 2))


if __name__ == "__main__":
    cfg = dict(in_channels=4, channel_multiplier=8, conv_kernel=3,
               pool_kernel=2, pool_stride=2, num_blocks=3)

    key = jax.random.PRNGKey(0)
    params, key = build_unet_params(
        key, cfg["in_channels"], cfg["channel_multiplier"],
        cfg["num_blocks"], cfg["conv_kernel"])

    key, kx = jax.random.split(key)
    x = jax.random.normal(kx, (2, cfg["in_channels"], 16, 16), jnp.float32)  # NCHW

    fwd = make_unet_forward(params,
                            pool_kernel=cfg["pool_kernel"],
                            pool_stride=cfg["pool_stride"],
                            height=16, width=16)
    out = jax.block_until_ready(fwd(x))

    # two 2x2 pools: 16 -> 8 -> 4; final channels = cm * 2 * (num_blocks - 1)
    assert out.shape == (2, cfg["channel_multiplier"] * 2 * (cfg["num_blocks"] - 1), 4, 4)

    ref = jax.block_until_ready(
        unet_reference(params, x, cfg["pool_kernel"], cfg["pool_stride"]))
    max_err = float(jnp.max(jnp.abs(out - ref)))
    if not bool(jnp.allclose(out, ref, atol=1e-3, rtol=1e-3)):
        raise AssertionError(f"Pallas UNet mismatch, max abs err = {max_err}")

    print("KERNEL_OK")
</pallas_src>

<mosaic_0001>
module attributes {stable_mosaic.version = 11 : i64} {
  func.func @kernel(%arg0: i32, %arg1: memref<2x16x64xf32, #tpu.memory_space<vmem>>, %arg2: memref<3x64x128xf32, #tpu.memory_space<vmem>>, %arg3: memref<1x128xf32, #tpu.memory_space<vmem>>, %arg4: memref<3x128x128xf32, #tpu.memory_space<vmem>>, %arg5: memref<1x128xf32, #tpu.memory_space<vmem>>, %arg6: memref<3x128x128xf32, #tpu.memory_space<vmem>>, %arg7: memref<1x128xf32, #tpu.memory_space<vmem>>, %arg8: memref<3x64x128xf32, #tpu.memory_space<vmem>>, %arg9: memref<1x128xf32, #tpu.memory_space<vmem>>, %arg10: memref<3x128x128xf32, #tpu.memory_space<vmem>>, %arg11: memref<1x128xf32, #tpu.memory_space<vmem>>, %arg12: memref<3x128x128xf32, #tpu.memory_space<vmem>>, %arg13: memref<1x128xf32, #tpu.memory_space<vmem>>, %arg14: memref<3x64x128xf32, #tpu.memory_space<vmem>>, %arg15: memref<1x128xf32, #tpu.memory_space<vmem>>, %arg16: memref<3x128x128xf32, #tpu.memory_space<vmem>>, %arg17: memref<1x128xf32, #tpu.memory_space<vmem>>, %arg18: memref<3x128x128xf32, #tpu.memory_space<vmem>>, %arg19: memref<1x128xf32, #tpu.memory_space<vmem>>, %arg20: memref<2x4x128xf32, #tpu.memory_space<vmem>>, %arg21: memref<2x18x64xf32, #tpu.memory_space<vmem>>, %arg22: memref<2x18x128xf32, #tpu.memory_space<vmem>>, %arg23: memref<2x18x128xf32, #tpu.memory_space<vmem>>, %arg24: memref<2x10x64xf32, #tpu.memory_space<vmem>>, %arg25: memref<2x10x128xf32, #tpu.memory_space<vmem>>, %arg26: memref<2x10x128xf32, #tpu.memory_space<vmem>>, %arg27: memref<2x6x64xf32, #tpu.memory_space<vmem>>, %arg28: memref<2x6x128xf32, #tpu.memory_space<vmem>>, %arg29: memref<2x6x128xf32, #tpu.memory_space<vmem>>) attributes {dimension_semantics = [#tpu.dimension_semantics<parallel>], iteration_bounds = array<i64: 1>, scalar_prefetch = 0 : i64, scratch_operands = 9 : i64, tpu.core_type = #tpu.core_type<tc>, window_params = [{transform_indices = @transform_0, window_bounds = array<i64: 2, 16, 64>}, {pipeline_mode = #tpu.pipeline_mode<synchronous>, transform_indices = @transform_1, window_bounds = array<i64: 3, 64, 128>}, {pipeline_mode = #tpu.pipeline_mode<synchronous>, transform_indices = @transform_2, window_bounds = array<i64: 1, 128>}, {pipeline_mode = #tpu.pipeline_mode<synchronous>, transform_indices = @transform_3, window_bounds = array<i64: 3, 128, 128>}, {pipeline_mode = #tpu.pipeline_mode<synchronous>, transform_indices = @transform_4, window_bounds = array<i64: 1, 128>}, {pipeline_mode = #tpu.pipeline_mode<synchronous>, transform_indices = @transform_5, window_bounds = array<i64: 3, 128, 128>}, {pipeline_mode = #tpu.pipeline_mode<synchronous>, transform_indices = @transform_6, window_bounds = array<i64: 1, 128>}, {pipeline_mode = #tpu.pipeline_mode<synchronous>, transform_indices = @transform_7, window_bounds = array<i64: 3, 64, 128>}, {pipeline_mode = #tpu.pipeline_mode<synchronous>, transform_indices = @transform_8, window_bounds = array<i64: 1, 128>}, {pipeline_mode = #tpu.pipeline_mode<synchronous>, transform_indices = @transform_9, window_bounds = array<i64: 3, 128, 128>}, {pipeline_mode = #tpu.pipeline_mode<synchronous>, transform_indices = @transform_10, window_bounds = array<i64: 1, 128>}, {pipeline_mode = #tpu.pipeline_mode<synchronous>, transform_indices = @transform_11, window_bounds = array<i64: 3, 128, 128>}, {pipeline_mode = #tpu.pipeline_mode<synchronous>, transform_indices = @transform_12, window_bounds = array<i64: 1, 128>}, {pipeline_mode = #tpu.pipeline_mode<synchronous>, transform_indices = @transform_13, window_bounds = array<i64: 3, 64, 128>}, {pipeline_mode = #tpu.pipeline_mode<synchronous>, transform_indices = @transform_14, window_bounds = array<i64: 1, 128>}, {pipeline_mode = #tpu.pipeline_mode<synchronous>, transform_indices = @transform_15, window_bounds = array<i64: 3, 128, 128>}, {pipeline_mode = #tpu.pipeline_mode<synchronous>, transform_indices = @transform_16, window_bounds = array<i64: 1, 128>}, {pipeline_mode = #tpu.pipeline_mode<synchronous>, transform_indices = @transform_17, window_bounds = array<i64: 3, 128, 128>}, {pipeline_mode = #tpu.pipeline_mode<synchronous>, transform_indices = @transform_18, window_bounds = array<i64: 1, 128>}, {transform_indices = @transform_19, window_bounds = array<i64: 2, 4, 128>}]} {
    %c0 = arith.constant 0 : index
    %c0_0 = arith.constant 0 : index
    %c0_1 = arith.constant 0 : index
    %0 = vector.load %arg1[%c0, %c0_0, %c0_1] : memref<2x16x64xf32, #tpu.memory_space<vmem>>, vector<1x16x64xf32>
    %1 = vector.shape_cast %0 : vector<1x16x64xf32> to vector<16x64xf32>
    %c1 = arith.constant 1 : index
    %c0_2 = arith.constant 0 : index
    %c0_3 = arith.constant 0 : index
    %2 = vector.load %arg1[%c1, %c0_2, %c0_3] : memref<2x16x64xf32, #tpu.memory_space<vmem>>, vector<1x16x64xf32>
    %3 = vector.shape_cast %2 : vector<1x16x64xf32> to vector<16x64xf32>
    %cst = arith.constant 0.000000e+00 : f32
    %4 = vector.broadcast %cst : f32 to vector<1x64xf32>
    %c0_4 = arith.constant 0 : index
    %c0_5 = arith.constant 0 : index
    %c0_6 = arith.constant 0 : index
    %5 = vector.load %arg21[%c0_4, %c0_5, %c0_6] : memref<2x18x64xf32, #tpu.memory_space<vmem>>, vector<1x1x64xf32>
    %6 = vector.shape_cast %5 : vector<1x1x64xf32> to vector<1x64xf32>
    %7 = vector.shape_cast %4 : vector<1x64xf32> to vector<1x1x64xf32>
    tpu.vector_store %arg21[%c0_4, %c0_5, %c0_6], %7 {strides = array<i32>} : memref<2x18x64xf32, #tpu.memory_space<vmem>>, vector<1x1x64xf32>,
    %c0_7 = arith.constant 0 : index
    %c1_8 = arith.constant 1 : index
    %c0_9 = arith.constant 0 : index
    %8 = vector.load %arg21[%c0_7, %c1_8, %c0_9] : memref<2x18x64xf32, #tpu.memory_space<vmem>>, vector<1x16x64xf32>
    %9 = vector.shape_cast %8 : vector<1x16x64xf32> to vector<16x64xf32>
    %10 = vector.shape_cast %1 : vector<16x64xf32> to vector<1x16x64xf32>
    tpu.vector_store %arg21[%c0_7, %c1_8, %c0_9], %10 {strides = array<i32>} : memref<2x18x64xf32, #tpu.memory_space<vmem>>, vector<1x16x64xf32>,
    %c0_10 = arith.constant 0 : index
    %c17 = arith.constant 17 : index
    %c0_11 = arith.constant 0 : index
    %11 = vector.load %arg21[%c0_10, %c17, %c0_11] : memref<2x18x64xf32, #tpu.memory_space<vmem>>, vector<1x1x64xf32>
    %12 = vector.shape_cast %11 : vector<1x1x64xf32> to vector<1x64xf32>
    %13 = vector.shape_cast %4 : vector<1x64xf32> to vector<1x1x64xf32>
    tpu.vector_store %arg21[%c0_10, %c17, %c0_11], %13 {strides = array<i32>} : memref<2x18x64xf32, #tpu.memory_space<vmem>>, vector<1x1x64xf32>,
    %c1_12 = arith.constant 1 : index
    %c0_13 = arith.constant 0 : index
    %c0_14 = arith.constant 0 : index
    %14 = vector.load %arg21[%c1_12, %c0_13, %c0_14] : memref<2x18x64xf32, #tpu.memory_space<vmem>>, vector<1x1x64xf32>
    %15 = vector.shape_cast %14 : vector<1x1x64xf32> to vector<1x64xf32>
    %16 = vector.shape_cast %4 : vector<1x64xf32> to vector<1x1x64xf32>
    tpu.vector_store %arg21[%c1_12, %c0_13, %c0_14], %16 {strides = array<i32>} : memref<2x18x64xf32, #tpu.memory_space<vmem>>, vector<1x1x64xf32>,
    %c1_15 = arith.constant 1 : index
    %c1_16 = arith.constant 1 : index
    %c0_17 = arith.constant 0 : index
    %17 = vector.load %arg21[%c1_15, %c1_16, %c0_17] : memref<2x18x64xf32, #tpu.memory_space<vmem>>, vector<1x16x64xf32>
    %18 = vector.shape_cast %17 : vector<1x16x64xf32> to vector<16x64xf32>
    %19 = vector.shape_cast %3 : vector<16x64xf32> to vector<1x16x64xf32>
    tpu.vector_store %arg21[%c1_15, %c1_16, %c0_17], %19 {strides = array<i32>} : memref<2x18x64xf32, #tpu.memory_space<vmem>>, vector<1x16x64xf32>,
    %c1_18 = arith.constant 1 : index
    %c17_19 = arith.constant 17 : index
    %c0_20 = arith.constant 0 : index
    %20 = vector.load %arg21[%c1_18, %c17_19, %c0_20] : memref<2x18x64xf32, #tpu.memory_space<vmem>>, vector<1x1x64xf32>
    %21 = vector.shape_cast %20 : vector<1x1x64xf32> to vector<1x64xf32>
    %22 = vector.shape_cast %4 : vector<1x64xf32> to vector<1x1x64xf32>
    tpu.vector_store %arg21[%c1_18, %c17_19, %c0_20], %22 {strides = array<i32>} : memref<2x18x64xf32, #tpu.memory_space<vmem>>, vector<1x1x64xf32>,
    %cst_21 = arith.constant 0.000000e+00 : f32
    %23 = vector.broadcast %cst_21 : f32 to vector<16x128xf32>
    %c0_22 = arith.constant 0 : index
    %c0_23 = arith.constant 0 : index
    %c0_24 = arith.constant 0 : index
    %24 = vector.load %arg21[%c0_22, %c0_23, %c0_24] : memref<2x18x64xf32, #tpu.memory_space<vmem>>, vector<1x16x64xf32>
    %25 = vector.shape_cast %24 : vector<1x16x64xf32> to vector<16x64xf32>
    %c0_25 = arith.constant 0 : index
    %c0_26 = arith.constant 0 : index
    %c0_27 = arith.constant 0 : index
    %26 = vector.load %arg2[%c0_25, %c0_26, %c0_27] : memref<3x64x128xf32, #tpu.memory_space<vmem>>, vector<1x64x128xf32>
    %27 = vector.shape_cast %26 : vector<1x64x128xf32> to vector<64x128xf32>
    %cst_28 = arith.constant dense<0.000000e+00> : vector<16x128xf32>
    %28 = tpu.matmul %25, %27, %cst_28 {dimension_numbers = #tpu.dot_dimension_numbers<[1], [0], [0], [1], [0, 0, 1, 1], [], []>} : vector<16x64xf32>, vector<64x128xf32>, vector<16x128xf32> -> vector<16x128xf32>
    %29 = arith.addf %23, %28 : vector<16x128xf32>
    %c0_29 = arith.constant 0 : index
    %c1_30 = arith.constant 1 : index
    %c0_31 = arith.constant 0 : index
    %30 = vector.load %arg21[%c0_29, %c1_30, %c0_31] : memref<2x18x64xf32, #tpu.memory_space<vmem>>, vector<1x16x64xf32>
    %31 = vector.shape_cast %30 : vector<1x16x64xf32> to vector<16x64xf32>
    %c1_32 = arith.constant 1 : index
    %c0_33 = arith.constant 0 : index
    %c0_34 = arith.constant 0 : index
    %32 = vector.load %arg2[%c1_32, %c0_33, %c0_34] : memref<3x64x128xf32, #tpu.memory_space<vmem>>, vector<1x64x128xf32>
    %33 = vector.shape_cast %32 : vector<1x64x128xf32> to vector<64x128xf32>
    %cst_35 = arith.constant dense<0.000000e+00> : vector<16x128xf32>
    %34 = tpu.matmul %31, %33, %cst_35 {dimension_numbers = #tpu.dot_dimension_numbers<[1], [0], [0], [1], [0, 0, 1, 1], [], []>} : vector<16x64xf32>, vector<64x128xf32>, vector<16x128xf32> -> vector<16x128xf32>
    %35 = arith.addf %29, %34 : vector<16x128xf32>
    %c0_36 = arith.constant 0 : index
    %c2 = arith.constant 2 : index
    %c0_37 = arith.constant 0 : index
    %36 = vector.load %arg21[%c0_36, %c2, %c0_37] : memref<2x18x64xf32, #tpu.memory_space<vmem>>, vector<1x16x64xf32>
    %37 = vector.shape_cast %36 : vector<1x16x64xf32> to vector<16x64xf32>
    %c2_38 = arith.constant 2 : index
    %c0_39 = arith.constant 0 : index
    %c0_40 = arith.constant 0 : index
    %38 = vector.load %arg2[%c2_38, %c0_39, %c0_40] : memref<3x64x128xf32, #tpu.memory_space<vmem>>, vector<1x64x128xf32>
    %39 = vector.shape_cast %38 : vector<1x64x128xf32> to vector<64x128xf32>
    %cst_41 = arith.constant dense<0.000000e+00> : vector<16x128xf32>
    %40 = tpu.matmul %37, %39, %cst_41 {dimension_numbers = #tpu.dot_dimension_numbers<[1], [0], [0], [1], [0, 0, 1, 1], [], []>} : vector<16x64xf32>, vector<64x128xf32>, vector<16x128xf32> -> vector<16x128xf32>
    %41 = arith.addf %35, %40 : vector<16x128xf32>
    %c0_42 = arith.constant 0 : index
    %c0_43 = arith.constant 0 : index
    %42 = vector.load %arg3[%c0_42, %c0_43] : memref<1x128xf32, #tpu.memory_space<vmem>>, vector<1x128xf32>
    %43 = vector.broadcast %42 : vector<1x128xf32> to vector<16x128xf32>
    %44 = arith.addf %41, %43 : vector<16x128xf32>
    %cst_44 = arith.constant 5.000000e-01 : f32
    %45 = vector.broadcast %cst_44 : f32 to vector<16x128xf32>
    %46 = arith.mulf %45, %44 : vector<16x128xf32>
    %cst_45 = arith.constant 4.471500e-02 : f32
    %47 = vector.broadcast %cst_45 : f32 to vector<16x128xf32>
    %48 = arith.mulf %47, %44 : vector<16x128xf32>
    %49 = arith.mulf %48, %44 : vector<16x128xf32>
    %50 = arith.mulf %49, %44 : vector<16x128xf32>
    %51 = arith.addf %44, %50 : vector<16x128xf32>
    %cst_46 = arith.constant 0.797884583 : f32
    %52 = vector.broadcast %cst_46 : f32 to vector<16x128xf32>
    %53 = arith.mulf %52, %51 : vector<16x128xf32>
    %54 = math.tanh %53 : vector<16x128xf32>
    %cst_47 = arith.constant 1.000000e+00 : f32
    %55 = vector.broadcast %cst_47 : f32 to vector<16x128xf32>
    %56 = arith.addf %55, %54 : vector<16x128xf32>
    %57 = arith.mulf %46, %56 : vector<16x128xf32>
    %cst_48 = arith.constant 0.000000e+00 : f32
    %58 = vector.broadcast %cst_48 : f32 to vector<16x128xf32>
    %c1_49 = arith.constant 1 : index
    %c0_50 = arith.constant 0 : index
    %c0_51 = arith.constant 0 : index
    %59 = vector.load %arg21[%c1_49, %c0_50, %c0_51] : memref<2x18x64xf32, #tpu.memory_space<vmem>>, vector<1x16x64xf32>
    %60 = vector.shape_cast %59 : vector<1x16x64xf32> to vector<16x64xf32>
    %c0_52 = arith.constant 0 : index
    %c0_53 = arith.constant 0 : index
    %c0_54 = arith.constant 0 : index
    %61 = vector.load %arg2[%c0_52, %c0_53, %c0_54] : memref<3x64x128xf32, #tpu.memory_space<vmem>>, vector<1x64x128xf32>
    %62 = vector.shape_cast %61 : vector<1x64x128xf32> to vector<64x128xf32>
    %cst_55 = arith.constant dense<0.000000e+00> : vector<16x128xf32>
    %63 = tpu.matmul %60, %62, %cst_55 {dimension_numbers = #tpu.dot_dimension_numbers<[1], [0], [0], [1], [0, 0, 1, 1], [], []>} : vector<16x64xf32>, vector<64x128xf32>, vector<16x128xf32> -> vector<16x128xf32>
    %64 = arith.addf %58, %63 : vector<16x128xf32>
    %c1_56 = arith.constant 1 : index
    %c1_57 = arith.constant 1 : index
    %c0_58 = arith.constant 0 : index
    %65 = vector.load %arg21[%c1_56, %c1_57, %c0_58] : memref<2x18x64xf32, #tpu.memory_space<vmem>>, vector<1x16x64xf32>
    %66 = vector.shape_cast %65 : vector<1x16x64xf32> to vector<16x64xf32>
    %c1_59 = arith.constant 1 : index
    %c0_60 = arith.constant 0 : index
    %c0_61 = arith.constant 0 : index
    %67 = vector.load %arg2[%c1_59, %c0_60, %c0_61] : memref<3x64x128xf32, #tpu.memory_space<vmem>>, vector<1x64x128xf32>
    %68 = vector.shape_cast %67 : vector<1x64x128xf32> to vector<64x128xf32>
    %cst_62 = arith.constant dense<0.000000e+00> : vector<16x128xf32>
    %69 = tpu.matmul %66, %68, %cst_62 {dimension_numbers = #tpu.dot_dimension_numbers<[1], [0], [0], [1], [0, 0, 1, 1], [], []>} : vector<16x64xf32>, vector<64x128xf32>, vector<16x128xf32> -> vector<16x128xf32>
    %70 = arith.addf %64, %69 : vector<16x128xf32>
    %c1_63 = arith.constant 1 : index
    %c2_64 = arith.constant 2 : index
    %c0_65 = arith.constant 0 : index
    %71 = vector.load %arg21[%c1_63, %c2_64, %c0_65] : memref<2x18x64xf32, #tpu.memory_space<vmem>>, vector<1x16x64xf32>
    %72 = vector.shape_cast %71 : vector<1x16x64xf32> to vector<16x64xf32>
    %c2_66 = arith.constant 2 : index
    %c0_67 = arith.constant 0 : index
    %c0_68 = arith.constant 0 : index
    %73 = vector.load %arg2[%c2_66, %c0_67, %c0_68] : memref<3x64x128xf32, #tpu.memory_space<vmem>>, vector<1x64x128xf32>
    %74 = vector.shape_cast %73 : vector<1x64x128xf32> to vector<64x128xf32>
    %cst_69 = arith.constant dense<0.000000e+00> : vector<16x128xf32>
    %75 = tpu.matmul %72, %74, %cst_69 {dimension_numbers = #tpu.dot_dimension_numbers<[1], [0], [0], [1], [0, 0, 1, 1], [], []>} : vector<16x64xf32>, vector<64x128xf32>, vector<16x128xf32> -> vector<16x128xf32>
    %76 = arith.addf %70, %75 : vector<16x128xf32>
    %c0_70 = arith.constant 0 : index
    %c0_71 = arith.constant 0 : index
    %77 = vector.load %arg3[%c0_70, %c0_71] : memref<1x128xf32, #tpu.memory_space<vmem>>, vector<1x128xf32>
    %78 = vector.broadcast %77 : vector<1x128xf32> to vector<16x128xf32>
    %79 = arith.addf %76, %78 : vector<16x128xf32>
    %cst_72 = arith.constant 5.000000e-01 : f32
    %80 = vector.broadcast %cst_72 : f32 to vector<16x128xf32>
    %81 = arith.mulf %80, %79 : vector<16x128xf32>
    %cst_73 = arith.constant 4.471500e-02 : f32
    %82 = vector.broadcast %cst_73 : f32 to vector<16x128xf32>
    %83 = arith.mulf %82, %79 : vector<16x128xf32>
    %84 = arith.mulf %83, %79 : vector<16x128xf32>
    %85 = arith.mulf %84, %79 : vector<16x128xf32>
    %86 = arith.addf %79, %85 : vector<16x128xf32>
    %cst_74 = arith.constant 0.797884583 : f32
    %87 = vector.broadcast %cst_74 : f32 to vector<16x128xf32>
    %88 = arith.mulf %87, %86 : vector<16x128xf32>
    %89 = math.tanh %88 : vector<16x128xf32>
    %cst_75 = arith.constant 1.000000e+00 : f32
    %90 = vector.broadcast %cst_75 : f32 to vector<16x128xf32>
    %91 = arith.addf %90, %89 : vector<16x128xf32>
    %92 = arith.mulf %81, %91 : vector<16x128xf32>
    %cst_76 = arith.constant 0.000000e+00 : f32
    %93 = vector.broadcast %cst_76 : f32 to vector<1x128xf32>
    %c0_77 = arith.constant 0 : index
    %c0_78 = arith.constant 0 : index
    %c0_79 = arith.constant 0 : index
    %94 = vector.load %arg22[%c0_77, %c0_78, %c0_79] : memref<2x18x128xf32, #tpu.memory_space<vmem>>, vector<1x1x128xf32>
    %95 = vector.shape_cast %94 : vector<1x1x128xf32> to vector<1x128xf32>
    %96 = vector.shape_cast %93 : vector<1x128xf32> to vector<1x1x128xf32>
    tpu.vector_store %arg22[%c0_77, %c0_78, %c0_79], %96 {strides = array<i32>} : memref<2x18x128xf32, #tpu.memory_space<vmem>>, vector<1x1x128xf32>,
    %c0_80 = arith.constant 0 : index
    %c1_81 = arith.constant 1 : index
    %c0_82 = arith.constant 0 : index
    %97 = vector.load %arg22[%c0_80, %c1_81, %c0_82] : memref<2x18x128xf32, #tpu.memory_space<vmem>>, vector<1x16x128xf32>
    %98 = vector.shape_cast %97 : vector<1x16x128xf32> to vector<16x128xf32>
    %99 = vector.shape_cast %57 : vector<16x128xf32> to vector<1x16x128xf32>
    tpu.vector_store %arg22[%c0_80, %c1_81, %c0_82], %99 {strides = array<i32>} : memref<2x18x128xf32, #tpu.memory_space<vmem>>, vector<1x16x128xf32>,
    %c0_83 = arith.constant 0 : index
    %c17_84 = arith.constant 17 : index
    %c0_85 = arith.constant 0 : index
    %100 = vector.load %arg22[%c0_83, %c17_84, %c0_85] : memref<2x18x128xf32, #tpu.memory_space<vmem>>, vector<1x1x128xf32>
    %101 = vector.shape_cast %100 : vector<1x1x128xf32> to vector<1x128xf32>
    %102 = vector.shape_cast %93 : vector<1x128xf32> to vector<1x1x128xf32>
    tpu.vector_store %arg22[%c0_83, %c17_84, %c0_85], %102 {strides = array<i32>} : memref<2x18x128xf32, #tpu.memory_space<vmem>>, vector<1x1x128xf32>,
    %c1_86 = arith.constant 1 : index
    %c0_87 = arith.constant 0 : index
    %c0_88 = arith.constant 0 : index
    %103 = vector.load %arg22[%c1_86, %c0_87, %c0_88] : memref<2x18x128xf32, #tpu.memory_space<vmem>>, vector<1x1x128xf32>
    %104 = vector.shape_cast %103 : vector<1x1x128xf32> to vector<1x128xf32>
    %105 = vector.shape_cast %93 : vector<1x128xf32> to vector<1x1x128xf32>
    tpu.vector_store %arg22[%c1_86, %c0_87, %c0_88], %105 {strides = array<i32>} : memref<2x18x128xf32, #tpu.memory_space<vmem>>, vector<1x1x128xf32>,
    %c1_89 = arith.constant 1 : index
    %c1_90 = arith.constant 1 : index
    %c0_91 = arith.constant 0 : index
    %106 = vector.load %arg22[%c1_89, %c1_90, %c0_91] : memref<2x18x128xf32, #tpu.memory_space<vmem>>, vector<1x16x128xf32>
    %107 = vector.shape_cast %106 : vector<1x16x128xf32> to vector<16x128xf32>
    %108 = vector.shape_cast %92 : vector<16x128xf32> to vector<1x16x128xf32>
    tpu.vector_store %arg22[%c1_89, %c1_90, %c0_91], %108 {strides = array<i32>} : memref<2x18x128xf32, #tpu.memory_space<vmem>>, vector<1x16x128xf32>,
    %c1_92 = arith.constant 1 : index
    %c17_93 = arith.constant 17 : index
    %c0_94 = arith.constant 0 : index
    %109 = vector.load %arg22[%c1_92, %c17_93, %c0_94] : memref<2x18x128xf32, #tpu.memory_space<vmem>>, vector<1x1x128xf32>
    %110 = vector.shape_cast %109 : vector<1x1x128xf32> to vector<1x128xf32>
    %111 = vector.shape_cast %93 : vector<1x128xf32> to vector<1x1x128xf32>
    tpu.vector_store %arg22[%c1_92, %c17_93, %c0_94], %111 {strides = array<i32>} : memref<2x18x128xf32, #tpu.memory_space<vmem>>, vector<1x1x128xf32>,
    %cst_95 = arith.constant 0.000000e+00 : f32
    %112 = vector.broadcast %cst_95 : f32 to vector<16x128xf32>
    %c0_96 = arith.constant 0 : index
    %c0_97 = arith.constant 0 : index
    %c0_98 = arith.constant 0 : index
    %113 = vector.load %arg22[%c0_96, %c0_97, %c0_98] : memref<2x18x128xf32, #tpu.memory_space<vmem>>, vector<1x16x128xf32>
    %114 = vector.shape_cast %113 : vector<1x16x128xf32> to vector<16x128xf32>
    %c0_99 = arith.constant 0 : index
    %c0_100 = arith.constant 0 : index
    %c0_101 = arith.constant 0 : index
    %115 = vector.load %arg4[%c0_99, %c0_100, %c0_101] : memref<3x128x128xf32, #tpu.memory_space<vmem>>, vector<1x128x128xf32>
    %116 = vector.shape_cast %115 : vector<1x128x128xf32> to vector<128x128xf32>
    %cst_102 = arith.constant dense<0.000000e+00> : vector<16x128xf32>
    %117 = tpu.matmul %114, %116, %cst_102 {dimension_numbers = #tpu.dot_dimension_numbers<[1], [0], [0], [1], [0, 0, 1, 1], [], []>} : vector<16x128xf32>, vector<128x128xf32>, vector<16x128xf32> -> vector<16x128xf32>
    %118 = arith.addf %112, %117 : vector<16x128xf32>
    %c0_103 = arith.constant 0 : index
    %c1_104 = arith.constant 1 : index
    %c0_105 = arith.constant 0 : index
    %119 = vector.load %arg22[%c0_103, %c1_104, %c0_105] : memref<2x18x128xf32, #tpu.memory_space<vmem>>, vector<1x16x128xf32>
    %120 = vector.shape_cast %119 : vector<1x16x128xf32> to vector<16x128xf32>
    %c1_106 = arith.constant 1 : index
    %c0_107 = arith.constant 0 : index
    %c0_108 = arith.constant 0 : index
    %121 = vector.load %arg4[%c1_106, %c0_107, %c0_108] : memref<3x128x128xf32, #tpu.memory_space<vmem>>, vector<1x128x128xf32>
    %122 = vector.shape_cast %121 : vector<1x128x128xf32> to vector<128x128xf32>
    %cst_109 = arith.constant dense<0.000000e+00> : vector<16x128xf32>
    %123 = tpu.matmul %120, %122, %cst_109 {dimension_numbers = #tpu.dot_dimension_numbers<[1], [0], [0], [1], [0, 0, 1, 1], [], []>} : vector<16x128xf32>, vector<128x128xf32>, vector<16x128xf32> -> vector<16x128xf32>
    %124 = arith.addf %118, %123 : vector<16x128xf32>
    %c0_110 = arith.constant 0 : index
    %c2_111 = arith.constant 2 : index
    %c0_112 = arith.constant 0 : index
    %125 = vector.load %arg22[%c0_110, %c2_111, %c0_112] : memref<2x18x128xf32, #tpu.memory_space<vmem>>, vector<1x16x128xf32>
    %126 = vector.shape_cast %125 : vector<1x16x128xf32> to vector<16x128xf32>
    %c2_113 = arith.constant 2 : index
    %c0_114 = arith.constant 0 : index
    %c0_115 = arith.constant 0 : index
    %127 = vector.load %arg4[%c2_113, %c0_114, %c0_115] : memref<3x128x128xf32, #tpu.memory_space<vmem>>, vector<1x128x128xf32>
    %128 = vector.shape_cast %127 : vector<1x128x128xf32> to vector<128x128xf32>
    %cst_116 = arith.constant dense<0.000000e+00> : vector<16x128xf32>
    %129 = tpu.matmul %126, %128, %cst_116 {dimension_numbers = #tpu.dot_dimension_numbers<[1], [0], [0], [1], [0, 0, 1, 1], [], []>} : vector<16x128xf32>, vector<128x128xf32>, vector<16x128xf32> -> vector<16x128xf32>
    %130 = arith.addf %124, %129 : vector<16x128xf32>
    %c0_117 = arith.constant 0 : index
    %c0_118 = arith.constant 0 : index
    %131 = vector.load %arg5[%c0_117, %c0_118] : memref<1x128xf32, #tpu.memory_space<vmem>>, vector<1x128xf32>
    %132 = vector.broadcast %131 : vector<1x128xf32> to vector<16x128xf32>
    %133 = arith.addf %130, %132 : vector<16x128xf32>
    %cst_119 = arith.constant 5.000000e-01 : f32
    %134 = vector.broadcast %cst_119 : f32 to vector<16x128xf32>
    %135 = arith.mulf %134, %133 : vector<16x128xf32>
    %cst_120 = arith.constant 4.471500e-02 : f32
    %136 = vector.broadcast %cst_120 : f32 to vector<16x128xf32>
    %137 = arith.mulf %136, %133 : vector<16x128xf32>
    %138 = arith.mulf %137, %133 : vector<16x128xf32>
    %139 = arith.mulf %138, %133 : vector<16x128xf32>
    %140 = arith.addf %133, %139 : vector<16x128xf32>
    %cst_121 = arith.constant 0.797884583 : f32
    %141 = vector.broadcast %cst_121 : f32 to vector<16x128xf32>
    %142 = arith.mulf %141, %140 : vector<16x128xf32>
    %143 = math.tanh %142 : vector<16x128xf32>
    %cst_122 = arith.constant 1.000000e+00 : f32
    %144 = vector.broadcast %cst_122 : f32 to vector<16x128xf32>
    %145 = arith.addf %144, %143 : vector<16x128xf32>
    %146 = arith.mulf %135, %145 : vector<16x128xf32>
    %cst_123 = arith.constant 0.000000e+00 : f32
    %147 = vector.broadcast %cst_123 : f32 to vector<16x128xf32>
    %c1_124 = arith.constant 1 : index
    %c0_125 = arith.constant 0 : index
    %c0_126 = arith.constant 0 : index
    %148 = vector.load %arg22[%c1_124, %c0_125, %c0_126] : memref<2x18x128xf32, #tpu.memory_space<vmem>>, vector<1x16x128xf32>
    %149 = vector.shape_cast %148 : vector<1x16x128xf32> to vector<16x128xf32>
    %c0_127 = arith.constant 0 : index
    %c0_128 = arith.constant 0 : index
    %c0_129 = arith.constant 0 : index
    %150 = vector.load %arg4[%c0_127, %c0_128, %c0_129] : memref<3x128x128xf32, #tpu.memory_space<vmem>>, vector<1x128x128xf32>
    %151 = vector.shape_cast %150 : vector<1x128x128xf32> to vector<128x128xf32>
    %cst_130 = arith.constant dense<0.000000e+00> : vector<16x128xf32>
    %152 = tpu.matmul %149, %151, %cst_130 {dimension_numbers = #tpu.dot_dimension_numbers<[1], [0], [0], [1], [0, 0, 1, 1], [], []>} : vector<16x128xf32>, vector<128x128xf32>, vector<16x128xf32> -> vector<16x128xf32>
    %153 = arith.addf %147, %152 : vector<16x128xf32>
    %c1_131 = arith.constant 1 : index
    %c1_132 = arith.constant 1 : index
    %c0_133 = arith.constant 0 : index
    %154 = vector.load %arg22[%c1_131, %c1_132, %c0_133] : memref<2x18x128xf32, #tpu.memory_space<vmem>>, vector<1x16x128xf32>
    %155 = vector.shape_cast %154 : vector<1x16x128xf32> to vector<16x128xf32>
    %c1_134 = arith.constant 1 : index
    %c0_135 = arith.constant 0 : index
    %c0_136 = arith.constant 0 : index
    %156 = vector.load %arg4[%c1_134, %c0_135, %c0_136] : memref<3x128x128xf32, #tpu.memory_space<vmem>>, vector<1x128x128xf32>
    %157 = vector.shape_cast %156 : vector<1x128x128xf32> to vector<128x128xf32>
    %cst_137 = arith.constant dense<0.000000e+00> : vector<16x128xf32>
    %158 = tpu.matmul %155, %157, %cst_137 {dimension_numbers = #tpu.dot_dimension_numbers<[1], [0], [0], [1], [0, 0, 1, 1], [], []>} : vector<16x128xf32>, vector<128x128xf32>, vector<16x128xf32> -> vector<16x128xf32>
    %159 = arith.addf %153, %158 : vector<16x128xf32>
    %c1_138 = arith.constant 1 : index
    %c2_139 = arith.constant 2 : index
    %c0_140 = arith.constant 0 : index
    %160 = vector.load %arg22[%c1_138, %c2_139, %c0_140] : memref<2x18x128xf32, #tpu.memory_space<vmem>>, vector<1x16x128xf32>
    %161 = vector.shape_cast %160 : vector<1x16x128xf32> to vector<16x128xf32>
    %c2_141 = arith.constant 2 : index
    %c0_142 = arith.constant 0 : index
    %c0_143 = arith.constant 0 : index
    %162 = vector.load %arg4[%c2_141, %c0_142, %c0_143] : memref<3x128x128xf32, #tpu.memory_space<vmem>>, vector<1x128x128xf32>
    %163 = vector.shape_cast %162 : vector<1x128x128xf32> to vector<128x128xf32>
    %cst_144 = arith.constant dense<0.000000e+00> : vector<16x128xf32>
    %164 = tpu.matmul %161, %163, %cst_144 {dimension_numbers = #tpu.dot_dimension_numbers<[1], [0], [0], [1], [0, 0, 1, 1], [], []>} : vector<16x128xf32>, vector<128x128xf32>, vector<16x128xf32> -> vector<16x128xf32>
    %165 = arith.addf %159, %164 : vector<16x128xf32>
    %c0_145 = arith.constant 0 : index
    %c0_146 = arith.constant 0 : index
    %166 = vector.load %arg5[%c0_145, %c0_146] : memref<1x128xf32, #tpu.memory_space<vmem>>, vector<1x128xf32>
    %167 = vector.broadcast %166 : vector<1x128xf32> to vector<16x128xf32>
    %168 = arith.addf %165, %167 : vector<16x128xf32>
    %cst_147 = arith.constant 5.000000e-01 : f32
    %169 = vector.broadcast %cst_147 : f32 to vector<16x128xf32>
    %170 = arith.mulf %169, %168 : vector<16x128xf32>
    %cst_148 = arith.constant 4.471500e-02 : f32
    %171 = vector.broadcast %cst_148 : f32 to vector<16x128xf32>
    %172 = arith.mulf %171, %168 : vector<16x128xf32>
    %173 = arith.mulf %172, %168 : vector<16x128xf32>
    %174 = arith.mulf %173, %168 : vector<16x128xf32>
    %175 = arith.addf %168, %174 : vector<16x128xf32>
    %cst_149 = arith.constant 0.797884583 : f32
    %176 = vector.broadcast %cst_149 : f32 to vector<16x128xf32>
    %177 = arith.mulf %176, %175 : vector<16x128xf32>
    %178 = math.tanh %177 : vector<16x128xf32>
    %cst_150 = arith.constant 1.000000e+00 : f32
    %179 = vector.broadcast %cst_150 : f32 to vector<16x128xf32>
    %180 = arith.addf %179, %178 : vector<16x128xf32>
    %181 = arith.mulf %170, %180 : vector<16x128xf32>
    %cst_151 = arith.constant 0.000000e+00 : f32
    %182 = vector.broadcast %cst_151 : f32 to vector<1x128xf32>
    %c0_152 = arith.constant 0 : index
    %c0_153 = arith.constant 0 : index
    %c0_154 = arith.constant 0 : index
    %183 = vector.load %arg23[%c0_152, %c0_153, %c0_154] : memref<2x18x128xf32, #tpu.memory_space<vmem>>, vector<1x1x128xf32>
    %184 = vector.shape_cast %183 : vector<1x1x128xf32> to vector<1x128xf32>
    %185 = vector.shape_cast %182 : vector<1x128xf32> to vector<1x1x128xf32>
    tpu.vector_store %arg23[%c0_152, %c0_153, %c0_154], %185 {strides = array<i32>} : memref<2x18x128xf32, #tpu.memory_space<vmem>>, vector<1x1x128xf32>,
    %c0_155 = arith.constant 0 : index
    %c1_156 = arith.constant 1 : index
    %c0_157 = arith.constant 0 : index
    %186 = vector.load %arg23[%c0_155, %c1_156, %c0_157] : memref<2x18x128xf32, #tpu.memory_space<vmem>>, vector<1x16x128xf32>
    %187 = vector.shape_cast %186 : vector<1x16x128xf32> to vector<16x128xf32>
    %188 = vector.shape_cast %146 : vector<16x128xf32> to vector<1x16x128xf32>
    tpu.vector_store %arg23[%c0_155, %c1_156, %c0_157], %188 {strides = array<i32>} : memref<2x18x128xf32, #tpu.memory_space<vmem>>, vector<1x16x128xf32>,
    %c0_158 = arith.constant 0 : index
    %c17_159 = arith.constant 17 : index
    %c0_160 = arith.constant 0 : index
    %189 = vector.load %arg23[%c0_158, %c17_159, %c0_160] : memref<2x18x128xf32, #tpu.memory_space<vmem>>, vector<1x1x128xf32>
    %190 = vector.shape_cast %189 : vector<1x1x128xf32> to vector<1x128xf32>
    %191 = vector.shape_cast %182 : vector<1x128xf32> to vector<1x1x128xf32>
    tpu.vector_store %arg23[%c0_158, %c17_159, %c0_160], %191 {strides = array<i32>} : memref<2x18x128xf32, #tpu.memory_space<vmem>>, vector<1x1x128xf32>,
    %c1_161 = arith.constant 1 : index
    %c0_162 = arith.constant 0 : index
    %c0_163 = arith.constant 0 : index
    %192 = vector.load %arg23[%c1_161, %c0_162, %c0_163] : memref<2x18x128xf32, #tpu.memory_space<vmem>>, vector<1x1x128xf32>
    %193 = vector.shape_cast %192 : vector<1x1x128xf32> to vector<1x128xf32>
    %194 = vector.shape_cast %182 : vector<1x128xf32> to vector<1x1x128xf32>
    tpu.vector_store %arg23[%c1_161, %c0_162, %c0_163], %194 {strides = array<i32>} : memref<2x18x128xf32, #tpu.memory_space<vmem>>, vector<1x1x128xf32>,
    %c1_164 = arith.constant 1 : index
    %c1_165 = arith.constant 1 : index
    %c0_166 = arith.constant 0 : index
    %195 = vector.load %arg23[%c1_164, %c1_165, %c0_166] : memref<2x18x128xf32, #tpu.memory_space<vmem>>, vector<1x16x128xf32>
    %196 = vector.shape_cast %195 : vector<1x16x128xf32> to vector<16x128xf32>
    %197 = vector.shape_cast %181 : vector<16x128xf32> to vector<1x16x128xf32>
    tpu.vector_store %arg23[%c1_164, %c1_165, %c0_166], %197 {strides = array<i32>} : memref<2x18x128xf32, #tpu.memory_space<vmem>>, vector<1x16x128xf32>,
    %c1_167 = arith.constant 1 : index
    %c17_168 = arith.constant 17 : index
    %c0_169 = arith.constant 0 : index
    %198 = vector.load %arg23[%c1_167, %c17_168, %c0_169] : memref<2x18x128xf32, #tpu.memory_space<vmem>>, vector<1x1x128xf32>
    %199 = vector.shape_cast %198 : vector<1x1x128xf32> to vector<1x128xf32>
    %200 = vector.shape_cast %182 : vector<1x128xf32> to vector<1x1x128xf32>
    tpu.vector_store %arg23[%c1_167, %c17_168, %c0_169], %200 {strides = array<i32>} : memref<2x18x128xf32, #tpu.memory_space<vmem>>, vector<1x1x128xf32>,
    %cst_170 = arith.constant 0.000000e+00 : f32
    %201 = vector.broadcast %cst_170 : f32 to vector<16x128xf32>
    %c0_171 = arith.constant 0 : index
    %c0_172 = arith.constant 0 : index
    %c0_173 = arith.constant 0 : index
    %202 = vector.load %arg23[%c0_171, %c0_172, %c0_173] : memref<2x18x128xf32, #tpu.memory_space<vmem>>, vector<1x16x128xf32>
    %203 = vector.shape_cast %202 : vector<1x16x128xf32> to vector<16x128xf32>
    %c0_174 = arith.constant 0 : index
    %c0_175 = arith.constant 0 : index
    %c0_176 = arith.constant 0 : index
    %204 = vector.load %arg6[%c0_174, %c0_175, %c0_176] : memref<3x128x128xf32, #tpu.memory_space<vmem>>, vector<1x128x128xf32>
    %205 = vector.shape_cast %204 : vector<1x128x128xf32> to vector<128x128xf32>
    %cst_177 = arith.constant dense<0.000000e+00> : vector<16x128xf32>
    %206 = tpu.matmul %203, %205, %cst_177 {dimension_numbers = #tpu.dot_dimension_numbers<[1], [0], [0], [1], [0, 0, 1, 1], [], []>} : vector<16x128xf32>, vector<128x128xf32>, vector<16x128xf32> -> vector<16x128xf32>
    %207 = arith.addf %201, %206 : vector<16x128xf32>
    %c0_178 = arith.constant 0 : index
    %c1_179 = arith.constant 1 : index
    %c0_180 = arith.constant 0 : index
    %208 = vector.load %arg23[%c0_178, %c1_179, %c0_180] : memref<2x18x128xf32, #tpu.memory_space<vmem>>, vector<1x16x128xf32>
    %209 = vector.shape_cast %208 : vector<1x16x128xf32> to vector<16x128xf32>
    %c1_181 = arith.constant 1 : index
    %c0_182 = arith.constant 0 : index
    %c0_183 = arith.constant 0 : index
    %210 = vector.load %arg6[%c1_181, %c0_182, %c0_183] : memref<3x128x128xf32, #tpu.memory_space<vmem>>, vector<1x128x128xf32>
    %211 = vector.shape_cast %210 : vector<1x128x128xf32> to vector<128x128xf32>
    %cst_184 = arith.constant dense<0.000000e+00> : vector<16x128xf32>
    %212 = tpu.matmul %209, %211, %cst_184 {dimension_numbers = #tpu.dot_dimension_numbers<[1], [0], [0], [1], [0, 0, 1, 1], [], []>} : vector<16x128xf32>, vector<128x128xf32>, vector<16x128xf32> -> vector<16x128xf32>
    %213 = arith.addf %207, %212 : vector<16x128xf32>
    %c0_185 = arith.constant 0 : index
    %c2_186 = arith.constant 2 : index
    %c0_187 = arith.constant 0 : index
    %214 = vector.load %arg23[%c0_185, %c2_186, %c0_187] : memref<2x18x128xf32, #tpu.memory_space<vmem>>, vector<1x16x128xf32>
    %215 = vector.shape_cast %214 : vector<1x16x128xf32> to vector<16x128xf32>
    %c2_188 = arith.constant 2 : index
    %c0_189 = arith.constant 0 : index
    %c0_190 = arith.constant 0 : index
    %216 = vector.load %arg6[%c2_188, %c0_189, %c0_190] : memref<3x128x128xf32, #tpu.memory_space<vmem>>, vector<1x128x128xf32>
    %217 = vector.shape_cast %216 : vector<1x128x128xf32> to vector<128x128xf32>
    %cst_191 = arith.constant dense<0.000000e+00> : vector<16x128xf32>
    %218 = tpu.matmul %215, %217, %cst_191 {dimension_numbers = #tpu.dot_dimension_numbers<[1], [0], [0], [1], [0, 0, 1, 1], [], []>} : vector<16x128xf32>, vector<128x128xf32>, vector<16x128xf32> -> vector<16x128xf32>
    %219 = arith.addf %213, %218 : vector<16x128xf32>
    %c0_192 = arith.constant 0 : index
    %c0_193 = arith.constant 0 : index
    %220 = vector.load %arg7[%c0_192, %c0_193] : memref<1x128xf32, #tpu.memory_space<vmem>>, vector<1x128xf32>
    %221 = vector.broadcast %220 : vector<1x128xf32> to vector<16x128xf32>
    %222 = arith.addf %219, %221 : vector<16x128xf32>
    %cst_194 = arith.constant 5.000000e-01 : f32
    %223 = vector.broadcast %cst_194 : f32 to vector<16x128xf32>
    %224 = arith.mulf %223, %222 : vector<16x128xf32>
    %cst_195 = arith.constant 4.471500e-02 : f32
    %225 = vector.broadcast %cst_195 : f32 to vector<16x128xf32>
    %226 = arith.mulf %225, %222 : vector<16x128xf32>
    %227 = arith.mulf %226, %222 : vector<16x128xf32>
    %228 = arith.mulf %227, %222 : vector<16x128xf32>
    %229 = arith.addf %222, %228 : vector<16x128xf32>
    %cst_196 = arith.constant 0.797884583 : f32
    %230 = vector.broadcast %cst_196 : f32 to vector<16x128xf32>
    %231 = arith.mulf %230, %229 : vector<16x128xf32>
    %232 = math.tanh %231 : vector<16x128xf32>
    %cst_197 = arith.constant 1.000000e+00 : f32
    %233 = vector.broadcast %cst_197 : f32 to vector<16x128xf32>
    %234 = arith.addf %233, %232 : vector<16x128xf32>
    %235 = arith.mulf %224, %234 : vector<16x128xf32>
    %236 = vector.extract_strided_slice %235 {offsets = [0, 0], sizes = [16, 64], strides = [1, 1]} : vector<16x128xf32> to vector<16x64xf32>
    %237 = vector.extract_strided_slice %235 {offsets = [0, 64], sizes = [16, 64], strides = [1, 1]} : vector<16x128xf32> to vector<16x64xf32>
    %238 = arith.maximumf %236, %237 : vector<16x64xf32>
    %239 = vector.shape_cast %238 : vector<16x64xf32> to vector<8x2x64xf32>
    %240 = vector.extract_strided_slice %239 {offsets = [0, 0, 0], sizes = [8, 1, 64], strides = [1, 1, 1]} : vector<8x2x64xf32> to vector<8x1x64xf32>
    %241 = vector.shape_cast %240 : vector<8x1x64xf32> to vector<8x64xf32>
    %242 = vector.extract_strided_slice %239 {offsets = [0, 1, 0], sizes = [8, 1, 64], strides = [1, 1, 1]} : vector<8x2x64xf32> to vector<8x1x64xf32>
    %243 = vector.shape_cast %242 : vector<8x1x64xf32> to vector<8x64xf32>
    %244 = arith.maximumf %241, %243 : vector<8x64xf32>
    %cst_198 = arith.constant 0.000000e+00 : f32
    %245 = vector.broadcast %cst_198 : f32 to vector<16x128xf32>
    %c1_199 = arith.constant 1 : index
    %c0_200 = arith.constant 0 : index
    %c0_201 = arith.constant 0 : index
    %246 = vector.load %arg23[%c1_199, %c0_200, %c0_201] : memref<2x18x128xf32, #tpu.memory_space<vmem>>, vector<1x16x128xf32>
    %247 = vector.shape_cast %246 : vector<1x16x128xf32> to vector<16x128xf32>
    %c0_202 = arith.constant 0 : index
    %c0_203 = arith.constant 0 : index
    %c0_204 = arith.constant 0 : index
    %248 = vector.load %arg6[%c0_202, %c0_203, %c0_204] : memref<3x128x128xf32, #tpu.memory_space<vmem>>, vector<1x128x128xf32>
    %249 = vector.shape_cast %248 : vector<1x128x128xf32> to vector<128x128xf32>
    %cst_205 = arith.constant dense<0.000000e+00> : vector<16x128xf32>
    %250 = tpu.matmul %247, %249, %cst_205 {dimension_numbers = #tpu.dot_dimension_numbers<[1], [0], [0], [1], [0, 0, 1, 1], [], []>} : vector<16x128xf32>, vector<128x128xf32>, vector<16x128xf32> -> vector<16x128xf32>
    %251 = arith.addf %245, %250 : vector<16x128xf32>
    %c1_206 = arith.constant 1 : index
    %c1_207 = arith.constant 1 : index
    %c0_208 = arith.constant 0 : index
    %252 = vector.load %arg23[%c1_206, %c1_207, %c0_208] : memref<2x18x128xf32, #tpu.memory_space<vmem>>, vector<1x16x128xf32>
    %253 = vector.shape_cast %252 : vector<1x16x128xf32> to vector<16x128xf32>
    %c1_209 = arith.constant 1 : index
    %c0_210 = arith.constant 0 : index
    %c0_211 = arith.constant 0 : index
    %254 = vector.load %arg6[%c1_209, %c0_210, %c0_211] : memref<3x128x128xf32, #tpu.memory_space<vmem>>, vector<1x128x128xf32>
    %255 = vector.shape_cast %254 : vector<1x128x128xf32> to vector<128x128xf32>
    %cst_212 = arith.constant dense<0.000000e+00> : vector<16x128xf32>
    %256 = tpu.matmul %253, %255, %cst_212 {dimension_numbers = #tpu.dot_dimension_numbers<[1], [0], [0], [1], [0, 0, 1, 1], [], []>} : vector<16x128xf32>, vector<128x128xf32>, vector<16x128xf32> -> vector<16x128xf32>
    %257 = arith.addf %251, %256 : vector<16x128xf32>
    %c1_213 = arith.constant 1 : index
    %c2_214 = arith.constant 2 : index
    %c0_215 = arith.constant 0 : index
    %258 = vector.load %arg23[%c1_213, %c2_214, %c0_215] : memref<2x18x128xf32, #tpu.memory_space<vmem>>, vector<1x16x128xf32>
    %259 = vector.shape_cast %258 : vector<1x16x128xf32> to vector<16x128xf32>
    %c2_216 = arith.constant 2 : index
    %c0_217 = arith.constant 0 : index
    %c0_218 = arith.constant 0 : index
    %260 = vector.load %arg6[%c2_216, %c0_217, %c0_218] : memref<3x128x128xf32, #tpu.memory_space<vmem>>, vector<1x128x128xf32>
    %261 = vector.shape_cast %260 : vector<1x128x128xf32> to vector<128x128xf32>
    %cst_219 = arith.constant dense<0.000000e+00> : vector<16x128xf32>
    %262 = tpu.matmul %259, %261, %cst_219 {dimension_numbers = #tpu.dot_dimension_numbers<[1], [0], [0], [1], [0, 0, 1, 1], [], []>} : vector<16x128xf32>, vector<128x128xf32>, vector<16x128xf32> -> vector<16x128xf32>
    %263 = arith.addf %257, %262 : vector<16x128xf32>
    %c0_220 = arith.constant 0 : index
    %c0_221 = arith.constant 0 : index
    %264 = vector.load %arg7[%c0_220, %c0_221] : memref<1x128xf32, #tpu.memory_space<vmem>>, vector<1x128xf32>
    %265 = vector.broadcast %264 : vector<1x128xf32> to vector<16x128xf32>
    %266 = arith.addf %263, %265 : vector<16x128xf32>
    %cst_222 = arith.constant 5.000000e-01 : f32
    %267 = vector.broadcast %cst_222 : f32 to vector<16x128xf32>
    %268 = arith.mulf %267, %266 : vector<16x128xf32>
    %cst_223 = arith.constant 4.471500e-02 : f32
    %269 = vector.broadcast %cst_223 : f32 to vector<16x128xf32>
    %270 = arith.mulf %269, %266 : vector<16x128xf32>
    %271 = arith.mulf %270, %266 : vector<16x128xf32>
    %272 = arith.mulf %271, %266 : vector<16x128xf32>
    %273 = arith.addf %266, %272 : vector<16x128xf32>
    %cst_224 = arith.constant 0.797884583 : f32
    %274 = vector.broadcast %cst_224 : f32 to vector<16x128xf32>
    %275 = arith.mulf %274, %273 : vector<16x128xf32>
    %276 = math.tanh %275 : vector<16x128xf32>
    %cst_225 = arith.constant 1.000000e+00 : f32
    %277 = vector.broadcast %cst_225 : f32 to vector<16x128xf32>
    %278 = arith.addf %277, %276 : vector<16x128xf32>
    %279 = arith.mulf %268, %278 : vector<16x128xf32>
    %280 = vector.extract_strided_slice %279 {offsets = [0, 0], sizes = [16, 64], strides = [1, 1]} : vector<16x128xf32> to vector<16x64xf32>
    %281 = vector.extract_strided_slice %279 {offsets = [0, 64], sizes = [16, 64], strides = [1, 1]} : vector<16x128xf32> to vector<16x64xf32>
    %282 = arith.maximumf %280, %281 : vector<16x64xf32>
    %283 = vector.shape_cast %282 : vector<16x64xf32> to vector<8x2x64xf32>
    %284 = vector.extract_strided_slice %283 {offsets = [0, 0, 0], sizes = [8, 1, 64], strides = [1, 1, 1]} : vector<8x2x64xf32> to vector<8x1x64xf32>
    %285 = vector.shape_cast %284 : vector<8x1x64xf32> to vector<8x64xf32>
    %286 = vector.extract_strided_slice %283 {offsets = [0, 1, 0], sizes = [8, 1, 64], strides = [1, 1, 1]} : vector<8x2x64xf32> to vector<8x1x64xf32>
    %287 = vector.shape_cast %286 : vector<8x1x64xf32> to vector<8x64xf32>
    %288 = arith.maximumf %285, %287 : vector<8x64xf32>
    %cst_226 = arith.constant 0.000000e+00 : f32
    %289 = vector.broadcast %cst_226 : f32 to vector<1x64xf32>
    %c0_227 = arith.constant 0 : index
    %c0_228 = arith.constant 0 : index
    %c0_229 = arith.constant 0 : index
    %290 = vector.load %arg24[%c0_227, %c0_228, %c0_229] : memref<2x10x64xf32, #tpu.memory_space<vmem>>, vector<1x1x64xf32>
    %291 = vector.shape_cast %290 : vector<1x1x64xf32> to vector<1x64xf32>
    %292 = vector.shape_cast %289 : vector<1x64xf32> to vector<1x1x64xf32>
    tpu.vector_store %arg24[%c0_227, %c0_228, %c0_229], %292 {strides = array<i32>} : memref<2x10x64xf32, #tpu.memory_space<vmem>>, vector<1x1x64xf32>,
    %c0_230 = arith.constant 0 : index
    %c1_231 = arith.constant 1 : index
    %c0_232 = arith.constant 0 : index
    %293 = vector.load %arg24[%c0_230, %c1_231, %c0_232] : memref<2x10x64xf32, #tpu.memory_space<vmem>>, vector<1x8x64xf32>
    %294 = vector.shape_cast %293 : vector<1x8x64xf32> to vector<8x64xf32>
    %295 = vector.shape_cast %244 : vector<8x64xf32> to vector<1x8x64xf32>
    tpu.vector_store %arg24[%c0_230, %c1_231, %c0_232], %295 {strides = array<i32>} : memref<2x10x64xf32, #tpu.memory_space<vmem>>, vector<1x8x64xf32>,
    %c0_233 = arith.constant 0 : index
    %c9 = arith.constant 9 : index
    %c0_234 = arith.constant 0 : index
    %296 = vector.load %arg24[%c0_233, %c9, %c0_234] : memref<2x10x64xf32, #tpu.memory_space<vmem>>, vector<1x1x64xf32>
    %297 = vector.shape_cast %296 : vector<1x1x64xf32> to vector<1x64xf32>
    %298 = vector.shape_cast %289 : vector<1x64xf32> to vector<1x1x64xf32>
    tpu.vector_store %arg24[%c0_233, %c9, %c0_234], %298 {strides = array<i32>} : memref<2x10x64xf32, #tpu.memory_space<vmem>>, vector<1x1x64xf32>,
    %c1_235 = arith.constant 1 : index
    %c0_236 = arith.constant 0 : index
    %c0_237 = arith.constant 0 : index
    %299 = vector.load %arg24[%c1_235, %c0_236, %c0_237] : memref<2x10x64xf32, #tpu.memory_space<vmem>>, vector<1x1x64xf32>
    %300 = vector.shape_cast %299 : vector<1x1x64xf32> to vector<1x64xf32>
    %301 = vector.shape_cast %289 : vector<1x64xf32> to vector<1x1x64xf32>
    tpu.vector_store %arg24[%c1_235, %c0_236, %c0_237], %301 {strides = array<i32>} : memref<2x10x64xf32, #tpu.memory_space<vmem>>, vector<1x1x64xf32>,
    %c1_238 = arith.constant 1 : index
    %c1_239 = arith.constant 1 : index
    %c0_240 = arith.constant 0 : index
    %302 = vector.load %arg24[%c1_238, %c1_239, %c0_240] : memref<2x10x64xf32, #tpu.memory_space<vmem>>, vector<1x8x64xf32>
    %303 = vector.shape_cast %302 : vector<1x8x64xf32> to vector<8x64xf32>
    %304 = vector.shape_cast %288 : vector<8x64xf32> to vector<1x8x64xf32>
    tpu.vector_store %arg24[%c1_238, %c1_239, %c0_240], %304 {strides = array<i32>} : memref<2x10x64xf32, #tpu.memory_space<vmem>>, vector<1x8x64xf32>,
    %c1_241 = arith.constant 1 : index
    %c9_242 = arith.constant 9 : index
    %c0_243 = arith.constant 0 : index
    %305 = vector.load %arg24[%c1_241, %c9_242, %c0_243] : memref<2x10x64xf32, #tpu.memory_space<vmem>>, vector<1x1x64xf32>
    %306 = vector.shape_cast %305 : vector<1x1x64xf32> to vector<1x64xf32>
    %307 = vector.shape_cast %289 : vector<1x64xf32> to vector<1x1x64xf32>
    tpu.vector_store %arg24[%c1_241, %c9_242, %c0_243], %307 {strides = array<i32>} : memref<2x10x64xf32, #tpu.memory_space<vmem>>, vector<1x1x64xf32>,
    %cst_244 = arith.constant 0.000000e+00 : f32
    %308 = vector.broadcast %cst_244 : f32 to vector<8x128xf32>
    %c0_245 = arith.constant 0 : index
    %c0_246 = arith.constant 0 : index
    %c0_247 = arith.constant 0 : index
    %309 = vector.load %arg24[%c0_245, %c0_246, %c0_247] : memref<2x10x64xf32, #tpu.memory_space<vmem>>, vector<1x8x64xf32>
    %310 = vector.shape_cast %309 : vector<1x8x64xf32> to vector<8x64xf32>
    %c0_248 = arith.constant 0 : index
    %c0_249 = arith.constant 0 : index
    %c0_250 = arith.constant 0 : index
    %311 = vector.load %arg8[%c0_248, %c0_249, %c0_250] : memref<3x64x128xf32, #tpu.memory_space<vmem>>, vector<1x64x128xf32>
    %312 = vector.shape_cast %311 : vector<1x64x128xf32> to vector<64x128xf32>
    %cst_251 = arith.constant dense<0.000000e+00> : vector<8x128xf32>
    %313 = tpu.matmul %310, %312, %cst_251 {dimension_numbers = #tpu.dot_dimension_numbers<[1], [0], [0], [1], [0, 0, 1, 1], [], []>} : vector<8x64xf32>, vector<64x128xf32>, vector<8x128xf32> -> vector<8x128xf32>
    %314 = arith.addf %308, %313 : vector<8x128xf32>
    %c0_252 = arith.constant 0 : index
    %c1_253 = arith.constant 1 : index
    %c0_254 = arith.constant 0 : index
    %315 = vector.load %arg24[%c0_252, %c1_253, %c0_254] : memref<2x10x64xf32, #tpu.memory_space<vmem>>, vector<1x8x64xf32>
    %316 = vector.shape_cast %315 : vector<1x8x64xf32> to vector<8x64xf32>
    %c1_255 = arith.constant 1 : index
    %c0_256 = arith.constant 0 : index
    %c0_257 = arith.constant 0 : index
    %317 = vector.load %arg8[%c1_255, %c0_256, %c0_257] : memref<3x64x128xf32, #tpu.memory_space<vmem>>, vector<1x64x128xf32>
    %318 = vector.shape_cast %317 : vector<1x64x128xf32> to vector<64x128xf32>
    %cst_258 = arith.constant dense<0.000000e+00> : vector<8x128xf32>
    %319 = tpu.matmul %316, %318, %cst_258 {dimension_numbers = #tpu.dot_dimension_numbers<[1], [0], [0], [1], [0, 0, 1, 1], [], []>} : vector<8x64xf32>, vector<64x128xf32>, vector<8x128xf32> -> vector<8x128xf32>
    %320 = arith.addf %314, %319 : vector<8x128xf32>
    %c0_259 = arith.constant 0 : index
    %c2_260 = arith.constant 2 : index
    %c0_261 = arith.constant 0 : index
    %321 = vector.load %arg24[%c0_259, %c2_260, %c0_261] : memref<2x10x64xf32, #tpu.memory_space<vmem>>, vector<1x8x64xf32>
    %322 = vector.shape_cast %321 : vector<1x8x64xf32> to vector<8x64xf32>
    %c2_262 = arith.constant 2 : index
    %c0_263 = arith.constant 0 : index
    %c0_264 = arith.constant 0 : index
    %323 = vector.load %arg8[%c2_262, %c0_263, %c0_264] : memref<3x64x128xf32, #tpu.memory_space<vmem>>, vector<1x64x128xf32>
    %324 = vector.shape_cast %323 : vector<1x64x128xf32> to vector<64x128xf32>
    %cst_265 = arith.constant dense<0.000000e+00> : vector<8x128xf32>
    %325 = tpu.matmul %322, %324, %cst_265 {dimension_numbers = #tpu.dot_dimension_numbers<[1], [0], [0], [1], [0, 0, 1, 1], [], []>} : vector<8x64xf32>, vector<64x128xf32>, vector<8x128xf32> -> vector<8x128xf32>
    %326 = arith.addf %320, %325 : vector<8x128xf32>
    %c0_266 = arith.constant 0 : index
    %c0_267 = arith.constant 0 : index
    %327 = vector.load %arg9[%c0_266, %c0_267] : memref<1x128xf32, #tpu.memory_space<vmem>>, vector<1x128xf32>
    %328 = vector.broadcast %327 : vector<1x128xf32> to vector<8x128xf32>
    %329 = arith.addf %326, %328 : vector<8x128xf32>
    %cst_268 = arith.constant 5.000000e-01 : f32
    %330 = vector.broadcast %cst_268 : f32 to vector<8x128xf32>
    %331 = arith.mulf %330, %329 : vector<8x128xf32>
    %cst_269 = arith.constant 4.471500e-02 : f32
    %332 = vector.broadcast %cst_269 : f32 to vector<8x128xf32>
    %333 = arith.mulf %332, %329 : vector<8x128xf32>
    %334 = arith.mulf %333, %329 : vector<8x128xf32>
    %335 = arith.mulf %334, %329 : vector<8x128xf32>
    %336 = arith.addf %329, %335 : vector<8x128xf32>
    %cst_270 = arith.constant 0.797884583 : f32
    %337 = vector.broadcast %cst_270 : f32 to vector<8x128xf32>
    %338 = arith.mulf %337, %336 : vector<8x128xf32>
    %339 = math.tanh %338 : vector<8x128xf32>
    %cst_271 = arith.constant 1.000000e+00 : f32
    %340 = vector.broadcast %cst_271 : f32 to vector<8x128xf32>
    %341 = arith.addf %340, %339 : vector<8x128xf32>
    %342 = arith.mulf %331, %341 : vector<8x128xf32>
    %cst_272 = arith.constant 0.000000e+00 : f32
    %343 = vector.broadcast %cst_272 : f32 to vector<8x128xf32>
    %c1_273 = arith.constant 1 : index
    %c0_274 = arith.constant 0 : index
    %c0_275 = arith.constant 0 : index
    %344 = vector.load %arg24[%c1_273, %c0_274, %c0_275] : memref<2x10x64xf32, #tpu.memory_space<vmem>>, vector<1x8x64xf32>
    %345 = vector.shape_cast %344 : vector<1x8x64xf32> to vector<8x64xf32>
    %c0_276 = arith.constant 0 : index
    %c0_277 = arith.constant 0 : index
    %c0_278 = arith.constant 0 : index
    %346 = vector.load %arg8[%c0_276, %c0_277, %c0_278] : memref<3x64x128xf32, #tpu.memory_space<vmem>>, vector<1x64x128xf32>
    %347 = vector.shape_cast %346 : vector<1x64x128xf32> to vector<64x128xf32>
    %cst_279 = arith.constant dense<0.000000e+00> : vector<8x128xf32>
    %348 = tpu.matmul %345, %347, %cst_279 {dimension_numbers = #tpu.dot_dimension_numbers<[1], [0], [0], [1], [0, 0, 1, 1], [], []>} : vector<8x64xf32>, vector<64x128xf32>, vector<8x128xf32> -> vector<8x128xf32>
    %349 = arith.addf %343, %348 : vector<8x128xf32>
    %c1_280 = arith.constant 1 : index
    %c1_281 = arith.constant 1 : index
    %c0_282 = arith.constant 0 : index
    %350 = vector.load %arg24[%c1_280, %c1_281, %c0_282] : memref<2x10x64xf32, #tpu.memory_space<vmem>>, vector<1x8x64xf32>
    %351 = vector.shape_cast %350 : vector<1x8x64xf32> to vector<8x64xf32>
    %c1_283 = arith.constant 1 : index
    %c0_284 = arith.constant 0 : index
    %c0_285 = arith.constant 0 : index
    %352 = vector.load %arg8[%c1_283, %c0_284, %c0_285] : memref<3x64x128xf32, #tpu.memory_space<vmem>>, vector<1x64x128xf32>
    %353 = vector.shape_cast %352 : vector<1x64x128xf32> to vector<64x128xf32>
    %cst_286 = arith.constant dense<0.000000e+00> : vector<8x128xf32>
    %354 = tpu.matmul %351, %353, %cst_286 {dimension_numbers = #tpu.dot_dimension_numbers<[1], [0], [0], [1], [0, 0, 1, 1], [], []>} : vector<8x64xf32>, vector<64x128xf32>, vector<8x128xf32> -> vector<8x128xf32>
    %355 = arith.addf %349, %354 : vector<8x128xf32>
    %c1_287 = arith.constant 1 : index
    %c2_288 = arith.constant 2 : index
    %c0_289 = arith.constant 0 : index
    %356 = vector.load %arg24[%c1_287, %c2_288, %c0_289] : memref<2x10x64xf32, #tpu.memory_space<vmem>>, vector<1x8x64xf32>
    %357 = vector.shape_cast %356 : vector<1x8x64xf32> to vector<8x64xf32>
    %c2_290 = arith.constant 2 : index
    %c0_291 = arith.constant 0 : index
    %c0_292 = arith.constant 0 : index
    %358 = vector.load %arg8[%c2_290, %c0_291, %c0_292] : memref<3x64x128xf32, #tpu.memory_space<vmem>>, vector<1x64x128xf32>
    %359 = vector.shape_cast %358 : vector<1x64x128xf32> to vector<64x128xf32>
    %cst_293 = arith.constant dense<0.000000e+00> : vector<8x128xf32>
    %360 = tpu.matmul %357, %359, %cst_293 {dimension_numbers = #tpu.dot_dimension_numbers<[1], [0], [0], [1], [0, 0, 1, 1], [], []>} : vector<8x64xf32>, vector<64x128xf32>, vector<8x128xf32> -> vector<8x128xf32>
    %361 = arith.addf %355, %360 : vector<8x128xf32>
    %c0_294 = arith.constant 0 : index
    %c0_295 = arith.constant 0 : index
    %362 = vector.load %arg9[%c0_294, %c0_295] : memref<1x128xf32, #tpu.memory_space<vmem>>, vector<1x128xf32>
    %363 = vector.broadcast %362 : vector<1x128xf32> to vector<8x128xf32>
    %364 = arith.addf %361, %363 : vector<8x128xf32>
    %cst_296 = arith.constant 5.000000e-01 : f32
    %365 = vector.broadcast %cst_296 : f32 to vector<8x128xf32>
    %366 = arith.mulf %365, %364 : vector<8x128xf32>
    %cst_297 = arith.constant 4.471500e-02 : f32
    %367 = vector.broadcast %cst_297 : f32 to vector<8x128xf32>
    %368 = arith.mulf %367, %364 : vector<8x128xf32>
    %369 = arith.mulf %368, %364 : vector<8x128xf32>
    %370 = arith.mulf %369, %364 : vector<8x128xf32>
    %371 = arith.addf %364, %370 : vector<8x128xf32>
    %cst_298 = arith.constant 0.797884583 : f32
    %372 = vector.broadcast %cst_298 : f32 to vector<8x128xf32>
    %373 = arith.mulf %372, %371 : vector<8x128xf32>
    %374 = math.tanh %373 : vector<8x128xf32>
    %cst_299 = arith.constant 1.000000e+00 : f32
    %375 = vector.broadcast %cst_299 : f32 to vector<8x128xf32>
    %376 = arith.addf %375, %374 : vector<8x128xf32>
    %377 = arith.mulf %366, %376 : vector<8x128xf32>
    %cst_300 = arith.constant 0.000000e+00 : f32
    %378 = vector.broadcast %cst_300 : f32 to vector<1x128xf32>
    %c0_301 = arith.constant 0 : index
    %c0_302 = arith.constant 0 : index
    %c0_303 = arith.constant 0 : index
    %379 = vector.load %arg25[%c0_301, %c0_302, %c0_303] : memref<2x10x128xf32, #tpu.memory_space<vmem>>, vector<1x1x128xf32>
    %380 = vector.shape_cast %379 : vector<1x1x128xf32> to vector<1x128xf32>
    %381 = vector.shape_cast %378 : vector<1x128xf32> to vector<1x1x128xf32>
    tpu.vector_store %arg25[%c0_301, %c0_302, %c0_303], %381 {strides = array<i32>} : memref<2x10x128xf32, #tpu.memory_space<vmem>>, vector<1x1x128xf32>,
    %c0_304 = arith.constant 0 : index
    %c1_305 = arith.constant 1 : index
    %c0_306 = arith.constant 0 : index
    %382 = vector.load %arg25[%c0_304, %c1_305, %c0_306] : memref<2x10x128xf32, #tpu.memory_space<vmem>>, vector<1x8x128xf32>
    %383 = vector.shape_cast %382 : vector<1x8x128xf32> to vector<8x128xf32>
    %384 = vector.shape_cast %342 : vector<8x128xf32> to vector<1x8x128xf32>
    tpu.vector_store %arg25[%c0_304, %c1_305, %c0_306], %384 {strides = array<i32>} : memref<2x10x128xf32, #tpu.memory_space<vmem>>, vector<1x8x128xf32>,
    %c0_307 = arith.constant 0 : index
    %c9_308 = arith.constant 9 : index
    %c0_309 = arith.constant 0 : index
    %385 = vector.load %arg25[%c0_307, %c9_308, %c0_309] : memref<2x10x128xf32, #tpu.memory_space<vmem>>, vector<1x1x128xf32>
    %386 = vector.shape_cast %385 : vector<1x1x128xf32> to vector<1x128xf32>
    %387 = vector.shape_cast %378 : vector<1x128xf32> to vector<1x1x128xf32>
    tpu.vector_store %arg25[%c0_307, %c9_308, %c0_309], %387 {strides = array<i32>} : memref<2x10x128xf32, #tpu.memory_space<vmem>>, vector<1x1x128xf32>,
    %c1_310 = arith.constant 1 : index
    %c0_311 = arith.constant 0 : index
    %c0_312 = arith.constant 0 : index
    %388 = vector.load %arg25[%c1_310, %c0_311, %c0_312] : memref<2x10x128xf32, #tpu.memory_space<vmem>>, vector<1x1x128xf32>
    %389 = vector.shape_cast %388 : vector<1x1x128xf32> to vector<1x128xf32>
    %390 = vector.shape_cast %378 : vector<1x128xf32> to vector<1x1x128xf32>
    tpu.vector_store %arg25[%c1_310, %c0_311, %c0_312], %390 {strides = array<i32>} : memref<2x10x128xf32, #tpu.memory_space<vmem>>, vector<1x1x128xf32>,
    %c1_313 = arith.constant 1 : index
    %c1_314 = arith.constant 1 : index
    %c0_315 = arith.constant 0 : index
    %391 = vector.load %arg25[%c1_313, %c1_314, %c0_315] : memref<2x10x128xf32, #tpu.memory_space<vmem>>, vector<1x8x128xf32>
    %392 = vector.shape_cast %391 : vector<1x8x128xf32> to vector<8x128xf32>
    %393 = vector.shape_cast %377 : vector<8x128xf32> to vector<1x8x128xf32>
    tpu.vector_store %arg25[%c1_313, %c1_314, %c0_315], %393 {strides = array<i32>} : memref<2x10x128xf32, #tpu.memory_space<vmem>>, vector<1x8x128xf32>,
    %c1_316 = arith.constant 1 : index
    %c9_317 = arith.constant 9 : index
    %c0_318 = arith.constant 0 : index
    %394 = vector.load %arg25[%c1_316, %c9_317, %c0_318] : memref<2x10x128xf32, #tpu.memory_space<vmem>>, vector<1x1x128xf32>
    %395 = vector.shape_cast %394 : vector<1x1x128xf32> to vector<1x128xf32>
    %396 = vector.shape_cast %378 : vector<1x128xf32> to vector<1x1x128xf32>
    tpu.vector_store %arg25[%c1_316, %c9_317, %c0_318], %396 {strides = array<i32>} : memref<2x10x128xf32, #tpu.memory_space<vmem>>, vector<1x1x128xf32>,
    %cst_319 = arith.constant 0.000000e+00 : f32
    %397 = vector.broadcast %cst_319 : f32 to vector<8x128xf32>
    %c0_320 = arith.constant 0 : index
    %c0_321 = arith.constant 0 : index
    %c0_322 = arith.constant 0 : index
    %398 = vector.load %arg25[%c0_320, %c0_321, %c0_322] : memref<2x10x128xf32, #tpu.memory_space<vmem>>, vector<1x8x128xf32>
    %399 = vector.shape_cast %398 : vector<1x8x128xf32> to vector<8x128xf32>
    %c0_323 = arith.constant 0 : index
    %c0_324 = arith.constant 0 : index
    %c0_325 = arith.constant 0 : index
    %400 = vector.load %arg10[%c0_323, %c0_324, %c0_325] : memref<3x128x128xf32, #tpu.memory_space<vmem>>, vector<1x128x128xf32>
    %401 = vector.shape_cast %400 : vector<1x128x128xf32> to vector<128x128xf32>
    %cst_326 = arith.constant dense<0.000000e+00> : vector<8x128xf32>
    %402 = tpu.matmul %399, %401, %cst_326 {dimension_numbers = #tpu.dot_dimension_numbers<[1], [0], [0], [1], [0, 0, 1, 1], [], []>} : vector<8x128xf32>, vector<128x128xf32>, vector<8x128xf32> -> vector<8x128xf32>
    %403 = arith.addf %397, %402 : vector<8x128xf32>
    %c0_327 = arith.constant 0 : index
    %c1_328 = arith.constant 1 : index
    %c0_329 = arith.constant 0 : index
    %404 = vector.load %arg25[%c0_327, %c1_328, %c0_329] : memref<2x10x128xf32, #tpu.memory_space<vmem>>, vector<1x8x128xf32>
    %405 = vector.shape_cast %404 : vector<1x8x128xf32> to vector<8x128xf32>
    %c1_330 = arith.constant 1 : index
    %c0_331 = arith.constant 0 : index
    %c0_332 = arith.constant 0 : index
    %406 = vector.load %arg10[%c1_330, %c0_331, %c0_332] : memref<3x128x128xf32, #tpu.memory_space<vmem>>, vector<1x128x128xf32>
    %407 = vector.shape_cast %406 : vector<1x128x128xf32> to vector<128x128xf32>
    %cst_333 = arith.constant dense<0.000000e+00> : vector<8x128xf32>
    %408 = tpu.matmul %405, %407, %cst_333 {dimension_numbers = #tpu.dot_dimension_numbers<[1], [0], [0], [1], [0, 0, 1, 1], [], []>} : vector<8x128xf32>, vector<128x128xf32>, vector<8x128xf32> -> vector<8x128xf32>
    %409 = arith.addf %403, %408 : vector<8x128xf32>
    %c0_334 = arith.constant 0 : index
    %c2_335 = arith.constant 2 : index
    %c0_336 = arith.constant 0 : index
    %410 = vector.load %arg25[%c0_334, %c2_335, %c0_336] : memref<2x10x128xf32, #tpu.memory_space<vmem>>, vector<1x8x128xf32>
    %411 = vector.shape_cast %410 : vector<1x8x128xf32> to vector<8x128xf32>
    %c2_337 = arith.constant 2 : index
    %c0_338 = arith.constant 0 : index
    %c0_339 = arith.constant 0 : index
    %412 = vector.load %arg10[%c2_337, %c0_338, %c0_339] : memref<3x128x128xf32, #tpu.memory_space<vmem>>, vector<1x128x128xf32>
    %413 = vector.shape_cast %412 : vector<1x128x128xf32> to vector<128x128xf32>
    %cst_340 = arith.constant dense<0.000000e+00> : vector<8x128xf32>
    %414 = tpu.matmul %411, %413, %cst_340 {dimension_numbers = #tpu.dot_dimension_numbers<[1], [0], [0], [1], [0, 0, 1, 1], [], []>} : vector<8x128xf32>, vector<128x128xf32>, vector<8x128xf32> -> vector<8x128xf32>
    %415 = arith.addf %409, %414 : vector<8x128xf32>
    %c0_341 = arith.constant 0 : index
    %c0_342 = arith.constant 0 : index
    %416 = vector.load %arg11[%c0_341, %c0_342] : memref<1x128xf32, #tpu.memory_space<vmem>>, vector<1x128xf32>
    %417 = vector.broadcast %416 : vector<1x128xf32> to vector<8x128xf32>
    %418 = arith.addf %415, %417 : vector<8x128xf32>
    %cst_343 = arith.constant 5.000000e-01 : f32
    %419 = vector.broadcast %cst_343 : f32 to vector<8x128xf32>
    %420 = arith.mulf %419, %418 : vector<8x128xf32>
    %cst_344 = arith.constant 4.471500e-02 : f32
    %421 = vector.broadcast %cst_344 : f32 to vector<8x128xf32>
    %422 = arith.mulf %421, %418 : vector<8x128xf32>
    %423 = arith.mulf %422, %418 : vector<8x128xf32>
    %424 = arith.mulf %423, %418 : vector<8x128xf32>
    %425 = arith.addf %418, %424 : vector<8x128xf32>
    %cst_345 = arith.constant 0.797884583 : f32
    %426 = vector.broadcast %cst_345 : f32 to vector<8x128xf32>
    %427 = arith.mulf %426, %425 : vector<8x128xf32>
    %428 = math.tanh %427 : vector<8x128xf32>
    %cst_346 = arith.constant 1.000000e+00 : f32
    %429 = vector.broadcast %cst_346 : f32 to vector<8x128xf32>
    %430 = arith.addf %429, %428 : vector<8x128xf32>
    %431 = arith.mulf %420, %430 : vector<8x128xf32>
    %cst_347 = arith.constant 0.000000e+00 : f32
    %432 = vector.broadcast %cst_347 : f32 to vector<8x128xf32>
    %c1_348 = arith.constant 1 : index
    %c0_349 = arith.constant 0 : index
    %c0_350 = arith.constant 0 : index
    %433 = vector.load %arg25[%c1_348, %c0_349, %c0_350] : memref<2x10x128xf32, #tpu.memory_space<vmem>>, vector<1x8x128xf32>
    %434 = vector.shape_cast %433 : vector<1x8x128xf32> to vector<8x128xf32>
    %c0_351 = arith.constant 0 : index
    %c0_352 = arith.constant 0 : index
    %c0_353 = arith.constant 0 : index
    %435 = vector.load %arg10[%c0_351, %c0_352, %c0_353] : memref<3x128x128xf32, #tpu.memory_space<vmem>>, vector<1x128x128xf32>
    %436 = vector.shape_cast %435 : vector<1x128x128xf32> to vector<128x128xf32>
    %cst_354 = arith.constant dense<0.000000e+00> : vector<8x128xf32>
    %437 = tpu.matmul %434, %436, %cst_354 {dimension_numbers = #tpu.dot_dimension_numbers<[1], [0], [0], [1], [0, 0, 1, 1], [], []>} : vector<8x128xf32>, vector<128x128xf32>, vector<8x128xf32> -> vector<8x128xf32>
    %438 = arith.addf %432, %437 : vector<8x128xf32>
    %c1_355 = arith.constant 1 : index
    %c1_356 = arith.constant 1 : index
    %c0_357 = arith.constant 0 : index
    %439 = vector.load %arg25[%c1_355, %c1_356, %c0_357] : memref<2x10x128xf32, #tpu.memory_space<vmem>>, vector<1x8x128xf32>
    %440 = vector.shape_cast %439 : vector<1x8x128xf32> to vector<8x128xf32>
    %c1_358 = arith.constant 1 : index
    %c0_359 = arith.constant 0 : index
    %c0_360 = arith.constant 0 : index
    %441 = vector.load %arg10[%c1_358, %c0_359, %c0_360] : memref<3x128x128xf32, #tpu.memory_space<vmem>>, vector<1x128x128xf32>
    %442 = vector.shape_cast %441 : vector<1x128x128xf32> to vector<128x128xf32>
    %cst_361 = arith.constant dense<0.000000e+00> : vector<8x128xf32>
    %443 = tpu.matmul %440, %442, %cst_361 {dimension_numbers = #tpu.dot_dimension_numbers<[1], [0], [0], [1], [0, 0, 1, 1], [], []>} : vector<8x128xf32>, vector<128x128xf32>, vector<8x128xf32> -> vector<8x128xf32>
    %444 = arith.addf %438, %443 : vector<8x128xf32>
    %c1_362 = arith.constant 1 : index
    %c2_363 = arith.constant 2 : index
    %c0_364 = arith.constant 0 : index
    %445 = vector.load %arg25[%c1_362, %c2_363, %c0_364] : memref<2x10x128xf32, #tpu.memory_space<vmem>>, vector<1x8x128xf32>
    %446 = vector.shape_cast %445 : vector<1x8x128xf32> to vector<8x128xf32>
    %c2_365 = arith.constant 2 : index
    %c0_366 = arith.constant 0 : index
    %c0_367 = arith.constant 0 : index
    %447 = vector.load %arg10[%c2_365, %c0_366, %c0_367] : memref<3x128x128xf32, #tpu.memory_space<vmem>>, vector<1x128x128xf32>
    %448 = vector.shape_cast %447 : vector<1x128x128xf32> to vector<128x128xf32>
    %cst_368 = arith.constant dense<0.000000e+00> : vector<8x128xf32>
    %449 = tpu.matmul %446, %448, %cst_368 {dimension_numbers = #tpu.dot_dimension_numbers<[1], [0], [0], [1], [0, 0, 1, 1], [], []>} : vector<8x128xf32>, vector<128x128xf32>, vector<8x128xf32> -> vector<8x128xf32>
    %450 = arith.addf %444, %449 : vector<8x128xf32>
    %c0_369 = arith.constant 0 : index
    %c0_370 = arith.constant 0 : index
    %451 = vector.load %arg11[%c0_369, %c0_370] : memref<1x128xf32, #tpu.memory_space<vmem>>, vector<1x128xf32>
    %452 = vector.broadcast %451 : vector<1x128xf32> to vector<8x128xf32>
    %453 = arith.addf %450, %452 : vector<8x128xf32>
    %cst_371 = arith.constant 5.000000e-01 : f32
    %454 = vector.broadcast %cst_371 : f32 to vector<8x128xf32>
    %455 = arith.mulf %454, %453 : vector<8x128xf32>
    %cst_372 = arith.constant 4.471500e-02 : f32
    %456 = vector.broadcast %cst_372 : f32 to vector<8x128xf32>
    %457 = arith.mulf %456, %453 : vector<8x128xf32>
    %458 = arith.mulf %457, %453 : vector<8x128xf32>
    %459 = arith.mulf %458, %453 : vector<8x128xf32>
    %460 = arith.addf %453, %459 : vector<8x128xf32>
    %cst_373 = arith.constant 0.797884583 : f32
    %461 = vector.broadcast %cst_373 : f32 to vector<8x128xf32>
    %462 = arith.mulf %461, %460 : vector<8x128xf32>
    %463 = math.tanh %462 : vector<8x128xf32>
    %cst_374 = arith.constant 1.000000e+00 : f32
    %464 = vector.broadcast %cst_374 : f32 to vector<8x128xf32>
    %465 = arith.addf %464, %463 : vector<8x128xf32>
    %466 = arith.mulf %455, %465 : vector<8x128xf32>
    %cst_375 = arith.constant 0.000000e+00 : f32
    %467 = vector.broadcast %cst_375 : f32 to vector<1x128xf32>
    %c0_376 = arith.constant 0 : index
    %c0_377 = arith.constant 0 : index
    %c0_378 = arith.constant 0 : index
    %468 = vector.load %arg26[%c0_376, %c0_377, %c0_378] : memref<2x10x128xf32, #tpu.memory_space<vmem>>, vector<1x1x128xf32>
    %469 = vector.shape_cast %468 : vector<1x1x128xf32> to vector<1x128xf32>
    %470 = vector.shape_cast %467 : vector<1x128xf32> to vector<1x1x128xf32>
    tpu.vector_store %arg26[%c0_376, %c0_377, %c0_378], %470 {strides = array<i32>} : memref<2x10x128xf32, #tpu.memory_space<vmem>>, vector<1x1x128xf32>,
    %c0_379 = arith.constant 0 : index
    %c1_380 = arith.constant 1 : index
    %c0_381 = arith.constant 0 : index
    %471 = vector.load %arg26[%c0_379, %c1_380, %c0_381] : memref<2x10x128xf32, #tpu.memory_space<vmem>>, vector<1x8x128xf32>
    %472 = vector.shape_cast %471 : vector<1x8x128xf32> to vector<8x128xf32>
    %473 = vector.shape_cast %431 : vector<8x128xf32> to vector<1x8x128xf32>
    tpu.vector_store %arg26[%c0_379, %c1_380, %c0_381], %473 {strides = array<i32>} : memref<2x10x128xf32, #tpu.memory_space<vmem>>, vector<1x8x128xf32>,
    %c0_382 = arith.constant 0 : index
    %c9_383 = arith.constant 9 : index
    %c0_384 = arith.constant 0 : index
    %474 = vector.load %arg26[%c0_382, %c9_383, %c0_384] : memref<2x10x128xf32, #tpu.memory_space<vmem>>, vector<1x1x128xf32>
    %475 = vector.shape_cast %474 : vector<1x1x128xf32> to vector<1x128xf32>
    %476 = vector.shape_cast %467 : vector<1x128xf32> to vector<1x1x128xf32>
    tpu.vector_store %arg26[%c0_382, %c9_383, %c0_384], %476 {strides = array<i32>} : memref<2x10x128xf32, #tpu.memory_space<vmem>>, vector<1x1x128xf32>,
    %c1_385 = arith.constant 1 : index
    %c0_386 = arith.constant 0 : index
    %c0_387 = arith.constant 0 : index
    %477 = vector.load %arg26[%c1_385, %c0_386, %c0_387] : memref<2x10x128xf32, #tpu.memory_space<vmem>>, vector<1x1x128xf32>
    %478 = vector.shape_cast %477 : vector<1x1x128xf32> to vector<1x128xf32>
    %479 = vector.shape_cast %467 : vector<1x128xf32> to vector<1x1x128xf32>
    tpu.vector_store %arg26[%c1_385, %c0_386, %c0_387], %479 {strides = array<i32>} : memref<2x10x128xf32, #tpu.memory_space<vmem>>, vector<1x1x128xf32>,
    %c1_388 = arith.constant 1 : index
    %c1_389 = arith.constant 1 : index
    %c0_390 = arith.constant 0 : index
    %480 = vector.load %arg26[%c1_388, %c1_389, %c0_390] : memref<2x10x128xf32, #tpu.memory_space<vmem>>, vector<1x8x128xf32>
    %481 = vector.shape_cast %480 : vector<1x8x128xf32> to vector<8x128xf32>
    %482 = vector.shape_cast %466 : vector<8x128xf32> to vector<1x8x128xf32>
    tpu.vector_store %arg26[%c1_388, %c1_389, %c0_390], %482 {strides = array<i32>} : memref<2x10x128xf32, #tpu.memory_space<vmem>>, vector<1x8x128xf32>,
    %c1_391 = arith.constant 1 : index
    %c9_392 = arith.constant 9 : index
    %c0_393 = arith.constant 0 : index
    %483 = vector.load %arg26[%c1_391, %c9_392, %c0_393] : memref<2x10x128xf32, #tpu.memory_space<vmem>>, vector<1x1x128xf32>
    %484 = vector.shape_cast %483 : vector<1x1x128xf32> to vector<1x128xf32>
    %485 = vector.shape_cast %467 : vector<1x128xf32> to vector<1x1x128xf32>
    tpu.vector_store %arg26[%c1_391, %c9_392, %c0_393], %485 {strides = array<i32>} : memref<2x10x128xf32, #tpu.memory_space<vmem>>, vector<1x1x128xf32>,
    %cst_394 = arith.constant 0.000000e+00 : f32
    %486 = vector.broadcast %cst_394 : f32 to vector<8x128xf32>
    %c0_395 = arith.constant 0 : index
    %c0_396 = arith.constant 0 : index
    %c0_397 = arith.constant 0 : index
    %487 = vector.load %arg26[%c0_395, %c0_396, %c0_397] : memref<2x10x128xf32, #tpu.memory_space<vmem>>, vector<1x8x128xf32>
    %488 = vector.shape_cast %487 : vector<1x8x128xf32> to vector<8x128xf32>
    %c0_398 = arith.constant 0 : index
    %c0_399 = arith.constant 0 : index
    %c0_400 = arith.constant 0 : index
    %489 = vector.load %arg12[%c0_398, %c0_399, %c0_400] : memref<3x128x128xf32, #tpu.memory_space<vmem>>, vector<1x128x128xf32>
    %490 = vector.shape_cast %489 : vector<1x128x128xf32> to vector<128x128xf32>
    %cst_401 = arith.constant dense<0.000000e+00> : vector<8x128xf32>
    %491 = tpu.matmul %488, %490, %cst_401 {dimension_numbers = #tpu.dot_dimension_numbers<[1], [0], [0], [1], [0, 0, 1, 1], [], []>} : vector<8x128xf32>, vector<128x128xf32>, vector<8x128xf32> -> vector<8x128xf32>
    %492 = arith.addf %486, %491 : vector<8x128xf32>
    %c0_402 = arith.constant 0 : index
    %c1_403 = arith.constant 1 : index
    %c0_404 = arith.constant 0 : index
    %493 = vector.load %arg26[%c0_402, %c1_403, %c0_404] : memref<2x10x128xf32, #tpu.memory_space<vmem>>, vector<1x8x128xf32>
    %494 = vector.shape_cast %493 : vector<1x8x128xf32> to vector<8x128xf32>
    %c1_405 = arith.constant 1 : index
    %c0_406 = arith.constant 0 : index
    %c0_407 = arith.constant 0 : index
    %495 = vector.load %arg12[%c1_405, %c0_406, %c0_407] : memref<3x128x128xf32, #tpu.memory_space<vmem>>, vector<1x128x128xf32>
    %496 = vector.shape_cast %495 : vector<1x128x128xf32> to vector<128x128xf32>
    %cst_408 = arith.constant dense<0.000000e+00> : vector<8x128xf32>
    %497 = tpu.matmul %494, %496, %cst_408 {dimension_numbers = #tpu.dot_dimension_numbers<[1], [0], [0], [1], [0, 0, 1, 1], [], []>} : vector<8x128xf32>, vector<128x128xf32>, vector<8x128xf32> -> vector<8x128xf32>
    %498 = arith.addf %492, %497 : vector<8x128xf32>
    %c0_409 = arith.constant 0 : index
    %c2_410 = arith.constant 2 : index
    %c0_411 = arith.constant 0 : index
    %499 = vector.load %arg26[%c0_409, %c2_410, %c0_411] : memref<2x10x128xf32, #tpu.memory_space<vmem>>, vector<1x8x128xf32>
    %500 = vector.shape_cast %499 : vector<1x8x128xf32> to vector<8x128xf32>
    %c2_412 = arith.constant 2 : index
    %c0_413 = arith.constant 0 : index
    %c0_414 = arith.constant 0 : index
    %501 = vector.load %arg12[%c2_412, %c0_413, %c0_414] : memref<3x128x128xf32, #tpu.memory_space<vmem>>, vector<1x128x128xf32>
    %502 = vector.shape_cast %501 : vector<1x128x128xf32> to vector<128x128xf32>
    %cst_415 = arith.constant dense<0.000000e+00> : vector<8x128xf32>
    %503 = tpu.matmul %500, %502, %cst_415 {dimension_numbers = #tpu.dot_dimension_numbers<[1], [0], [0], [1], [0, 0, 1, 1], [], []>} : vector<8x128xf32>, vector<128x128xf32>, vector<8x128xf32> -> vector<8x128xf32>
    %504 = arith.addf %498, %503 : vector<8x128xf32>
    %c0_416 = arith.constant 0 : index
    %c0_417 = arith.constant 0 : index
    %505 = vector.load %arg13[%c0_416, %c0_417] : memref<1x128xf32, #tpu.memory_space<vmem>>, vector<1x128xf32>
    %506 = vector.broadcast %505 : vector<1x128xf32> to vector<8x128xf32>
    %507 = arith.addf %504, %506 : vector<8x128xf32>
    %cst_418 = arith.constant 5.000000e-01 : f32
    %508 = vector.broadcast %cst_418 : f32 to vector<8x128xf32>
    %509 = arith.mulf %508, %507 : vector<8x128xf32>
    %cst_419 = arith.constant 4.471500e-02 : f32
    %510 = vector.broadcast %cst_419 : f32 to vector<8x128xf32>
    %511 = arith.mulf %510, %507 : vector<8x128xf32>
    %512 = arith.mulf %511, %507 : vector<8x128xf32>
    %513 = arith.mulf %512, %507 : vector<8x128xf32>
    %514 = arith.addf %507, %513 : vector<8x128xf32>
    %cst_420 = arith.constant 0.797884583 : f32
    %515 = vector.broadcast %cst_420 : f32 to vector<8x128xf32>
    %516 = arith.mulf %515, %514 : vector<8x128xf32>
    %517 = math.tanh %516 : vector<8x128xf32>
    %cst_421 = arith.constant 1.000000e+00 : f32
    %518 = vector.broadcast %cst_421 : f32 to vector<8x128xf32>
    %519 = arith.addf %518, %517 : vector<8x128xf32>
    %520 = arith.mulf %509, %519 : vector<8x128xf32>
    %521 = vector.extract_strided_slice %520 {offsets = [0, 0], sizes = [8, 64], strides = [1, 1]} : vector<8x128xf32> to vector<8x64xf32>
    %522 = vector.extract_strided_slice %520 {offsets = [0, 64], sizes = [8, 64], strides = [1, 1]} : vector<8x128xf32> to vector<8x64xf32>
    %523 = arith.maximumf %521, %522 : vector<8x64xf32>
    %524 = vector.shape_cast %523 : vector<8x64xf32> to vector<4x2x64xf32>
    %525 = vector.extract_strided_slice %524 {offsets = [0, 0, 0], sizes = [4, 1, 64], strides = [1, 1, 1]} : vector<4x2x64xf32> to vector<4x1x64xf32>
    %526 = vector.shape_cast %525 : vector<4x1x64xf32> to vector<4x64xf32>
    %527 = vector.extract_strided_slice %524 {offsets = [0, 1, 0], sizes = [4, 1, 64], strides = [1, 1, 1]} : vector<4x2x64xf32> to vector<4x1x64xf32>
    %528 = vector.shape_cast %527 : vector<4x1x64xf32> to vector<4x64xf32>
    %529 = arith.maximumf %526, %528 : vector<4x64xf32>
    %cst_422 = arith.constant 0.000000e+00 : f32
    %530 = vector.broadcast %cst_422 : f32 to vector<8x128xf32>
    %c1_423 = arith.constant 1 : index
    %c0_424 = arith.constant 0 : index
    %c0_425 = arith.constant 0 : index
    %531 = vector.load %arg26[%c1_423, %c0_424, %c0_425] : memref<2x10x128xf32, #tpu.memory_space<vmem>>, vector<1x8x128xf32>
    %532 = vector.shape_cast %531 : vector<1x8x128xf32> to vector<8x128xf32>
    %c0_426 = arith.constant 0 : index
    %c0_427 = arith.constant 0 : index
    %c0_428 = arith.constant 0 : index
    %533 = vector.load %arg12[%c0_426, %c0_427, %c0_428] : memref<3x128x128xf32, #tpu.memory_space<vmem>>, vector<1x128x128xf32>
    %534 = vector.shape_cast %533 : vector<1x128x128xf32> to vector<128x128xf32>
    %cst_429 = arith.constant dense<0.000000e+00> : vector<8x128xf32>
    %535 = tpu.matmul %532, %534, %cst_429 {dimension_numbers = #tpu.dot_dimension_numbers<[1], [0], [0], [1], [0, 0, 1, 1], [], []>} : vector<8x128xf32>, vector<128x128xf32>, vector<8x128xf32> -> vector<8x128xf32>
    %536 = arith.addf %530, %535 : vector<8x128xf32>
    %c1_430 = arith.constant 1 : index
    %c1_431 = arith.constant 1 : index
    %c0_432 = arith.constant 0 : index
    %537 = vector.load %arg26[%c1_430, %c1_431, %c0_432] : memref<2x10x128xf32, #tpu.memory_space<vmem>>, vector<1x8x128xf32>
    %538 = vector.shape_cast %537 : vector<1x8x128xf32> to vector<8x128xf32>
    %c1_433 = arith.constant 1 : index
    %c0_434 = arith.constant 0 : index
    %c0_435 = arith.constant 0 : index
    %539 = vector.load %arg12[%c1_433, %c0_434, %c0_435] : memref<3x128x128xf32, #tpu.memory_space<vmem>>, vector<1x128x128xf32>
    %540 = vector.shape_cast %539 : vector<1x128x128xf32> to vector<128x128xf32>
    %cst_436 = arith.constant dense<0.000000e+00> : vector<8x128xf32>
    %541 = tpu.matmul %538, %540, %cst_436 {dimension_numbers = #tpu.dot_dimension_numbers<[1], [0], [0], [1], [0, 0, 1, 1], [], []>} : vector<8x128xf32>, vector<128x128xf32>, vector<8x128xf32> -> vector<8x128xf32>
    %542 = arith.addf %536, %541 : vector<8x128xf32>
    %c1_437 = arith.constant 1 : index
    %c2_438 = arith.constant 2 : index
    %c0_439 = arith.constant 0 : index
    %543 = vector.load %arg26[%c1_437, %c2_438, %c0_439] : memref<2x10x128xf32, #tpu.memory_space<vmem>>, vector<1x8x128xf32>
    %544 = vector.shape_cast %543 : vector<1x8x128xf32> to vector<8x128xf32>
    %c2_440 = arith.constant 2 : index
    %c0_441 = arith.constant 0 : index
    %c0_442 = arith.constant 0 : index
    %545 = vector.load %arg12[%c2_440, %c0_441, %c0_442] : memref<3x128x128xf32, #tpu.memory_space<vmem>>, vector<1x128x128xf32>
    %546 = vector.shape_cast %545 : vector<1x128x128xf32> to vector<128x128xf32>
    %cst_443 = arith.constant dense<0.000000e+00> : vector<8x128xf32>
    %547 = tpu.matmul %544, %546, %cst_443 {dimension_numbers = #tpu.dot_dimension_numbers<[1], [0], [0], [1], [0, 0, 1, 1], [], []>} : vector<8x128xf32>, vector<128x128xf32>, vector<8x128xf32> -> vector<8x128xf32>
    %548 = arith.addf %542, %547 : vector<8x128xf32>
    %c0_444 = arith.constant 0 : index
    %c0_445 = arith.constant 0 : index
    %549 = vector.load %arg13[%c0_444, %c0_445] : memref<1x128xf32, #tpu.memory_space<vmem>>, vector<1x128xf32>
    %550 = vector.broadcast %549 : vector<1x128xf32> to vector<8x128xf32>
    %551 = arith.addf %548, %550 : vector<8x128xf32>
    %cst_446 = arith.constant 5.000000e-01 : f32
    %552 = vector.broadcast %cst_446 : f32 to vector<8x128xf32>
    %553 = arith.mulf %552, %551 : vector<8x128xf32>
    %cst_447 = arith.constant 4.471500e-02 : f32
    %554 = vector.broadcast %cst_447 : f32 to vector<8x128xf32>
    %555 = arith.mulf %554, %551 : vector<8x128xf32>
    %556 = arith.mulf %555, %551 : vector<8x128xf32>
    %557 = arith.mulf %556, %551 : vector<8x128xf32>
    %558 = arith.addf %551, %557 : vector<8x128xf32>
    %cst_448 = arith.constant 0.797884583 : f32
    %559 = vector.broadcast %cst_448 : f32 to vector<8x128xf32>
    %560 = arith.mulf %559, %558 : vector<8x128xf32>
    %561 = math.tanh %560 : vector<8x128xf32>
    %cst_449 = arith.constant 1.000000e+00 : f32
    %562 = vector.broadcast %cst_449 : f32 to vector<8x128xf32>
    %563 = arith.addf %562, %561 : vector<8x128xf32>
    %564 = arith.mulf %553, %563 : vector<8x128xf32>
    %565 = vector.extract_strided_slice %564 {offsets = [0, 0], sizes = [8, 64], strides = [1, 1]} : vector<8x128xf32> to vector<8x64xf32>
    %566 = vector.extract_strided_slice %564 {offsets = [0, 64], sizes = [8, 64], strides = [1, 1]} : vector<8x128xf32> to vector<8x64xf32>
    %567 = arith.maximumf %565, %566 : vector<8x64xf32>
    %568 = vector.shape_cast %567 : vector<8x64xf32> to vector<4x2x64xf32>
    %569 = vector.extract_strided_slice %568 {offsets = [0, 0, 0], sizes = [4, 1, 64], strides = [1, 1, 1]} : vector<4x2x64xf32> to vector<4x1x64xf32>
    %570 = vector.shape_cast %569 : vector<4x1x64xf32> to vector<4x64xf32>
    %571 = vector.extract_strided_slice %568 {offsets = [0, 1, 0], sizes = [4, 1, 64], strides = [1, 1, 1]} : vector<4x2x64xf32> to vector<4x1x64xf32>
    %572 = vector.shape_cast %571 : vector<4x1x64xf32> to vector<4x64xf32>
    %573 = arith.maximumf %570, %572 : vector<4x64xf32>
    %cst_450 = arith.constant 0.000000e+00 : f32
    %574 = vector.broadcast %cst_450 : f32 to vector<1x64xf32>
    %c0_451 = arith.constant 0 : index
    %c0_452 = arith.constant 0 : index
    %c0_453 = arith.constant 0 : index
    %575 = vector.load %arg27[%c0_451, %c0_452, %c0_453] : memref<2x6x64xf32, #tpu.memory_space<vmem>>, vector<1x1x64xf32>
    %576 = vector.shape_cast %575 : vector<1x1x64xf32> to vector<1x64xf32>
    %577 = vector.shape_cast %574 : vector<1x64xf32> to vector<1x1x64xf32>
    tpu.vector_store %arg27[%c0_451, %c0_452, %c0_453], %577 {strides = array<i32>} : memref<2x6x64xf32, #tpu.memory_space<vmem>>, vector<1x1x64xf32>,
    %c0_454 = arith.constant 0 : index
    %c1_455 = arith.constant 1 : index
    %c0_456 = arith.constant 0 : index
    %578 = vector.load %arg27[%c0_454, %c1_455, %c0_456] : memref<2x6x64xf32, #tpu.memory_space<vmem>>, vector<1x4x64xf32>
    %579 = vector.shape_cast %578 : vector<1x4x64xf32> to vector<4x64xf32>
    %580 = vector.shape_cast %529 : vector<4x64xf32> to vector<1x4x64xf32>
    tpu.vector_store %arg27[%c0_454, %c1_455, %c0_456], %580 {strides = array<i32>} : memref<2x6x64xf32, #tpu.memory_space<vmem>>, vector<1x4x64xf32>,
    %c0_457 = arith.constant 0 : index
    %c5 = arith.constant 5 : index
    %c0_458 = arith.constant 0 : index
    %581 = vector.load %arg27[%c0_457, %c5, %c0_458] : memref<2x6x64xf32, #tpu.memory_space<vmem>>, vector<1x1x64xf32>
    %582 = vector.shape_cast %581 : vector<1x1x64xf32> to vector<1x64xf32>
    %583 = vector.shape_cast %574 : vector<1x64xf32> to vector<1x1x64xf32>
    tpu.vector_store %arg27[%c0_457, %c5, %c0_458], %583 {strides = array<i32>} : memref<2x6x64xf32, #tpu.memory_space<vmem>>, vector<1x1x64xf32>,
    %c1_459 = arith.constant 1 : index
    %c0_460 = arith.constant 0 : index
    %c0_461 = arith.constant 0 : index
    %584 = vector.load %arg27[%c1_459, %c0_460, %c0_461] : memref<2x6x64xf32, #tpu.memory_space<vmem>>, vector<1x1x64xf32>
    %585 = vector.shape_cast %584 : vector<1x1x64xf32> to vector<1x64xf32>
    %586 = vector.shape_cast %574 : vector<1x64xf32> to vector<1x1x64xf32>
    tpu.vector_store %arg27[%c1_459, %c0_460, %c0_461], %586 {strides = array<i32>} : memref<2x6x64xf32, #tpu.memory_space<vmem>>, vector<1x1x64xf32>,
    %c1_462 = arith.constant 1 : index
    %c1_463 = arith.constant 1 : index
    %c0_464 = arith.constant 0 : index
    %587 = vector.load %arg27[%c1_462, %c1_463, %c0_464] : memref<2x6x64xf32, #tpu.memory_space<vmem>>, vector<1x4x64xf32>
    %588 = vector.shape_cast %587 : vector<1x4x64xf32> to vector<4x64xf32>
    %589 = vector.shape_cast %573 : vector<4x64xf32> to vector<1x4x64xf32>
    tpu.vector_store %arg27[%c1_462, %c1_463, %c0_464], %589 {strides = array<i32>} : memref<2x6x64xf32, #tpu.memory_space<vmem>>, vector<1x4x64xf32>,
    %c1_465 = arith.constant 1 : index
    %c5_466 = arith.constant 5 : index
    %c0_467 = arith.constant 0 : index
    %590 = vector.load %arg27[%c1_465, %c5_466, %c0_467] : memref<2x6x64xf32, #tpu.memory_space<vmem>>, vector<1x1x64xf32>
    %591 = vector.shape_cast %590 : vector<1x1x64xf32> to vector<1x64xf32>
    %592 = vector.shape_cast %574 : vector<1x64xf32> to vector<1x1x64xf32>
    tpu.vector_store %arg27[%c1_465, %c5_466, %c0_467], %592 {strides = array<i32>} : memref<2x6x64xf32, #tpu.memory_space<vmem>>, vector<1x1x64xf32>,
    %cst_468 = arith.constant 0.000000e+00 : f32
    %593 = vector.broadcast %cst_468 : f32 to vector<4x128xf32>
    %c0_469 = arith.constant 0 : index
    %c0_470 = arith.constant 0 : index
    %c0_471 = arith.constant 0 : index
    %594 = vector.load %arg27[%c0_469, %c0_470, %c0_471] : memref<2x6x64xf32, #tpu.memory_space<vmem>>, vector<1x4x64xf32>
    %595 = vector.shape_cast %594 : vector<1x4x64xf32> to vector<4x64xf32>
    %c0_472 = arith.constant 0 : index
    %c0_473 = arith.constant 0 : index
    %c0_474 = arith.constant 0 : index
    %596 = vector.load %arg14[%c0_472, %c0_473, %c0_474] : memref<3x64x128xf32, #tpu.memory_space<vmem>>, vector<1x64x128xf32>
    %597 = vector.shape_cast %596 : vector<1x64x128xf32> to vector<64x128xf32>
    %cst_475 = arith.constant dense<0.000000e+00> : vector<4x128xf32>
    %598 = tpu.matmul %595, %597, %cst_475 {dimension_numbers = #tpu.dot_dimension_numbers<[1], [0], [0], [1], [0, 0, 1, 1], [], []>} : vector<4x64xf32>, vector<64x128xf32>, vector<4x128xf32> -> vector<4x128xf32>
    %599 = arith.addf %593, %598 : vector<4x128xf32>
    %c0_476 = arith.constant 0 : index
    %c1_477 = arith.constant 1 : index
    %c0_478 = arith.constant 0 : index
    %600 = vector.load %arg27[%c0_476, %c1_477, %c0_478] : memref<2x6x64xf32, #tpu.memory_space<vmem>>, vector<1x4x64xf32>
    %601 = vector.shape_cast %600 : vector<1x4x64xf32> to vector<4x64xf32>
    %c1_479 = arith.constant 1 : index
    %c0_480 = arith.constant 0 : index
    %c0_481 = arith.constant 0 : index
    %602 = vector.load %arg14[%c1_479, %c0_480, %c0_481] : memref<3x64x128xf32, #tpu.memory_space<vmem>>, vector<1x64x128xf32>
    %603 = vector.shape_cast %602 : vector<1x64x128xf32> to vector<64x128xf32>
    %cst_482 = arith.constant dense<0.000000e+00> : vector<4x128xf32>
    %604 = tpu.matmul %601, %603, %cst_482 {dimension_numbers = #tpu.dot_dimension_numbers<[1], [0], [0], [1], [0, 0, 1, 1], [], []>} : vector<4x64xf32>, vector<64x128xf32>, vector<4x128xf32> -> vector<4x128xf32>
    %605 = arith.addf %599, %604 : vector<4x128xf32>
    %c0_483 = arith.constant 0 : index
    %c2_484 = arith.constant 2 : index
    %c0_485 = arith.constant 0 : index
    %606 = vector.load %arg27[%c0_483, %c2_484, %c0_485] : memref<2x6x64xf32, #tpu.memory_space<vmem>>, vector<1x4x64xf32>
    %607 = vector.shape_cast %606 : vector<1x4x64xf32> to vector<4x64xf32>
    %c2_486 = arith.constant 2 : index
    %c0_487 = arith.constant 0 : index
    %c0_488 = arith.constant 0 : index
    %608 = vector.load %arg14[%c2_486, %c0_487, %c0_488] : memref<3x64x128xf32, #tpu.memory_space<vmem>>, vector<1x64x128xf32>
    %609 = vector.shape_cast %608 : vector<1x64x128xf32> to vector<64x128xf32>
    %cst_489 = arith.constant dense<0.000000e+00> : vector<4x128xf32>
    %610 = tpu.matmul %607, %609, %cst_489 {dimension_numbers = #tpu.dot_dimension_numbers<[1], [0], [0], [1], [0, 0, 1, 1], [], []>} : vector<4x64xf32>, vector<64x128xf32>, vector<4x128xf32> -> vector<4x128xf32>
    %611 = arith.addf %605, %610 : vector<4x128xf32>
    %c0_490 = arith.constant 0 : index
    %c0_491 = arith.constant 0 : index
    %612 = vector.load %arg15[%c0_490, %c0_491] : memref<1x128xf32, #tpu.memory_space<vmem>>, vector<1x128xf32>
    %613 = vector.broadcast %612 : vector<1x128xf32> to vector<4x128xf32>
    %614 = arith.addf %611, %613 : vector<4x128xf32>
    %cst_492 = arith.constant 5.000000e-01 : f32
    %615 = vector.broadcast %cst_492 : f32 to vector<4x128xf32>
    %616 = arith.mulf %615, %614 : vector<4x128xf32>
    %cst_493 = arith.constant 4.471500e-02 : f32
    %617 = vector.broadcast %cst_493 : f32 to vector<4x128xf32>
    %618 = arith.mulf %617, %614 : vector<4x128xf32>
    %619 = arith.mulf %618, %614 : vector<4x128xf32>
    %620 = arith.mulf %619, %614 : vector<4x128xf32>
    %621 = arith.addf %614, %620 : vector<4x128xf32>
    %cst_494 = arith.constant 0.797884583 : f32
    %622 = vector.broadcast %cst_494 : f32 to vector<4x128xf32>
    %623 = arith.mulf %622, %621 : vector<4x128xf32>
    %624 = math.tanh %623 : vector<4x128xf32>
    %cst_495 = arith.constant 1.000000e+00 : f32
    %625 = vector.broadcast %cst_495 : f32 to vector<4x128xf32>
    %626 = arith.addf %625, %624 : vector<4x128xf32>
    %627 = arith.mulf %616, %626 : vector<4x128xf32>
    %cst_496 = arith.constant 0.000000e+00 : f32
    %628 = vector.broadcast %cst_496 : f32 to vector<4x128xf32>
    %c1_497 = arith.constant 1 : index
    %c0_498 = arith.constant 0 : index
    %c0_499 = arith.constant 0 : index
    %629 = vector.load %arg27[%c1_497, %c0_498, %c0_499] : memref<2x6x64xf32, #tpu.memory_space<vmem>>, vector<1x4x64xf32>
    %630 = vector.shape_cast %629 : vector<1x4x64xf32> to vector<4x64xf32>
    %c0_500 = arith.constant 0 : index
    %c0_501 = arith.constant 0 : index
    %c0_502 = arith.constant 0 : index
    %631 = vector.load %arg14[%c0_500, %c0_501, %c0_502] : memref<3x64x128xf32, #tpu.memory_space<vmem>>, vector<1x64x128xf32>
    %632 = vector.shape_cast %631 : vector<1x64x128xf32> to vector<64x128xf32>
    %cst_503 = arith.constant dense<0.000000e+00> : vector<4x128xf32>
    %633 = tpu.matmul %630, %632, %cst_503 {dimension_numbers = #tpu.dot_dimension_numbers<[1], [0], [0], [1], [0, 0, 1, 1], [], []>} : vector<4x64xf32>, vector<64x128xf32>, vector<4x128xf32> -> vector<4x128xf32>
    %634 = arith.addf %628, %633 : vector<4x128xf32>
    %c1_504 = arith.constant 1 : index
    %c1_505 = arith.constant 1 : index
    %c0_506 = arith.constant 0 : index
    %635 = vector.load %arg27[%c1_504, %c1_505, %c0_506] : memref<2x6x64xf32, #tpu.memory_space<vmem>>, vector<1x4x64xf32>
    %636 = vector.shape_cast %635 : vector<1x4x64xf32> to vector<4x64xf32>
    %c1_507 = arith.constant 1 : index
    %c0_508 = arith.constant 0 : index
    %c0_509 = arith.constant 0 : index
    %637 = vector.load %arg14[%c1_507, %c0_508, %c0_509] : memref<3x64x128xf32, #tpu.memory_space<vmem>>, vector<1x64x128xf32>
    %638 = vector.shape_cast %637 : vector<1x64x128xf32> to vector<64x128xf32>
    %cst_510 = arith.constant dense<0.000000e+00> : vector<4x128xf32>
    %639 = tpu.matmul %636, %638, %cst_510 {dimension_numbers = #tpu.dot_dimension_numbers<[1], [0], [0], [1], [0, 0, 1, 1], [], []>} : vector<4x64xf32>, vector<64x128xf32>, vector<4x128xf32> -> vector<4x128xf32>
    %640 = arith.addf %634, %639 : vector<4x128xf32>
    %c1_511 = arith.constant 1 : index
    %c2_512 = arith.constant 2 : index
    %c0_513 = arith.constant 0 : index
    %641 = vector.load %arg27[%c1_511, %c2_512, %c0_513] : memref<2x6x64xf32, #tpu.memory_space<vmem>>, vector<1x4x64xf32>
    %642 = vector.shape_cast %641 : vector<1x4x64xf32> to vector<4x64xf32>
    %c2_514 = arith.constant 2 : index
    %c0_515 = arith.constant 0 : index
    %c0_516 = arith.constant 0 : index
    %643 = vector.load %arg14[%c2_514, %c0_515, %c0_516] : memref<3x64x128xf32, #tpu.memory_space<vmem>>, vector<1x64x128xf32>
    %644 = vector.shape_cast %643 : vector<1x64x128xf32> to vector<64x128xf32>
    %cst_517 = arith.constant dense<0.000000e+00> : vector<4x128xf32>
    %645 = tpu.matmul %642, %644, %cst_517 {dimension_numbers = #tpu.dot_dimension_numbers<[1], [0], [0], [1], [0, 0, 1, 1], [], []>} : vector<4x64xf32>, vector<64x128xf32>, vector<4x128xf32> -> vector<4x128xf32>
    %646 = arith.addf %640, %645 : vector<4x128xf32>
    %c0_518 = arith.constant 0 : index
    %c0_519 = arith.constant 0 : index
    %647 = vector.load %arg15[%c0_518, %c0_519] : memref<1x128xf32, #tpu.memory_space<vmem>>, vector<1x128xf32>
    %648 = vector.broadcast %647 : vector<1x128xf32> to vector<4x128xf32>
    %649 = arith.addf %646, %648 : vector<4x128xf32>
    %cst_520 = arith.constant 5.000000e-01 : f32
    %650 = vector.broadcast %cst_520 : f32 to vector<4x128xf32>
    %651 = arith.mulf %650, %649 : vector<4x128xf32>
    %cst_521 = arith.constant 4.471500e-02 : f32
    %652 = vector.broadcast %cst_521 : f32 to vector<4x128xf32>
    %653 = arith.mulf %652, %649 : vector<4x128xf32>
    %654 = arith.mulf %653, %649 : vector<4x128xf32>
    %655 = arith.mulf %654, %649 : vector<4x128xf32>
    %656 = arith.addf %649, %655 : vector<4x128xf32>
    %cst_522 = arith.constant 0.797884583 : f32
    %657 = vector.broadcast %cst_522 : f32 to vector<4x128xf32>
    %658 = arith.mulf %657, %656 : vector<4x128xf32>
    %659 = math.tanh %658 : vector<4x128xf32>
    %cst_523 = arith.constant 1.000000e+00 : f32
    %660 = vector.broadcast %cst_523 : f32 to vector<4x128xf32>
    %661 = arith.addf %660, %659 : vector<4x128xf32>
    %662 = arith.mulf %651, %661 : vector<4x128xf32>
    %cst_524 = arith.constant 0.000000e+00 : f32
    %663 = vector.broadcast %cst_524 : f32 to vector<1x128xf32>
    %c0_525 = arith.constant 0 : index
    %c0_526 = arith.constant 0 : index
    %c0_527 = arith.constant 0 : index
    %664 = vector.load %arg28[%c0_525, %c0_526, %c0_527] : memref<2x6x128xf32, #tpu.memory_space<vmem>>, vector<1x1x128xf32>
    %665 = vector.shape_cast %664 : vector<1x1x128xf32> to vector<1x128xf32>
    %666 = vector.shape_cast %663 : vector<1x128xf32> to vector<1x1x128xf32>
    tpu.vector_store %arg28[%c0_525, %c0_526, %c0_527], %666 {strides = array<i32>} : memref<2x6x128xf32, #tpu.memory_space<vmem>>, vector<1x1x128xf32>,
    %c0_528 = arith.constant 0 : index
    %c1_529 = arith.constant 1 : index
    %c0_530 = arith.constant 0 : index
    %667 = vector.load %arg28[%c0_528, %c1_529, %c0_530] : memref<2x6x128xf32, #tpu.memory_space<vmem>>, vector<1x4x128xf32>
    %668 = vector.shape_cast %667 : vector<1x4x128xf32> to vector<4x128xf32>
    %669 = vector.shape_cast %627 : vector<4x128xf32> to vector<1x4x128xf32>
    tpu.vector_store %arg28[%c0_528, %c1_529, %c0_530], %669 {strides = array<i32>} : memref<2x6x128xf32, #tpu.memory_space<vmem>>, vector<1x4x128xf32>,
    %c0_531 = arith.constant 0 : index
    %c5_532 = arith.constant 5 : index
    %c0_533 = arith.constant 0 : index
    %670 = vector.load %arg28[%c0_531, %c5_532, %c0_533] : memref<2x6x128xf32, #tpu.memory_space<vmem>>, vector<1x1x128xf32>
    %671 = vector.shape_cast %670 : vector<1x1x128xf32> to vector<1x128xf32>
    %672 = vector.shape_cast %663 : vector<1x128xf32> to vector<1x1x128xf32>
    tpu.vector_store %arg28[%c0_531, %c5_532, %c0_533], %672 {strides = array<i32>} : memref<2x6x128xf32, #tpu.memory_space<vmem>>, vector<1x1x128xf32>,
    %c1_534 = arith.constant 1 : index
    %c0_535 = arith.constant 0 : index
    %c0_536 = arith.constant 0 : index
    %673 = vector.load %arg28[%c1_534, %c0_535, %c0_536] : memref<2x6x128xf32, #tpu.memory_space<vmem>>, vector<1x1x128xf32>
    %674 = vector.shape_cast %673 : vector<1x1x128xf32> to vector<1x128xf32>
    %675 = vector.shape_cast %663 : vector<1x128xf32> to vector<1x1x128xf32>
    tpu.vector_store %arg28[%c1_534, %c0_535, %c0_536], %675 {strides = array<i32>} : memref<2x6x128xf32, #tpu.memory_space<vmem>>, vector<1x1x128xf32>,
    %c1_537 = arith.constant 1 : index
    %c1_538 = arith.constant 1 : index
    %c0_539 = arith.constant 0 : index
    %676 = vector.load %arg28[%c1_537, %c1_538, %c0_539] : memref<2x6x128xf32, #tpu.memory_space<vmem>>, vector<1x4x128xf32>
    %677 = vector.shape_cast %676 : vector<1x4x128xf32> to vector<4x128xf32>
    %678 = vector.shape_cast %662 : vector<4x128xf32> to vector<1x4x128xf32>
    tpu.vector_store %arg28[%c1_537, %c1_538, %c0_539], %678 {strides = array<i32>} : memref<2x6x128xf32, #tpu.memory_space<vmem>>, vector<1x4x128xf32>,
    %c1_540 = arith.constant 1 : index
    %c5_541 = arith.constant 5 : index
    %c0_542 = arith.constant 0 : index
    %679 = vector.load %arg28[%c1_540, %c5_541, %c0_542] : memref<2x6x128xf32, #tpu.memory_space<vmem>>, vector<1x1x128xf32>
    %680 = vector.shape_cast %679 : vector<1x1x128xf32> to vector<1x128xf32>
    %681 = vector.shape_cast %663 : vector<1x128xf32> to vector<1x1x128xf32>
    tpu.vector_store %arg28[%c1_540, %c5_541, %c0_542], %681 {strides = array<i32>} : memref<2x6x128xf32, #tpu.memory_space<vmem>>, vector<1x1x128xf32>,
    %cst_543 = arith.constant 0.000000e+00 : f32
    %682 = vector.broadcast %cst_543 : f32 to vector<4x128xf32>
    %c0_544 = arith.constant 0 : index
    %c0_545 = arith.constant 0 : index
    %c0_546 = arith.constant 0 : index
    %683 = vector.load %arg28[%c0_544, %c0_545, %c0_546] : memref<2x6x128xf32, #tpu.memory_space<vmem>>, vector<1x4x128xf32>
    %684 = vector.shape_cast %683 : vector<1x4x128xf32> to vector<4x128xf32>
    %c0_547 = arith.constant 0 : index
    %c0_548 = arith.constant 0 : index
    %c0_549 = arith.constant 0 : index
    %685 = vector.load %arg16[%c0_547, %c0_548, %c0_549] : memref<3x128x128xf32, #tpu.memory_space<vmem>>, vector<1x128x128xf32>
    %686 = vector.shape_cast %685 : vector<1x128x128xf32> to vector<128x128xf32>
    %cst_550 = arith.constant dense<0.000000e+00> : vector<4x128xf32>
    %687 = tpu.matmul %684, %686, %cst_550 {dimension_numbers = #tpu.dot_dimension_numbers<[1], [0], [0], [1], [0, 0, 1, 1], [], []>} : vector<4x128xf32>, vector<128x128xf32>, vector<4x128xf32> -> vector<4x128xf32>
    %688 = arith.addf %682, %687 : vector<4x128xf32>
    %c0_551 = arith.constant 0 : index
    %c1_552 = arith.constant 1 : index
    %c0_553 = arith.constant 0 : index
    %689 = vector.load %arg28[%c0_551, %c1_552, %c0_553] : memref<2x6x128xf32, #tpu.memory_space<vmem>>, vector<1x4x128xf32>
    %690 = vector.shape_cast %689 : vector<1x4x128xf32> to vector<4x128xf32>
    %c1_554 = arith.constant 1 : index
    %c0_555 = arith.constant 0 : index
    %c0_556 = arith.constant 0 : index
    %691 = vector.load %arg16[%c1_554, %c0_555, %c0_556] : memref<3x128x128xf32, #tpu.memory_space<vmem>>, vector<1x128x128xf32>
    %692 = vector.shape_cast %691 : vector<1x128x128xf32> to vector<128x128xf32>
    %cst_557 = arith.constant dense<0.000000e+00> : vector<4x128xf32>
    %693 = tpu.matmul %690, %692, %cst_557 {dimension_numbers = #tpu.dot_dimension_numbers<[1], [0], [0], [1], [0, 0, 1, 1], [], []>} : vector<4x128xf32>, vector<128x128xf32>, vector<4x128xf32> -> vector<4x128xf32>
    %694 = arith.addf %688, %693 : vector<4x128xf32>
    %c0_558 = arith.constant 0 : index
    %c2_559 = arith.constant 2 : index
    %c0_560 = arith.constant 0 : index
    %695 = vector.load %arg28[%c0_558, %c2_559, %c0_560] : memref<2x6x128xf32, #tpu.memory_space<vmem>>, vector<1x4x128xf32>
    %696 = vector.shape_cast %695 : vector<1x4x128xf32> to vector<4x128xf32>
    %c2_561 = arith.constant 2 : index
    %c0_562 = arith.constant 0 : index
    %c0_563 = arith.constant 0 : index
    %697 = vector.load %arg16[%c2_561, %c0_562, %c0_563] : memref<3x128x128xf32, #tpu.memory_space<vmem>>, vector<1x128x128xf32>
    %698 = vector.shape_cast %697 : vector<1x128x128xf32> to vector<128x128xf32>
    %cst_564 = arith.constant dense<0.000000e+00> : vector<4x128xf32>
    %699 = tpu.matmul %696, %698, %cst_564 {dimension_numbers = #tpu.dot_dimension_numbers<[1], [0], [0], [1], [0, 0, 1, 1], [], []>} : vector<4x128xf32>, vector<128x128xf32>, vector<4x128xf32> -> vector<4x128xf32>
    %700 = arith.addf %694, %699 : vector<4x128xf32>
    %c0_565 = arith.constant 0 : index
    %c0_566 = arith.constant 0 : index
    %701 = vector.load %arg17[%c0_565, %c0_566] : memref<1x128xf32, #tpu.memory_space<vmem>>, vector<1x128xf32>
    %702 = vector.broadcast %701 : vector<1x128xf32> to vector<4x128xf32>
    %703 = arith.addf %700, %702 : vector<4x128xf32>
    %cst_567 = arith.constant 5.000000e-01 : f32
    %704 = vector.broadcast %cst_567 : f32 to vector<4x128xf32>
    %705 = arith.mulf %704, %703 : vector<4x128xf32>
    %cst_568 = arith.constant 4.471500e-02 : f32
    %706 = vector.broadcast %cst_568 : f32 to vector<4x128xf32>
    %707 = arith.mulf %706, %703 : vector<4x128xf32>
    %708 = arith.mulf %707, %703 : vector<4x128xf32>
    %709 = arith.mulf %708, %703 : vector<4x128xf32>
    %710 = arith.addf %703, %709 : vector<4x128xf32>
    %cst_569 = arith.constant 0.797884583 : f32
    %711 = vector.broadcast %cst_569 : f32 to vector<4x128xf32>
    %712 = arith.mulf %711, %710 : vector<4x128xf32>
    %713 = math.tanh %712 : vector<4x128xf32>
    %cst_570 = arith.constant 1.000000e+00 : f32
    %714 = vector.broadcast %cst_570 : f32 to vector<4x128xf32>
    %715 = arith.addf %714, %713 : vector<4x128xf32>
    %716 = arith.mulf %705, %715 : vector<4x128xf32>
    %cst_571 = arith.constant 0.000000e+00 : f32
    %717 = vector.broadcast %cst_571 : f32 to vector<4x128xf32>
    %c1_572 = arith.constant 1 : index
    %c0_573 = arith.constant 0 : index
    %c0_574 = arith.constant 0 : index
    %718 = vector.load %arg28[%c1_572, %c0_573, %c0_574] : memref<2x6x128xf32, #tpu.memory_space<vmem>>, vector<1x4x128xf32>
    %719 = vector.shape_cast %718 : vector<1x4x128xf32> to vector<4x128xf32>
    %c0_575 = arith.constant 0 : index
    %c0_576 = arith.constant 0 : index
    %c0_577 = arith.constant 0 : index
    %720 = vector.load %arg16[%c0_575, %c0_576, %c0_577] : memref<3x128x128xf32, #tpu.memory_space<vmem>>, vector<1x128x128xf32>
    %721 = vector.shape_cast %720 : vector<1x128x128xf32> to vector<128x128xf32>
    %cst_578 = arith.constant dense<0.000000e+00> : vector<4x128xf32>
    %722 = tpu.matmul %719, %721, %cst_578 {dimension_numbers = #tpu.dot_dimension_numbers<[1], [0], [0], [1], [0, 0, 1, 1], [], []>} : vector<4x128xf32>, vector<128x128xf32>, vector<4x128xf32> -> vector<4x128xf32>
    %723 = arith.addf %717, %722 : vector<4x128xf32>
    %c1_579 = arith.constant 1 : index
    %c1_580 = arith.constant 1 : index
    %c0_581 = arith.constant 0 : index
    %724 = vector.load %arg28[%c1_579, %c1_580, %c0_581] : memref<2x6x128xf32, #tpu.memory_space<vmem>>, vector<1x4x128xf32>
    %725 = vector.shape_cast %724 : vector<1x4x128xf32> to vector<4x128xf32>
    %c1_582 = arith.constant 1 : index
    %c0_583 = arith.constant 0 : index
    %c0_584 = arith.constant 0 : index
    %726 = vector.load %arg16[%c1_582, %c0_583, %c0_584] : memref<3x128x128xf32, #tpu.memory_space<vmem>>, vector<1x128x128xf32>
    %727 = vector.shape_cast %726 : vector<1x128x128xf32> to vector<128x128xf32>
    %cst_585 = arith.constant dense<0.000000e+00> : vector<4x128xf32>
    %728 = tpu.matmul %725, %727, %cst_585 {dimension_numbers = #tpu.dot_dimension_numbers<[1], [0], [0], [1], [0, 0, 1, 1], [], []>} : vector<4x128xf32>, vector<128x128xf32>, vector<4x128xf32> -> vector<4x128xf32>
    %729 = arith.addf %723, %728 : vector<4x128xf32>
    %c1_586 = arith.constant 1 : index
    %c2_587 = arith.constant 2 : index
    %c0_588 = arith.constant 0 : index
    %730 = vector.load %arg28[%c1_586, %c2_587, %c0_588] : memref<2x6x128xf32, #tpu.memory_space<vmem>>, vector<1x4x128xf32>
    %731 = vector.shape_cast %730 : vector<1x4x128xf32> to vector<4x128xf32>
    %c2_589 = arith.constant 2 : index
    %c0_590 = arith.constant 0 : index
    %c0_591 = arith.constant 0 : index
    %732 = vector.load %arg16[%c2_589, %c0_590, %c0_591] : memref<3x128x128xf32, #tpu.memory_space<vmem>>, vector<1x128x128xf32>
    %733 = vector.shape_cast %732 : vector<1x128x128xf32> to vector<128x128xf32>
    %cst_592 = arith.constant dense<0.000000e+00> : vector<4x128xf32>
    %734 = tpu.matmul %731, %733, %cst_592 {dimension_numbers = #tpu.dot_dimension_numbers<[1], [0], [0], [1], [0, 0, 1, 1], [], []>} : vector<4x128xf32>, vector<128x128xf32>, vector<4x128xf32> -> vector<4x128xf32>
    %735 = arith.addf %729, %734 : vector<4x128xf32>
    %c0_593 = arith.constant 0 : index
    %c0_594 = arith.constant 0 : index
    %736 = vector.load %arg17[%c0_593, %c0_594] : memref<1x128xf32, #tpu.memory_space<vmem>>, vector<1x128xf32>
    %737 = vector.broadcast %736 : vector<1x128xf32> to vector<4x128xf32>
    %738 = arith.addf %735, %737 : vector<4x128xf32>
    %cst_595 = arith.constant 5.000000e-01 : f32
    %739 = vector.broadcast %cst_595 : f32 to vector<4x128xf32>
    %740 = arith.mulf %739, %738 : vector<4x128xf32>
    %cst_596 = arith.constant 4.471500e-02 : f32
    %741 = vector.broadcast %cst_596 : f32 to vector<4x128xf32>
    %742 = arith.mulf %741, %738 : vector<4x128xf32>
    %743 = arith.mulf %742, %738 : vector<4x128xf32>
    %744 = arith.mulf %743, %738 : vector<4x128xf32>
    %745 = arith.addf %738, %744 : vector<4x128xf32>
    %cst_597 = arith.constant 0.797884583 : f32
    %746 = vector.broadcast %cst_597 : f32 to vector<4x128xf32>
    %747 = arith.mulf %746, %745 : vector<4x128xf32>
    %748 = math.tanh %747 : vector<4x128xf32>
    %cst_598 = arith.constant 1.000000e+00 : f32
    %749 = vector.broadcast %cst_598 : f32 to vector<4x128xf32>
    %750 = arith.addf %749, %748 : vector<4x128xf32>
    %751 = arith.mulf %740, %750 : vector<4x128xf32>
    %cst_599 = arith.constant 0.000000e+00 : f32
    %752 = vector.broadcast %cst_599 : f32 to vector<1x128xf32>
    %c0_600 = arith.constant 0 : index
    %c0_601 = arith.constant 0 : index
    %c0_602 = arith.constant 0 : index
    %753 = vector.load %arg29[%c0_600, %c0_601, %c0_602] : memref<2x6x128xf32, #tpu.memory_space<vmem>>, vector<1x1x128xf32>
    %754 = vector.shape_cast %753 : vector<1x1x128xf32> to vector<1x128xf32>
    %755 = vector.shape_cast %752 : vector<1x128xf32> to vector<1x1x128xf32>
    tpu.vector_store %arg29[%c0_600, %c0_601, %c0_602], %755 {strides = array<i32>} : memref<2x6x128xf32, #tpu.memory_space<vmem>>, vector<1x1x128xf32>,
    %c0_603 = arith.constant 0 : index
    %c1_604 = arith.constant 1 : index
    %c0_605 = arith.constant 0 : index
    %756 = vector.load %arg29[%c0_603, %c1_604, %c0_605] : memref<2x6x128xf32, #tpu.memory_space<vmem>>, vector<1x4x128xf32>
    %757 = vector.shape_cast %756 : vector<1x4x128xf32> to vector<4x128xf32>
    %758 = vector.shape_cast %716 : vector<4x128xf32> to vector<1x4x128xf32>
    tpu.vector_store %arg29[%c0_603, %c1_604, %c0_605], %758 {strides = array<i32>} : memref<2x6x128xf32, #tpu.memory_space<vmem>>, vector<1x4x128xf32>,
    %c0_606 = arith.constant 0 : index
    %c5_607 = arith.constant 5 : index
    %c0_608 = arith.constant 0 : index
    %759 = vector.load %arg29[%c0_606, %c5_607, %c0_608] : memref<2x6x128xf32, #tpu.memory_space<vmem>>, vector<1x1x128xf32>
    %760 = vector.shape_cast %759 : vector<1x1x128xf32> to vector<1x128xf32>
    %761 = vector.shape_cast %752 : vector<1x128xf32> to vector<1x1x128xf32>
    tpu.vector_store %arg29[%c0_606, %c5_607, %c0_608], %761 {strides = array<i32>} : memref<2x6x128xf32, #tpu.memory_space<vmem>>, vector<1x1x128xf32>,
    %c1_609 = arith.constant 1 : index
    %c0_610 = arith.constant 0 : index
    %c0_611 = arith.constant 0 : index
    %762 = vector.load %arg29[%c1_609, %c0_610, %c0_611] : memref<2x6x128xf32, #tpu.memory_space<vmem>>, vector<1x1x128xf32>
    %763 = vector.shape_cast %762 : vector<1x1x128xf32> to vector<1x128xf32>
    %764 = vector.shape_cast %752 : vector<1x128xf32> to vector<1x1x128xf32>
    tpu.vector_store %arg29[%c1_609, %c0_610, %c0_611], %764 {strides = array<i32>} : memref<2x6x128xf32, #tpu.memory_space<vmem>>, vector<1x1x128xf32>,
    %c1_612 = arith.constant 1 : index
    %c1_613 = arith.constant 1 : index
    %c0_614 = arith.constant 0 : index
    %765 = vector.load %arg29[%c1_612, %c1_613, %c0_614] : memref<2x6x128xf32, #tpu.memory_space<vmem>>, vector<1x4x128xf32>
    %766 = vector.shape_cast %765 : vector<1x4x128xf32> to vector<4x128xf32>
    %767 = vector.shape_cast %751 : vector<4x128xf32> to vector<1x4x128xf32>
    tpu.vector_store %arg29[%c1_612, %c1_613, %c0_614], %767 {strides = array<i32>} : memref<2x6x128xf32, #tpu.memory_space<vmem>>, vector<1x4x128xf32>,
    %c1_615 = arith.constant 1 : index
    %c5_616 = arith.constant 5 : index
    %c0_617 = arith.constant 0 : index
    %768 = vector.load %arg29[%c1_615, %c5_616, %c0_617] : memref<2x6x128xf32, #tpu.memory_space<vmem>>, vector<1x1x128xf32>
    %769 = vector.shape_cast %768 : vector<1x1x128xf32> to vector<1x128xf32>
    %770 = vector.shape_cast %752 : vector<1x128xf32> to vector<1x1x128xf32>
    tpu.vector_store %arg29[%c1_615, %c5_616, %c0_617], %770 {strides = array<i32>} : memref<2x6x128xf32, #tpu.memory_space<vmem>>, vector<1x1x128xf32>,
    %cst_618 = arith.constant 0.000000e+00 : f32
    %771 = vector.broadcast %cst_618 : f32 to vector<4x128xf32>
    %c0_619 = arith.constant 0 : index
    %c0_620 = arith.constant 0 : index
    %c0_621 = arith.constant 0 : index
    %772 = vector.load %arg29[%c0_619, %c0_620, %c0_621] : memref<2x6x128xf32, #tpu.memory_space<vmem>>, vector<1x4x128xf32>
    %773 = vector.shape_cast %772 : vector<1x4x128xf32> to vector<4x128xf32>
    %c0_622 = arith.constant 0 : index
    %c0_623 = arith.constant 0 : index
    %c0_624 = arith.constant 0 : index
    %774 = vector.load %arg18[%c0_622, %c0_623, %c0_624] : memref<3x128x128xf32, #tpu.memory_space<vmem>>, vector<1x128x128xf32>
    %775 = vector.shape_cast %774 : vector<1x128x128xf32> to vector<128x128xf32>
    %cst_625 = arith.constant dense<0.000000e+00> : vector<4x128xf32>
    %776 = tpu.matmul %773, %775, %cst_625 {dimension_numbers = #tpu.dot_dimension_numbers<[1], [0], [0], [1], [0, 0, 1, 1], [], []>} : vector<4x128xf32>, vector<128x128xf32>, vector<4x128xf32> -> vector<4x128xf32>
    %777 = arith.addf %771, %776 : vector<4x128xf32>
    %c0_626 = arith.constant 0 : index
    %c1_627 = arith.constant 1 : index
    %c0_628 = arith.constant 0 : index
    %778 = vector.load %arg29[%c0_626, %c1_627, %c0_628] : memref<2x6x128xf32, #tpu.memory_space<vmem>>, vector<1x4x128xf32>
    %779 = vector.shape_cast %778 : vector<1x4x128xf32> to vector<4x128xf32>
    %c1_629 = arith.constant 1 : index
    %c0_630 = arith.constant 0 : index
    %c0_631 = arith.constant 0 : index
    %780 = vector.load %arg18[%c1_629, %c0_630, %c0_631] : memref<3x128x128xf32, #tpu.memory_space<vmem>>, vector<1x128x128xf32>
    %781 = vector.shape_cast %780 : vector<1x128x128xf32> to vector<128x128xf32>
    %cst_632 = arith.constant dense<0.000000e+00> : vector<4x128xf32>
    %782 = tpu.matmul %779, %781, %cst_632 {dimension_numbers = #tpu.dot_dimension_numbers<[1], [0], [0], [1], [0, 0, 1, 1], [], []>} : vector<4x128xf32>, vector<128x128xf32>, vector<4x128xf32> -> vector<4x128xf32>
    %783 = arith.addf %777, %782 : vector<4x128xf32>
    %c0_633 = arith.constant 0 : index
    %c2_634 = arith.constant 2 : index
    %c0_635 = arith.constant 0 : index
    %784 = vector.load %arg29[%c0_633, %c2_634, %c0_635] : memref<2x6x128xf32, #tpu.memory_space<vmem>>, vector<1x4x128xf32>
    %785 = vector.shape_cast %784 : vector<1x4x128xf32> to vector<4x128xf32>
    %c2_636 = arith.constant 2 : index
    %c0_637 = arith.constant 0 : index
    %c0_638 = arith.constant 0 : index
    %786 = vector.load %arg18[%c2_636, %c0_637, %c0_638] : memref<3x128x128xf32, #tpu.memory_space<vmem>>, vector<1x128x128xf32>
    %787 = vector.shape_cast %786 : vector<1x128x128xf32> to vector<128x128xf32>
    %cst_639 = arith.constant dense<0.000000e+00> : vector<4x128xf32>
    %788 = tpu.matmul %785, %787, %cst_639 {dimension_numbers = #tpu.dot_dimension_numbers<[1], [0], [0], [1], [0, 0, 1, 1], [], []>} : vector<4x128xf32>, vector<128x128xf32>, vector<4x128xf32> -> vector<4x128xf32>
    %789 = arith.addf %783, %788 : vector<4x128xf32>
    %c0_640 = arith.constant 0 : index
    %c0_641 = arith.constant 0 : index
    %790 = vector.load %arg19[%c0_640, %c0_641] : memref<1x128xf32, #tpu.memory_space<vmem>>, vector<1x128xf32>
    %791 = vector.broadcast %790 : vector<1x128xf32> to vector<4x128xf32>
    %792 = arith.addf %789, %791 : vector<4x128xf32>
    %cst_642 = arith.constant 5.000000e-01 : f32
    %793 = vector.broadcast %cst_642 : f32 to vector<4x128xf32>
    %794 = arith.mulf %793, %792 : vector<4x128xf32>
    %cst_643 = arith.constant 4.471500e-02 : f32
    %795 = vector.broadcast %cst_643 : f32 to vector<4x128xf32>
    %796 = arith.mulf %795, %792 : vector<4x128xf32>
    %797 = arith.mulf %796, %792 : vector<4x128xf32>
    %798 = arith.mulf %797, %792 : vector<4x128xf32>
    %799 = arith.addf %792, %798 : vector<4x128xf32>
    %cst_644 = arith.constant 0.797884583 : f32
    %800 = vector.broadcast %cst_644 : f32 to vector<4x128xf32>
    %801 = arith.mulf %800, %799 : vector<4x128xf32>
    %802 = math.tanh %801 : vector<4x128xf32>
    %cst_645 = arith.constant 1.000000e+00 : f32
    %803 = vector.broadcast %cst_645 : f32 to vector<4x128xf32>
    %804 = arith.addf %803, %802 : vector<4x128xf32>
    %805 = arith.mulf %794, %804 : vector<4x128xf32>
    %cst_646 = arith.constant 0.000000e+00 : f32
    %806 = vector.broadcast %cst_646 : f32 to vector<4x128xf32>
    %c1_647 = arith.constant 1 : index
    %c0_648 = arith.constant 0 : index
    %c0_649 = arith.constant 0 : index
    %807 = vector.load %arg29[%c1_647, %c0_648, %c0_649] : memref<2x6x128xf32, #tpu.memory_space<vmem>>, vector<1x4x128xf32>
    %808 = vector.shape_cast %807 : vector<1x4x128xf32> to vector<4x128xf32>
    %c0_650 = arith.constant 0 : index
    %c0_651 = arith.constant 0 : index
    %c0_652 = arith.constant 0 : index
    %809 = vector.load %arg18[%c0_650, %c0_651, %c0_652] : memref<3x128x128xf32, #tpu.memory_space<vmem>>, vector<1x128x128xf32>
    %810 = vector.shape_cast %809 : vector<1x128x128xf32> to vector<128x128xf32>
    %cst_653 = arith.constant dense<0.000000e+00> : vector<4x128xf32>
    %811 = tpu.matmul %808, %810, %cst_653 {dimension_numbers = #tpu.dot_dimension_numbers<[1], [0], [0], [1], [0, 0, 1, 1], [], []>} : vector<4x128xf32>, vector<128x128xf32>, vector<4x128xf32> -> vector<4x128xf32>
    %812 = arith.addf %806, %811 : vector<4x128xf32>
    %c1_654 = arith.constant 1 : index
    %c1_655 = arith.constant 1 : index
    %c0_656 = arith.constant 0 : index
    %813 = vector.load %arg29[%c1_654, %c1_655, %c0_656] : memref<2x6x128xf32, #tpu.memory_space<vmem>>, vector<1x4x128xf32>
    %814 = vector.shape_cast %813 : vector<1x4x128xf32> to vector<4x128xf32>
    %c1_657 = arith.constant 1 : index
    %c0_658 = arith.constant 0 : index
    %c0_659 = arith.constant 0 : index
    %815 = vector.load %arg18[%c1_657, %c0_658, %c0_659] : memref<3x128x128xf32, #tpu.memory_space<vmem>>, vector<1x128x128xf32>
    %816 = vector.shape_cast %815 : vector<1x128x128xf32> to vector<128x128xf32>
    %cst_660 = arith.constant dense<0.000000e+00> : vector<4x128xf32>
    %817 = tpu.matmul %814, %816, %cst_660 {dimension_numbers = #tpu.dot_dimension_numbers<[1], [0], [0], [1], [0, 0, 1, 1], [], []>} : vector<4x128xf32>, vector<128x128xf32>, vector<4x128xf32> -> vector<4x128xf32>
    %818 = arith.addf %812, %817 : vector<4x128xf32>
    %c1_661 = arith.constant 1 : index
    %c2_662 = arith.constant 2 : index
    %c0_663 = arith.constant 0 : index
    %819 = vector.load %arg29[%c1_661, %c2_662, %c0_663] : memref<2x6x128xf32, #tpu.memory_space<vmem>>, vector<1x4x128xf32>
    %820 = vector.shape_cast %819 : vector<1x4x128xf32> to vector<4x128xf32>
    %c2_664 = arith.constant 2 : index
    %c0_665 = arith.constant 0 : index
    %c0_666 = arith.constant 0 : index
    %821 = vector.load %arg18[%c2_664, %c0_665, %c0_666] : memref<3x128x128xf32, #tpu.memory_space<vmem>>, vector<1x128x128xf32>
    %822 = vector.shape_cast %821 : vector<1x128x128xf32> to vector<128x128xf32>
    %cst_667 = arith.constant dense<0.000000e+00> : vector<4x128xf32>
    %823 = tpu.matmul %820, %822, %cst_667 {dimension_numbers = #tpu.dot_dimension_numbers<[1], [0], [0], [1], [0, 0, 1, 1], [], []>} : vector<4x128xf32>, vector<128x128xf32>, vector<4x128xf32> -> vector<4x128xf32>
    %824 = arith.addf %818, %823 : vector<4x128xf32>
    %c0_668 = arith.constant 0 : index
    %c0_669 = arith.constant 0 : index
    %825 = vector.load %arg19[%c0_668, %c0_669] : memref<1x128xf32, #tpu.memory_space<vmem>>, vector<1x128xf32>
    %826 = vector.broadcast %825 : vector<1x128xf32> to vector<4x128xf32>
    %827 = arith.addf %824, %826 : vector<4x128xf32>
    %cst_670 = arith.constant 5.000000e-01 : f32
    %828 = vector.broadcast %cst_670 : f32 to vector<4x128xf32>
    %829 = arith.mulf %828, %827 : vector<4x128xf32>
    %cst_671 = arith.constant 4.471500e-02 : f32
    %830 = vector.broadcast %cst_671 : f32 to vector<4x128xf32>
    %831 = arith.mulf %830, %827 : vector<4x128xf32>
    %832 = arith.mulf %831, %827 : vector<4x128xf32>
    %833 = arith.mulf %832, %827 : vector<4x128xf32>
    %834 = arith.addf %827, %833 : vector<4x128xf32>
    %cst_672 = arith.constant 0.797884583 : f32
    %835 = vector.broadcast %cst_672 : f32 to vector<4x128xf32>
    %836 = arith.mulf %835, %834 : vector<4x128xf32>
    %837 = math.tanh %836 : vector<4x128xf32>
    %cst_673 = arith.constant 1.000000e+00 : f32
    %838 = vector.broadcast %cst_673 : f32 to vector<4x128xf32>
    %839 = arith.addf %838, %837 : vector<4x128xf32>
    %840 = arith.mulf %829, %839 : vector<4x128xf32>
    %c0_674 = arith.constant 0 : index
    %c0_675 = arith.constant 0 : index
    %c0_676 = arith.constant 0 : index
    %841 = vector.load %arg20[%c0_674, %c0_675, %c0_676] : memref<2x4x128xf32, #tpu.memory_space<vmem>>, vector<1x4x128xf32>
    %842 = vector.shape_cast %841 : vector<1x4x128xf32> to vector<4x128xf32>
    %843 = vector.shape_cast %805 : vector<4x128xf32> to vector<1x4x128xf32>
    tpu.vector_store %arg20[%c0_674, %c0_675, %c0_676], %843 {strides = array<i32>} : memref<2x4x128xf32, #tpu.memory_space<vmem>>, vector<1x4x128xf32>,
    %c1_677 = arith.constant 1 : index
    %c0_678 = arith.constant 0 : index
    %c0_679 = arith.constant 0 : index
    %844 = vector.load %arg20[%c1_677, %c0_678, %c0_679] : memref<2x4x128xf32, #tpu.memory_space<vmem>>, vector<1x4x128xf32>
    %845 = vector.shape_cast %844 : vector<1x4x128xf32> to vector<4x128xf32>
    %846 = vector.shape_cast %840 : vector<4x128xf32> to vector<1x4x128xf32>
    tpu.vector_store %arg20[%c1_677, %c0_678, %c0_679], %846 {strides = array<i32>} : memref<2x4x128xf32, #tpu.memory_space<vmem>>, vector<1x4x128xf32>,
    return
  }
  func.func @transform_0(%arg0: i32) -> (i32, i32, i32) {
    %c0_i32 = arith.constant 0 : i32
    %c0_i32_0 = arith.constant 0 : i32
    %c0_i32_1 = arith.constant 0 : i32
    return %arg0, %c0_i32, %c0_i32_0 : i32, i32, i32
  }
  func.func @transform_1(%arg0: i32) -> (i32, i32, i32) {
    %c0_i32 = arith.constant 0 : i32
    %c0_i32_0 = arith.constant 0 : i32
    %c0_i32_1 = arith.constant 0 : i32
    %c0_i32_2 = arith.constant 0 : i32
    return %c0_i32, %c0_i32_0, %c0_i32_1 : i32, i32, i32
  }
  func.func @transform_2(%arg0: i32) -> (i32, i32) {
    %c0_i32 = arith.constant 0 : i32
    %c0_i32_0 = arith.constant 0 : i32
    %c0_i32_1 = arith.constant 0 : i32
    return %c0_i32, %c0_i32_0 : i32, i32
  }
  func.func @transform_3(%arg0: i32) -> (i32, i32, i32) {
    %c0_i32 = arith.constant 0 : i32
    %c0_i32_0 = arith.constant 0 : i32
    %c0_i32_1 = arith.constant 0 : i32
    %c0_i32_2 = arith.constant 0 : i32
    return %c0_i32, %c0_i32_0, %c0_i32_1 : i32, i32, i32
  }
  func.func @transform_4(%arg0: i32) -> (i32, i32) {
    %c0_i32 = arith.constant 0 : i32
    %c0_i32_0 = arith.constant 0 : i32
    %c0_i32_1 = arith.constant 0 : i32
    return %c0_i32, %c0_i32_0 : i32, i32
  }
  func.func @transform_5(%arg0: i32) -> (i32, i32, i32) {
    %c0_i32 = arith.constant 0 : i32
    %c0_i32_0 = arith.constant 0 : i32
    %c0_i32_1 = arith.constant 0 : i32
    %c0_i32_2 = arith.constant 0 : i32
    return %c0_i32, %c0_i32_0, %c0_i32_1 : i32, i32, i32
  }
  func.func @transform_6(%arg0: i32) -> (i32, i32) {
    %c0_i32 = arith.constant 0 : i32
    %c0_i32_0 = arith.constant 0 : i32
    %c0_i32_1 = arith.constant 0 : i32
    return %c0_i32, %c0_i32_0 : i32, i32
  }
  func.func @transform_7(%arg0: i32) -> (i32, i32, i32) {
    %c0_i32 = arith.constant 0 : i32
    %c0_i32_0 = arith.constant 0 : i32
    %c0_i32_1 = arith.constant 0 : i32
    %c0_i32_2 = arith.constant 0 : i32
    return %c0_i32, %c0_i32_0, %c0_i32_1 : i32, i32, i32
  }
  func.func @transform_8(%arg0: i32) -> (i32, i32) {
    %c0_i32 = arith.constant 0 : i32
    %c0_i32_0 = arith.constant 0 : i32
    %c0_i32_1 = arith.constant 0 : i32
    return %c0_i32, %c0_i32_0 : i32, i32
  }
  func.func @transform_9(%arg0: i32) -> (i32, i32, i32) {
    %c0_i32 = arith.constant 0 : i32
    %c0_i32_0 = arith.constant 0 : i32
    %c0_i32_1 = arith.constant 0 : i32
    %c0_i32_2 = arith.constant 0 : i32
    return %c0_i32, %c0_i32_0, %c0_i32_1 : i32, i32, i32
  }
  func.func @transform_10(%arg0: i32) -> (i32, i32) {
    %c0_i32 = arith.constant 0 : i32
    %c0_i32_0 = arith.constant 0 : i32
    %c0_i32_1 = arith.constant 0 : i32
    return %c0_i32, %c0_i32_0 : i32, i32
  }
  func.func @transform_11(%arg0: i32) -> (i32, i32, i32) {
    %c0_i32 = arith.constant 0 : i32
    %c0_i32_0 = arith.constant 0 : i32
    %c0_i32_1 = arith.constant 0 : i32
    %c0_i32_2 = arith.constant 0 : i32
    return %c0_i32, %c0_i32_0, %c0_i32_1 : i32, i32, i32
  }
  func.func @transform_12(%arg0: i32) -> (i32, i32) {
    %c0_i32 = arith.constant 0 : i32
    %c0_i32_0 = arith.constant 0 : i32
    %c0_i32_1 = arith.constant 0 : i32
    return %c0_i32, %c0_i32_0 : i32, i32
  }
  func.func @transform_13(%arg0: i32) -> (i32, i32, i32) {
    %c0_i32 = arith.constant 0 : i32
    %c0_i32_0 = arith.constant 0 : i32
    %c0_i32_1 = arith.constant 0 : i32
    %c0_i32_2 = arith.constant 0 : i32
    return %c0_i32, %c0_i32_0, %c0_i32_1 : i32, i32, i32
  }
  func.func @transform_14(%arg0: i32) -> (i32, i32) {
    %c0_i32 = arith.constant 0 : i32
    %c0_i32_0 = arith.constant 0 : i32
    %c0_i32_1 = arith.constant 0 : i32
    return %c0_i32, %c0_i32_0 : i32, i32
  }
  func.func @transform_15(%arg0: i32) -> (i32, i32, i32) {
    %c0_i32 = arith.constant 0 : i32
    %c0_i32_0 = arith.constant 0 : i32
    %c0_i32_1 = arith.constant 0 : i32
    %c0_i32_2 = arith.constant 0 : i32
    return %c0_i32, %c0_i32_0, %c0_i32_1 : i32, i32, i32
  }
  func.func @transform_16(%arg0: i32) -> (i32, i32) {
    %c0_i32 = arith.constant 0 : i32
    %c0_i32_0 = arith.constant 0 : i32
    %c0_i32_1 = arith.constant 0 : i32
    return %c0_i32, %c0_i32_0 : i32, i32
  }
  func.func @transform_17(%arg0: i32) -> (i32, i32, i32) {
    %c0_i32 = arith.constant 0 : i32
    %c0_i32_0 = arith.constant 0 : i32
    %c0_i32_1 = arith.constant 0 : i32
    %c0_i32_2 = arith.constant 0 : i32
    return %c0_i32, %c0_i32_0, %c0_i32_1 : i32, i32, i32
  }
  func.func @transform_18(%arg0: i32) -> (i32, i32) {
    %c0_i32 = arith.constant 0 : i32
    %c0_i32_0 = arith.constant 0 : i32
    %c0_i32_1 = arith.constant 0 : i32
    return %c0_i32, %c0_i32_0 : i32, i32
  }
  func.func @transform_19(%arg0: i32) -> (i32, i32, i32) {
    %c0_i32 = arith.constant 0 : i32
    %c0_i32_0 = arith.constant 0 : i32
    %c0_i32_1 = arith.constant 0 : i32
    return %arg0, %c0_i32, %c0_i32_0 : i32, i32, i32
  }
}

</mosaic_0001>

<llo_original>
// kernel: forward.1
$region0: #{forward.1}
  #allocation0 [shape = 'u32[]', space=smem, size = 0x4, offset = 0x4, fixed_abs, tag = 'smem constant byte address 0x4 - core index']
  #allocation1 [shape = 'u32[72,128]{1,0:T(1,128)}', space=vmem, size = 0x9000, scoped, tag = 'internal scratch']
  #allocation2 [shape = 'f32[2,18,64]{2,1,0:T(8,128)}', space=vmem, size = 0x6000, scoped, tag = 'scratch operand']
  #allocation3 [shape = 'f32[2,18,128]{2,1,0:T(8,128)}', space=vmem, size = 0x6000, scoped, tag = 'scratch operand']
  #allocation4 [shape = 'f32[2,18,128]{2,1,0:T(8,128)}', space=vmem, size = 0x6000, scoped, tag = 'scratch operand']
  #allocation5 [shape = 'f32[2,10,64]{2,1,0:T(8,128)}', space=vmem, size = 0x4000, scoped, tag = 'scratch operand']
  #allocation6 [shape = 'f32[2,10,128]{2,1,0:T(8,128)}', space=vmem, size = 0x4000, scoped, tag = 'scratch operand']
  #allocation7 [shape = 'f32[2,10,128]{2,1,0:T(8,128)}', space=vmem, size = 0x4000, scoped, tag = 'scratch operand']
  #allocation8 [shape = 'f32[2,6,64]{2,1,0:T(8,128)}', space=vmem, size = 0x2000, scoped, tag = 'scratch operand']
  #allocation9 [shape = 'f32[2,6,128]{2,1,0:T(8,128)}', space=vmem, size = 0x2000, scoped, tag = 'scratch operand']
  #allocation10 [shape = 'f32[2,6,128]{2,1,0:T(8,128)}', space=vmem, size = 0x2000, scoped, tag = 'scratch operand']
  %s0 = inlined_call_operand.vmem [shape: f32[2,16,64], index: 0, kind: input, shape index: {}]
  %s1 = inlined_call_operand.hbm [shape: f32[3,64,128], index: 1, kind: input, shape index: {}]
  %s2 = inlined_call_operand.vmem [shape: f32[1,128], index: 2, kind: input, shape index: {}]
  %s3 = inlined_call_operand.vmem [shape: f32[3,128,128], index: 3, kind: input, shape index: {}]
  %s4 = inlined_call_operand.vmem [shape: f32[1,128], index: 4, kind: input, shape index: {}]
  %s5 = inlined_call_operand.hbm [shape: f32[3,128,128], index: 5, kind: input, shape index: {}]
  %s6 = inlined_call_operand.vmem [shape: f32[1,128], index: 6, kind: input, shape index: {}]
  %s7 = inlined_call_operand.hbm [shape: f32[3,64,128], index: 7, kind: input, shape index: {}]
  %s8 = inlined_call_operand.vmem [shape: f32[1,128], index: 8, kind: input, shape index: {}]
  %s9 = inlined_call_operand.hbm [shape: f32[3,128,128], index: 9, kind: input, shape index: {}]
  %s10 = inlined_call_operand.vmem [shape: f32[1,128], index: 10, kind: input, shape index: {}]
  %s11 = inlined_call_operand.hbm [shape: f32[3,128,128], index: 11, kind: input, shape index: {}]
  %s12 = inlined_call_operand.vmem [shape: f32[1,128], index: 12, kind: input, shape index: {}]
  %s13 = inlined_call_operand.hbm [shape: f32[3,64,128], index: 13, kind: input, shape index: {}]
  %s14 = inlined_call_operand.vmem [shape: f32[1,128], index: 14, kind: input, shape index: {}]
  %s15 = inlined_call_operand.hbm [shape: f32[3,128,128], index: 15, kind: input, shape index: {}]
  %s16 = inlined_call_operand.vmem [shape: f32[1,128], index: 16, kind: input, shape index: {}]
  %s17 = inlined_call_operand.hbm [shape: f32[3,128,128], index: 17, kind: input, shape index: {}]
  %s18 = inlined_call_operand.vmem [shape: f32[1,128], index: 18, kind: input, shape index: {}]
  %s19 = inlined_call_operand.vmem [shape: f32[2,4,128], index: 19, kind: output, shape index: {}]
  %s20 = sld [smem:[#allocation0]]
  $region118: #{forward.1} parent=0
    _
  %s22 = ssub.s32 1, %s20
  %s23 = scalar_select 0, %s22, %s20
  $region1: #{forward.1} parent=0
    #allocation11 [shape = 'u8[98304]{0}', space=vmem, size = 0x18000, scoped, tag = 'input window, operand 1, single buffered']
    #allocation12 [shape = 's32[1]{0}', space=sflag, size = 0x4, scoped, tag = 'scoped memory for forward.1']
    #allocation13 [shape = 'u8[196608]{0}', space=vmem, size = 0x30000, scoped, tag = 'input window, operand 5, single buffered']
    #allocation14 [shape = 's32[1]{0}', space=sflag, size = 0x4, scoped, tag = 'scoped memory for forward.1']
    #allocation15 [shape = 'u8[98304]{0}', space=vmem, size = 0x18000, scoped, tag = 'input window, operand 7, single buffered']
    #allocation16 [shape = 'u8[196608]{0}', space=vmem, size = 0x30000, scoped, tag = 'input window, operand 9, single buffered']
    #allocation17 [shape = 's32[1]{0}', space=sflag, size = 0x4, scoped, tag = 'scoped memory for forward.1']
    #allocation18 [shape = 'u8[196608]{0}', space=vmem, size = 0x30000, scoped, tag = 'input window, operand 11, single buffered']
    #allocation19 [shape = 'u8[98304]{0}', space=vmem, size = 0x18000, scoped, tag = 'input window, operand 13, single buffered']
    #allocation20 [shape = 's32[1]{0}', space=sflag, size = 0x4, scoped, tag = 'scoped memory for forward.1']
    #allocation21 [shape = 'u8[196608]{0}', space=vmem, size = 0x30000, scoped, tag = 'input window, operand 15, single buffered']
    #allocation22 [shape = 'u8[196608]{0}', space=vmem, size = 0x30000, scoped, tag = 'input window, operand 17, single buffered']
    #allocation23 [shape = 's32[1]{0}', space=sflag, size = 0x4, scoped, tag = 'scoped memory for forward.1']
    %24 = vsyncpa [#allocation12], 0
    %25 = vsyncpa [#allocation14], 0
    %26 = vsyncpa [#allocation17], 0
    %27 = vsyncpa [#allocation20], 0
    %28 = vsyncpa [#allocation23], 0
    // Predicated region
    $region2: #{forward.1} parent=1 // pred_check
      _
    $region3: #{forward.1} parent=1 // pred_check_branch
      %30 = sbr.rel (0) target = $region5
    $region4: #{forward.1} parent=1 // pred_region
      _
    $region5: #{forward.1} parent=1 // pred_fallthru
      _
    // Predicated region
    $region6: #{forward.1} parent=1 // pred_check
      _
    $region7: #{forward.1} parent=1 // pred_check_branch
      %32 = sbr.rel (0) target = $region9
    $region8: #{forward.1} parent=1 // pred_region
      %34 = vsyncadd [#allocation12], 0
      %s35 = sshll.u32 %s1, 4
      %s36 = int_to_ptr.hbm [resolvable:$true] %s35
      %s37 = sshll.u32 [#allocation11], 4
      %s38 = int_to_ptr.vmem [resolvable:$true] %s37
      %43 = dma.hbm_to_vmem [thread:$0]  %s36, 3072, %s38, [#allocation12], 128, 128, 8
    $region9: #{forward.1} parent=1 // pred_fallthru
      _
    // Predicated region
    $region10: #{forward.1} parent=1 // pred_check
      _
    $region11: #{forward.1} parent=1 // pred_check_branch
      %45 = sbr.rel (0) target = $region13
    $region12: #{forward.1} parent=1 // pred_region
      _
    $region13: #{forward.1} parent=1 // pred_fallthru
      _
    // Predicated region
    $region14: #{forward.1} parent=1 // pred_check
      _
    $region15: #{forward.1} parent=1 // pred_check_branch
      %47 = sbr.rel (0) target = $region17
    $region16: #{forward.1} parent=1 // pred_region
      _
    $region17: #{forward.1} parent=1 // pred_fallthru
      _
    // Predicated region
    $region18: #{forward.1} parent=1 // pred_check
      _
    $region19: #{forward.1} parent=1 // pred_check_branch
      %49 = sbr.rel (0) target = $region21
    $region20: #{forward.1} parent=1 // pred_region
      _
    $region21: #{forward.1} parent=1 // pred_fallthru
      _
    // Predicated region
    $region22: #{forward.1} parent=1 // pred_check
      _
    $region23: #{forward.1} parent=1 // pred_check_branch
      %51 = sbr.rel (0) target = $region25
    $region24: #{forward.1} parent=1 // pred_region
      %53 = vsyncadd [#allocation14], 0
      %s54 = sshll.u32 %s5, 4
      %s55 = int_to_ptr.hbm [resolvable:$true] %s54
      %s56 = sshll.u32 [#allocation13], 4
      %s57 = int_to_ptr.vmem [resolvable:$true] %s56
      %62 = dma.hbm_to_vmem [thread:$0]  %s55, 6144, %s57, [#allocation14], 128, 128, 8
    $region25: #{forward.1} parent=1 // pred_fallthru
      _
    // Predicated region
    $region26: #{forward.1} parent=1 // pred_check
      _
    $region27: #{forward.1} parent=1 // pred_check_branch
      %64 = sbr.rel (0) target = $region29
    $region28: #{forward.1} parent=1 // pred_region
      _
    $region29: #{forward.1} parent=1 // pred_fallthru
      _
    // Predicated region
    $region30: #{forward.1} parent=1 // pred_check
      _
    $region31: #{forward.1} parent=1 // pred_check_branch
      %66 = sbr.rel (0) target = $region33
    $region32: #{forward.1} parent=1 // pred_region
      %68 = vsyncadd [#allocation14], 0
      %s69 = sshll.u32 %s7, 4
      %s70 = int_to_ptr.hbm [resolvable:$true] %s69
      %s71 = sshll.u32 [#allocation15], 4
      %s72 = int_to_ptr.vmem [resolvable:$true] %s71
      %77 = dma.hbm_to_vmem [thread:$0]  %s70, 3072, %s72, [#allocation14], 128, 128, 8
    $region33: #{forward.1} parent=1 // pred_fallthru
      _
    // Predicated region
    $region34: #{forward.1} parent=1 // pred_check
      _
    $region35: #{forward.1} parent=1 // pred_check_branch
      %79 = sbr.rel (0) target = $region37
    $region36: #{forward.1} parent=1 // pred_region
      _
    $region37: #{forward.1} parent=1 // pred_fallthru
      _
    // Predicated region
    $region38: #{forward.1} parent=1 // pred_check
      _
    $region39: #{forward.1} parent=1 // pred_check_branch
      %81 = sbr.rel (0) target = $region41
    $region40: #{forward.1} parent=1 // pred_region
      %83 = vsyncadd [#allocation17], 0
      %s84 = sshll.u32 %s9, 4
      %s85 = int_to_ptr.hbm [resolvable:$true] %s84
      %s86 = sshll.u32 [#allocation16], 4
      %s87 = int_to_ptr.vmem [resolvable:$true] %s86
      %92 = dma.hbm_to_vmem [thread:$0]  %s85, 6144, %s87, [#allocation17], 128, 128, 8
    $region41: #{forward.1} parent=1 // pred_fallthru
      _
    // Predicated region
    $region42: #{forward.1} parent=1 // pred_check
      _
    $region43: #{forward.1} parent=1 // pred_check_branch
      %94 = sbr.rel (0) target = $region45
    $region44: #{forward.1} parent=1 // pred_region
      _
    $region45: #{forward.1} parent=1 // pred_fallthru
      _
    // Predicated region
    $region46: #{forward.1} parent=1 // pred_check
      _
    $region47: #{forward.1} parent=1 // pred_check_branch
      %96 = sbr.rel (0) target = $region49
    $region48: #{forward.1} parent=1 // pred_region
      %98 = vsyncadd [#allocation17], 0
      %s99 = sshll.u32 %s11, 4
      %s100 = int_to_ptr.hbm [resolvable:$true] %s99
      %s101 = sshll.u32 [#allocation18], 4
      %s102 = int_to_ptr.vmem [resolvable:$true] %s101
      %107 = dma.hbm_to_vmem [thread:$0]  %s100, 6144, %s102, [#allocation17], 128, 128, 8
    $region49: #{forward.1} parent=1 // pred_fallthru
      _
    // Predicated region
    $region50: #{forward.1} parent=1 // pred_check
      _
    $region51: #{forward.1} parent=1 // pred_check_branch
      %109 = sbr.rel (0) target = $region53
    $region52: #{forward.1} parent=1 // pred_region
      _
    $region53: #{forward.1} parent=1 // pred_fallthru
      _
    // Predicated region
    $region54: #{forward.1} parent=1 // pred_check
      _
    $region55: #{forward.1} parent=1 // pred_check_branch
      %111 = sbr.rel (0) target = $region57
    $region56: #{forward.1} parent=1 // pred_region
      %113 = vsyncadd [#allocation20], 0
      %s114 = sshll.u32 %s13, 4
      %s115 = int_to_ptr.hbm [resolvable:$true] %s114
      %s116 = sshll.u32 [#allocation19], 4
      %s117 = int_to_ptr.vmem [resolvable:$true] %s116
      %122 = dma.hbm_to_vmem [thread:$0]  %s115, 3072, %s117, [#allocation20], 128, 128, 8
    $region57: #{forward.1} parent=1 // pred_fallthru
      _
    // Predicated region
    $region58: #{forward.1} parent=1 // pred_check
      _
    $region59: #{forward.1} parent=1 // pred_check_branch
      %124 = sbr.rel (0) target = $region61
    $region60: #{forward.1} parent=1 // pred_region
      _
    $region61: #{forward.1} parent=1 // pred_fallthru
      _
    // Predicated region
    $region62: #{forward.1} parent=1 // pred_check
      _
    $region63: #{forward.1} parent=1 // pred_check_branch
      %126 = sbr.rel (0) target = $region65
    $region64: #{forward.1} parent=1 // pred_region
      %128 = vsyncadd [#allocation20], 0
      %s129 = sshll.u32 %s15, 4
      %s130 = int_to_ptr.hbm [resolvable:$true] %s129
      %s131 = sshll.u32 [#allocation21], 4
      %s132 = int_to_ptr.vmem [resolvable:$true] %s131
      %137 = dma.hbm_to_vmem [thread:$0]  %s130, 6144, %s132, [#allocation20], 128, 128, 8
    $region65: #{forward.1} parent=1 // pred_fallthru
      _
    // Predicated region
    $region66: #{forward.1} parent=1 // pred_check
      _
    $region67: #{forward.1} parent=1 // pred_check_branch
      %139 = sbr.rel (0) target = $region69
    $region68: #{forward.1} parent=1 // pred_region
      _
    $region69: #{forward.1} parent=1 // pred_fallthru
      _
    // Predicated region
    $region70: #{forward.1} parent=1 // pred_check
      _
    $region71: #{forward.1} parent=1 // pred_check_branch
      %141 = sbr.rel (0) target = $region73
    $region72: #{forward.1} parent=1 // pred_region
      %143 = vsyncadd [#allocation23], 0
      %s144 = sshll.u32 %s17, 4
      %s145 = int_to_ptr.hbm [resolvable:$true] %s144
      %s146 = sshll.u32 [#allocation22], 4
      %s147 = int_to_ptr.vmem [resolvable:$true] %s146
      %152 = dma.hbm_to_vmem [thread:$0]  %s145, 6144, %s147, [#allocation23], 128, 128, 8
    $region73: #{forward.1} parent=1 // pred_fallthru
      _
    // Predicated region
    $region74: #{forward.1} parent=1 // pred_check
      _
    $region75: #{forward.1} parent=1 // pred_check_branch
      %154 = sbr.rel (0) target = $region77
    $region76: #{forward.1} parent=1 // pred_region
      _
    $region77: #{forward.1} parent=1 // pred_fallthru
      _
    // Predicated region
    $region78: #{forward.1} parent=1 // pred_check
      _
    $region79: #{forward.1} parent=1 // pred_check_branch
      %156 = sbr.rel (0) target = $region81
    $region80: #{forward.1} parent=1 // pred_region
      %158 = dma.done [#allocation12], 3072
    $region81: #{forward.1} parent=1 // pred_fallthru
      _
    // Predicated region
    $region82: #{forward.1} parent=1 // pred_check
      _
    $region83: #{forward.1} parent=1 // pred_check_branch
      %160 = sbr.rel (0) target = $region85
    $region84: #{forward.1} parent=1 // pred_region
      %162 = dma.done [#allocation14], 6144
    $region85: #{forward.1} parent=1 // pred_fallthru
      _
    // Predicated region
    $region86: #{forward.1} parent=1 // pred_check
      _
    $region87: #{forward.1} parent=1 // pred_check_branch
      %164 = sbr.rel (0) target = $region89
    $region88: #{forward.1} parent=1 // pred_region
      %166 = dma.done [#allocation14], 3072
    $region89: #{forward.1} parent=1 // pred_fallthru
      _
    // Predicated region
    $region90: #{forward.1} parent=1 // pred_check
      _
    $region91: #{forward.1} parent=1 // pred_check_branch
      %168 = sbr.rel (0) target = $region93
    $region92: #{forward.1} parent=1 // pred_region
      %170 = dma.done [#allocation17], 6144
    $region93: #{forward.1} parent=1 // pred_fallthru
      _
    // Predicated region
    $region94: #{forward.1} parent=1 // pred_check
      _
    $region95: #{forward.1} parent=1 // pred_check_branch
      %172 = sbr.rel (0) target = $region97
    $region96: #{forward.1} parent=1 // pred_region
      %174 = dma.done [#allocation17], 6144
    $region97: #{forward.1} parent=1 // pred_fallthru
      _
    // Predicated region
    $region98: #{forward.1} parent=1 // pred_check
      _
    $region99: #{forward.1} parent=1 // pred_check_branch
      %176 = sbr.rel (0) target = $region101
    $region100: #{forward.1} parent=1 // pred_region
      %178 = dma.done [#allocation20], 3072
    $region101: #{forward.1} parent=1 // pred_fallthru
      _
    // Predicated region
    $region102: #{forward.1} parent=1 // pred_check
      _
    $region103: #{forward.1} parent=1 // pred_check_branch
      %180 = sbr.rel (0) target = $region105
    $region104: #{forward.1} parent=1 // pred_region
      %182 = dma.done [#allocation20], 6144
    $region105: #{forward.1} parent=1 // pred_fallthru
      _
    // Predicated region
    $region106: #{forward.1} parent=1 // pred_check
      _
    $region107: #{forward.1} parent=1 // pred_check_branch
      %184 = sbr.rel (0) target = $region109
    $region108: #{forward.1} parent=1 // pred_region
      %186 = dma.done [#allocation23], 6144
    $region109: #{forward.1} parent=1 // pred_fallthru
      _
    %v187 = vld [vmem:[%s0] sm:$0xff]
    %v188 = vld [vmem:[%s0 + $0x8] sm:$0xff]
    %s189 = scalar_lea.vmem %s0, 16
    %v190 = vld [vmem:[%s189] sm:$0xff]
    %v191 = vld [vmem:[%s189 + $0x8] sm:$0xff]
    %vm192 = vcmask 516096
    %193 = vst.msk [vmem:[#allocation2] sm:$0x1] %vm192, 0.0
    %vm194 = vcmask 523264
    %195 = vst.msk [vmem:[#allocation2 + $0x1] sm:$0xff] %vm194, %v187
    %196 = vst.msk [vmem:[#allocation2 + $0x9] sm:$0xff] %vm194, %v188
    %197 = vst.msk [vmem:[#allocation2 + $0x11] sm:$0x1] %vm192, 0.0
    %s198 = scalar_lea.vmem [#allocation2], 24
    %199 = vst.msk [vmem:[%s198] sm:$0x1] %vm192, 0.0
    %200 = vst.msk [vmem:[%s198 + $0x1] sm:$0xff] %vm194, %v190
    %201 = vst.msk [vmem:[%s198 + $0x9] sm:$0xff] %vm194, %v191
    %202 = vst.msk [vmem:[%s198 + $0x11] sm:$0x1] %vm192, 0.0
    %v203 = vld [vmem:[#allocation2] sm:$0xff]
    %v204 = vld [vmem:[#allocation2 + $0x8] sm:$0xff]
    %v205 = vld [vmem:[#allocation11] sm:$0xff]
    %v206 = vld [vmem:[#allocation11 + $0x8] sm:$0xff]
    %v207 = vld [vmem:[#allocation11 + $0x10] sm:$0xff]
    %v208 = vld [vmem:[#allocation11 + $0x18] sm:$0xff]
    %v209 = vld [vmem:[#allocation11 + $0x20] sm:$0xff]
    %v210 = vld [vmem:[#allocation11 + $0x28] sm:$0xff]
    %v211 = vld [vmem:[#allocation11 + $0x30] sm:$0xff]
    %v212 = vld [vmem:[#allocation11 + $0x38] sm:$0xff]
    %v213 = vld [vmem:[#allocation2 + $0x1] sm:$0xff]
    %v214 = vld [vmem:[#allocation2 + $0x9] sm:$0xff]
    %s215 = scalar_lea.vmem [#allocation11], 64
    %v216 = vld [vmem:[%s215] sm:$0xff]
    %v217 = vld [vmem:[%s215 + $0x8] sm:$0xff]
    %v218 = vld [vmem:[%s215 + $0x10] sm:$0xff]
    %v219 = vld [vmem:[%s215 + $0x18] sm:$0xff]
    %v220 = vld [vmem:[%s215 + $0x20] sm:$0xff]
    %v221 = vld [vmem:[%s215 + $0x28] sm:$0xff]
    %v222 = vld [vmem:[%s215 + $0x30] sm:$0xff]
    %v223 = vld [vmem:[%s215 + $0x38] sm:$0xff]
    %v225 = vsel %vm194, %v213, 0
    %v228 = vsel %vm194, %v214, 0
    %230 = vmatpush.msra.mxu0 0.0
    %231 = vmatpush.msra.mxu0 0.0
    %232 = vmatpush.msra.mxu0 0.0
    %233 = vmatpush.msra.mxu0 0.0
    %234 = vmatpush.msra.mxu0 0.0
    %235 = vmatpush.msra.mxu0 0.0
    %236 = vmatpush.msra.mxu0 0.0
    %237 = vmatpush.msra.mxu0 0.0
    %238 = vmatpush.msra.mxu0 %v223
    %239 = vmatpush.msra.mxu0 %v222
    %240 = vmatpush.msra.mxu0 %v221
    %241 = vmatpush.msra.mxu0 %v220
    %242 = vmatpush.msra.mxu0 %v219
    %243 = vmatpush.msra.mxu0 %v218
    %244 = vmatpush.msra.mxu0 %v217
    %245 = vmatpush.msra.mxu0 %v216
    %246 = vmatmul.f32.gmra.mxu0 %v225
    %v247 = vpop.f32.mrf.mxu0
    %v248 = vadd.f32 0.0, %v247
    %249 = vmatmul.f32.gmra.mxu0 %v228
    %v250 = vpop.f32.mrf.mxu0
    %v251 = vadd.f32 0.0, %v250
    %252 = vdwg.mxu0
    %v254 = vsel %vm194, %v203, 0
    %v257 = vsel %vm194, %v204, 0
    %259 = vmatpush.msra.mxu0 0.0
    %260 = vmatpush.msra.mxu0 0.0
    %261 = vmatpush.msra.mxu0 0.0
    %262 = vmatpush.msra.mxu0 0.0
    %263 = vmatpush.msra.mxu0 0.0
    %264 = vmatpush.msra.mxu0 0.0
    %265 = vmatpush.msra.mxu0 0.0
    %266 = vmatpush.msra.mxu0 0.0
    %267 = vmatpush.msra.mxu0 %v212
    %268 = vmatpush.msra.mxu0 %v211
    %269 = vmatpush.msra.mxu0 %v210
    %270 = vmatpush.msra.mxu0 %v209
    %271 = vmatpush.msra.mxu0 %v208
    %272 = vmatpush.msra.mxu0 %v207
    %273 = vmatpush.msra.mxu0 %v206
    %274 = vmatpush.msra.mxu0 %v205
    %275 = vmatmul.f32.gmra.mxu0 %v254
    %v276 = vpop.f32.mrf.mxu0
    %v277 = vadd.f32 %v248, %v276
    %278 = vmatmul.f32.gmra.mxu0 %v257
    %v279 = vpop.f32.mrf.mxu0
    %v280 = vadd.f32 %v251, %v279
    %281 = vdwg.mxu0
    %v282 = vld [vmem:[#allocation2 + $0x2] sm:$0xff]
    %v283 = vld [vmem:[#allocation2 + $0xa] sm:$0xff]
    %s284 = scalar_lea.vmem [#allocation11], 128
    %v285 = vld [vmem:[%s284] sm:$0xff]
    %v286 = vld [vmem:[%s284 + $0x8] sm:$0xff]
    %v287 = vld [vmem:[%s284 + $0x10] sm:$0xff]
    %v288 = vld [vmem:[%s284 + $0x18] sm:$0xff]
    %v289 = vld [vmem:[%s284 + $0x20] sm:$0xff]
    %v290 = vld [vmem:[%s284 + $0x28] sm:$0xff]
    %v291 = vld [vmem:[%s284 + $0x30] sm:$0xff]
    %v292 = vld [vmem:[%s284 + $0x38] sm:$0xff]
    %v294 = vsel %vm194, %v282, 0
    %v297 = vsel %vm194, %v283, 0
    %299 = vmatpush.msra.mxu0 0.0
    %300 = vmatpush.msra.mxu0 0.0
    %301 = vmatpush.msra.mxu0 0.0
    %302 = vmatpush.msra.mxu0 0.0
    %303 = vmatpush.msra.mxu0 0.0
    %304 = vmatpush.msra.mxu0 0.0
    %305 = vmatpush.msra.mxu0 0.0
    %306 = vmatpush.msra.mxu0 0.0
    %307 = vmatpush.msra.mxu0 %v292
    %308 = vmatpush.msra.mxu0 %v291
    %309 = vmatpush.msra.mxu0 %v290
    %310 = vmatpush.msra.mxu0 %v289
    %311 = vmatpush.msra.mxu0 %v288
    %312 = vmatpush.msra.mxu0 %v287
    %313 = vmatpush.msra.mxu0 %v286
    %314 = vmatpush.msra.mxu0 %v285
    %315 = vmatmul.f32.gmra.mxu0 %v294
    %v316 = vpop.f32.mrf.mxu0
    %v317 = vadd.f32 0.0, %v316
    %318 = vmatmul.f32.gmra.mxu0 %v297
    %v319 = vpop.f32.mrf.mxu0
    %v320 = vadd.f32 0.0, %v319
    %321 = vdwg.mxu0
    %v322 = vadd.f32 %v277, %v317
    %v323 = vadd.f32 %v280, %v320
    %v324 = vld [vmem:[%s2] sm:$0x1]
    %v326 = vperm.slane %v324, 0
    %v328 = vadd.f32 %v322, %v326
    %v329 = vadd.f32 %v323, %v326
    %v330 = vmul.f32 %v328, 0.5
    %v331 = vmul.f32 %v329, 0.5
    %v332 = vmul.f32 %v328, 0.044715
    %v333 = vmul.f32 %v329, 0.044715
    %v334 = vmul.f32 %v332, %v328
    %v335 = vmul.f32 %v333, %v329
    %v336 = vmul.f32 %v334, %v328
    %v337 = vmul.f32 %v335, %v329
    %v338 = vadd.f32 %v328, %v336
    %v339 = vadd.f32 %v329, %v337
    %v340 = vmul.f32 %v338, 0.7978846
    %v341 = vmul.f32 %v339, 0.7978846
    %v342 = vtanh.pop %v340
    %v343 = vtanh.pop %v341
    %v344 = vadd.f32 %v342, 1.0
    %v345 = vadd.f32 %v343, 1.0
    %v346 = vmul.f32 %v330, %v344
    %v347 = vmul.f32 %v331, %v345
    %v348 = vld [vmem:[%s198] sm:$0xff]
    %v349 = vld [vmem:[%s198 + $0x8] sm:$0xff]
    %v350 = vld [vmem:[%s198 + $0x1] sm:$0xff]
    %v351 = vld [vmem:[%s198 + $0x9] sm:$0xff]
    %v353 = vsel %vm194, %v350, 0
    %v356 = vsel %vm194, %v351, 0
    %358 = vmatpush.msra.mxu0 0.0
    %359 = vmatpush.msra.mxu0 0.0
    %360 = vmatpush.msra.mxu0 0.0
    %361 = vmatpush.msra.mxu0 0.0
    %362 = vmatpush.msra.mxu0 0.0
    %363 = vmatpush.msra.mxu0 0.0
    %364 = vmatpush.msra.mxu0 0.0
    %365 = vmatpush.msra.mxu0 0.0
    %366 = vmatpush.msra.mxu0 %v223
    %367 = vmatpush.msra.mxu0 %v222
    %368 = vmatpush.msra.mxu0 %v221
    %369 = vmatpush.msra.mxu0 %v220
    %370 = vmatpush.msra.mxu0 %v219
    %371 = vmatpush.msra.mxu0 %v218
    %372 = vmatpush.msra.mxu0 %v217
    %373 = vmatpush.msra.mxu0 %v216
    %374 = vmatmul.f32.gmra.mxu0 %v353
    %v375 = vpop.f32.mrf.mxu0
    %v376 = vadd.f32 0.0, %v375
    %377 = vmatmul.f32.gmra.mxu0 %v356
    %v378 = vpop.f32.mrf.mxu0
    %v379 = vadd.f32 0.0, %v378
    %380 = vdwg.mxu0
    %v382 = vsel %vm194, %v348, 0
    %v385 = vsel %vm194, %v349, 0
    %387 = vmatpush.msra.mxu0 0.0
    %388 = vmatpush.msra.mxu0 0.0
    %389 = vmatpush.msra.mxu0 0.0
    %390 = vmatpush.msra.mxu0 0.0
    %391 = vmatpush.msra.mxu0 0.0
    %392 = vmatpush.msra.mxu0 0.0
    %393 = vmatpush.msra.mxu0 0.0
    %394 = vmatpush.msra.mxu0 0.0
    %395 = vmatpush.msra.mxu0 %v212
    %396 = vmatpush.msra.mxu0 %v211
    %397 = vmatpush.msra.mxu0 %v210
    %398 = vmatpush.msra.mxu0 %v209
    %399 = vmatpush.msra.mxu0 %v208
    %400 = vmatpush.msra.mxu0 %v207
    %401 = vmatpush.msra.mxu0 %v206
    %402 = vmatpush.msra.mxu0 %v205
    %403 = vmatmul.f32.gmra.mxu0 %v382
    %v404 = vpop.f32.mrf.mxu0
    %v405 = vadd.f32 %v376, %v404
    %406 = vmatmul.f32.gmra.mxu0 %v385
    %v407 = vpop.f32.mrf.mxu0
    %v408 = vadd.f32 %v379, %v407
    %409 = vdwg.mxu0
    %v410 = vld [vmem:[%s198 + $0x2] sm:$0xff]
    %v411 = vld [vmem:[%s198 + $0xa] sm:$0xff]
    %v413 = vsel %vm194, %v410, 0
    %v416 = vsel %vm194, %v411, 0
    %418 = vmatpush.msra.mxu0 0.0
    %419 = vmatpush.msra.mxu0 0.0
    %420 = vmatpush.msra.mxu0 0.0
    %421 = vmatpush.msra.mxu0 0.0
    %422 = vmatpush.msra.mxu0 0.0
    %423 = vmatpush.msra.mxu0 0.0
    %424 = vmatpush.msra.mxu0 0.0
    %425 = vmatpush.msra.mxu0 0.0
    %426 = vmatpush.msra.mxu0 %v292
    %427 = vmatpush.msra.mxu0 %v291
    %428 = vmatpush.msra.mxu0 %v290
    %429 = vmatpush.msra.mxu0 %v289
    %430 = vmatpush.msra.mxu0 %v288
    %431 = vmatpush.msra.mxu0 %v287
    %432 = vmatpush.msra.mxu0 %v286
    %433 = vmatpush.msra.mxu0 %v285
    %434 = vmatmul.f32.gmra.mxu0 %v413
    %v435 = vpop.f32.mrf.mxu0
    %v436 = vadd.f32 0.0, %v435
    %437 = vmatmul.f32.gmra.mxu0 %v416
    %v438 = vpop.f32.mrf.mxu0
    %v439 = vadd.f32 0.0, %v438
    %440 = vdwg.mxu0
    %v441 = vadd.f32 %v405, %v436
    %v442 = vadd.f32 %v408, %v439
    %v443 = vadd.f32 %v441, %v326
    %v444 = vadd.f32 %v442, %v326
    %v445 = vmul.f32 %v443, 0.5
    %v446 = vmul.f32 %v444, 0.5
    %v447 = vmul.f32 %v443, 0.044715
    %v448 = vmul.f32 %v444, 0.044715
    %v449 = vmul.f32 %v447, %v443
    %v450 = vmul.f32 %v448, %v444
    %v451 = vmul.f32 %v449, %v443
    %v452 = vmul.f32 %v450, %v444
    %v453 = vadd.f32 %v443, %v451
    %v454 = vadd.f32 %v444, %v452
    %v455 = vmul.f32 %v453, 0.7978846
    %v456 = vmul.f32 %v454, 0.7978846
    %v457 = vtanh.pop %v455
    %v458 = vtanh.pop %v456
    %v459 = vadd.f32 %v457, 1.0
    %v460 = vadd.f32 %v458, 1.0
    %v461 = vmul.f32 %v445, %v459
    %v462 = vmul.f32 %v446, %v460
    %463 = vst [vmem:[#allocation3] sm:$0x1] 0.0
    %464 = vst [vmem:[#allocation3 + $0x1] sm:$0xff] %v346
    %465 = vst [vmem:[#allocation3 + $0x9] sm:$0xff] %v347
    %466 = vst [vmem:[#allocation3 + $0x11] sm:$0x1] 0.0
    %s467 = scalar_lea.vmem [#allocation3], 24
    %468 = vst [vmem:[%s467] sm:$0x1] 0.0
    %469 = vst [vmem:[%s467 + $0x1] sm:$0xff] %v461
    %470 = vst [vmem:[%s467 + $0x9] sm:$0xff] %v462
    %471 = vst [vmem:[%s467 + $0x11] sm:$0x1] 0.0
    %v472 = vld [vmem:[#allocation3] sm:$0xff]
    %v473 = vld [vmem:[#allocation3 + $0x8] sm:$0xff]
    %v474 = vld [vmem:[%s3] sm:$0xff]
    %v475 = vld [vmem:[%s3 + $0x8] sm:$0xff]
    %v476 = vld [vmem:[%s3 + $0x10] sm:$0xff]
    %v477 = vld [vmem:[%s3 + $0x18] sm:$0xff]
    %v478 = vld [vmem:[%s3 + $0x20] sm:$0xff]
    %v479 = vld [vmem:[%s3 + $0x28] sm:$0xff]
    %v480 = vld [vmem:[%s3 + $0x30] sm:$0xff]
    %v481 = vld [vmem:[%s3 + $0x38] sm:$0xff]
    %v482 = vld [vmem:[%s3 + $0x40] sm:$0xff]
    %v483 = vld [vmem:[%s3 + $0x48] sm:$0xff]
    %v484 = vld [vmem:[%s3 + $0x50] sm:$0xff]
    %v485 = vld [vmem:[%s3 + $0x58] sm:$0xff]
    %v486 = vld [vmem:[%s3 + $0x60] sm:$0xff]
    %v487 = vld [vmem:[%s3 + $0x68] sm:$0xff]
    %v488 = vld [vmem:[%s3 + $0x70] sm:$0xff]
    %v489 = vld [vmem:[%s3 + $0x78] sm:$0xff]
    %v490 = vld [vmem:[#allocation3 + $0x1] sm:$0xff]
    %v491 = vld [vmem:[#allocation3 + $0x9] sm:$0xff]
    %s492 = scalar_lea.vmem %s3, 128
    %v493 = vld [vmem:[%s492] sm:$0xff]
    %v494 = vld [vmem:[%s492 + $0x8] sm:$0xff]
    %v495 = vld [vmem:[%s492 + $0x10] sm:$0xff]
    %v496 = vld [vmem:[%s492 + $0x18] sm:$0xff]
    %v497 = vld [vmem:[%s492 + $0x20] sm:$0xff]
    %v498 = vld [vmem:[%s492 + $0x28] sm:$0xff]
    %v499 = vld [vmem:[%s492 + $0x30] sm:$0xff]
    %v500 = vld [vmem:[%s492 + $0x38] sm:$0xff]
    %v501 = vld [vmem:[%s492 + $0x40] sm:$0xff]
    %v502 = vld [vmem:[%s492 + $0x48] sm:$0xff]
    %v503 = vld [vmem:[%s492 + $0x50] sm:$0xff]
    %v504 = vld [vmem:[%s492 + $0x58] sm:$0xff]
    %v505 = vld [vmem:[%s492 + $0x60] sm:$0xff]
    %v506 = vld [vmem:[%s492 + $0x68] sm:$0xff]
    %v507 = vld [vmem:[%s492 + $0x70] sm:$0xff]
    %v508 = vld [vmem:[%s492 + $0x78] sm:$0xff]
    %509 = vmatpush.msra.mxu0 %v508
    %510 = vmatpush.msra.mxu0 %v507
    %511 = vmatpush.msra.mxu0 %v506
    %512 = vmatpush.msra.mxu0 %v505
    %513 = vmatpush.msra.mxu0 %v504
    %514 = vmatpush.msra.mxu0 %v503
    %515 = vmatpush.msra.mxu0 %v502
    %516 = vmatpush.msra.mxu0 %v501
    %517 = vmatpush.msra.mxu0 %v500
    %518 = vmatpush.msra.mxu0 %v499
    %519 = vmatpush.msra.mxu0 %v498
    %520 = vmatpush.msra.mxu0 %v497
    %521 = vmatpush.msra.mxu0 %v496
    %522 = vmatpush.msra.mxu0 %v495
    %523 = vmatpush.msra.mxu0 %v494
    %524 = vmatpush.msra.mxu0 %v493
    %525 = vmatmul.f32.gmra.mxu0 %v490
    %v526 = vpop.f32.mrf.mxu0
    %v527 = vadd.f32 0.0, %v526
    %528 = vmatmul.f32.gmra.mxu0 %v491
    %v529 = vpop.f32.mrf.mxu0
    %v530 = vadd.f32 0.0, %v529
    %531 = vdwg.mxu0
    %532 = vmatpush.msra.mxu0 %v489
    %533 = vmatpush.msra.mxu0 %v488
    %534 = vmatpush.msra.mxu0 %v487
    %535 = vmatpush.msra.mxu0 %v486
    %536 = vmatpush.msra.mxu0 %v485
    %537 = vmatpush.msra.mxu0 %v484
    %538 = vmatpush.msra.mxu0 %v483
    %539 = vmatpush.msra.mxu0 %v482
    %540 = vmatpush.msra.mxu0 %v481
    %541 = vmatpush.msra.mxu0 %v480
    %542 = vmatpush.msra.mxu0 %v479
    %543 = vmatpush.msra.mxu0 %v478
    %544 = vmatpush.msra.mxu0 %v477
    %545 = vmatpush.msra.mxu0 %v476
    %546 = vmatpush.msra.mxu0 %v475
    %547 = vmatpush.msra.mxu0 %v474
    %548 = vmatmul.f32.gmra.mxu0 %v472
    %v549 = vpop.f32.mrf.mxu0
    %v550 = vadd.f32 %v527, %v549
    %551 = vmatmul.f32.gmra.mxu0 %v473
    %v552 = vpop.f32.mrf.mxu0
    %v553 = vadd.f32 %v530, %v552
    %554 = vdwg.mxu0
    %v555 = vld [vmem:[#allocation3 + $0x2] sm:$0xff]
    %v556 = vld [vmem:[#allocation3 + $0xa] sm:$0xff]
    %s557 = scalar_lea.vmem %s3, 256
    %v558 = vld [vmem:[%s557] sm:$0xff]
    %v559 = vld [vmem:[%s557 + $0x8] sm:$0xff]
    %v560 = vld [vmem:[%s557 + $0x10] sm:$0xff]
    %v561 = vld [vmem:[%s557 + $0x18] sm:$0xff]
    %v562 = vld [vmem:[%s557 + $0x20] sm:$0xff]
    %v563 = vld [vmem:[%s557 + $0x28] sm:$0xff]
    %v564 = vld [vmem:[%s557 + $0x30] sm:$0xff]
    %v565 = vld [vmem:[%s557 + $0x38] sm:$0xff]
    %v566 = vld [vmem:[%s557 + $0x40] sm:$0xff]
    %v567 = vld [vmem:[%s557 + $0x48] sm:$0xff]
    %v568 = vld [vmem:[%s557 + $0x50] sm:$0xff]
    %v569 = vld [vmem:[%s557 + $0x58] sm:$0xff]
    %v570 = vld [vmem:[%s557 + $0x60] sm:$0xff]
    %v571 = vld [vmem:[%s557 + $0x68] sm:$0xff]
    %v572 = vld [vmem:[%s557 + $0x70] sm:$0xff]
    %v573 = vld [vmem:[%s557 + $0x78] sm:$0xff]
    %574 = vmatpush.msra.mxu0 %v573
    %575 = vmatpush.msra.mxu0 %v572
    %576 = vmatpush.msra.mxu0 %v571
    %577 = vmatpush.msra.mxu0 %v570
    %578 = vmatpush.msra.mxu0 %v569
    %579 = vmatpush.msra.mxu0 %v568
    %580 = vmatpush.msra.mxu0 %v567
    %581 = vmatpush.msra.mxu0 %v566
    %582 = vmatpush.msra.mxu0 %v565
    %583 = vmatpush.msra.mxu0 %v564
    %584 = vmatpush.msra.mxu0 %v563
    %585 = vmatpush.msra.mxu0 %v562
    %586 = vmatpush.msra.mxu0 %v561
    %587 = vmatpush.msra.mxu0 %v560
    %588 = vmatpush.msra.mxu0 %v559
    %589 = vmatpush.msra.mxu0 %v558
    %590 = vmatmul.f32.gmra.mxu0 %v555
    %v591 = vpop.f32.mrf.mxu0
    %v592 = vadd.f32 0.0, %v591
    %593 = vmatmul.f32.gmra.mxu0 %v556
    %v594 = vpop.f32.mrf.mxu0
    %v595 = vadd.f32 0.0, %v594
    %596 = vdwg.mxu0
    %v597 = vadd.f32 %v550, %v592
    %v598 = vadd.f32 %v553, %v595
    %v599 = vld [vmem:[%s4] sm:$0x1]
    %v601 = vperm.slane %v599, 0
    %v603 = vadd.f32 %v597, %v601
    %v604 = vadd.f32 %v598, %v601
    %v605 = vmul.f32 %v603, 0.5
    %v606 = vmul.f32 %v604, 0.5
    %v607 = vmul.f32 %v603, 0.044715
    %v608 = vmul.f32 %v604, 0.044715
    %v609 = vmul.f32 %v607, %v603
    %v610 = vmul.f32 %v608, %v604
    %v611 = vmul.f32 %v609, %v603
    %v612 = vmul.f32 %v610, %v604
    %v613 = vadd.f32 %v603, %v611
    %v614 = vadd.f32 %v604, %v612
    %v615 = vmul.f32 %v613, 0.7978846
    %v616 = vmul.f32 %v614, 0.7978846
    %v617 = vtanh.pop %v615
    %v618 = vtanh.pop %v616
    %v619 = vadd.f32 %v617, 1.0
    %v620 = vadd.f32 %v618, 1.0
    %v621 = vmul.f32 %v605, %v619
    %v622 = vmul.f32 %v606, %v620
    %v623 = vld [vmem:[%s467] sm:$0xff]
    %v624 = vld [vmem:[%s467 + $0x8] sm:$0xff]
    %v625 = vld [vmem:[%s467 + $0x1] sm:$0xff]
    %v626 = vld [vmem:[%s467 + $0x9] sm:$0xff]
    %627 = vmatpush.msra.mxu0 %v508
    %628 = vmatpush.msra.mxu0 %v507
    %629 = vmatpush.msra.mxu0 %v506
    %630 = vmatpush.msra.mxu0 %v505
    %631 = vmatpush.msra.mxu0 %v504
    %632 = vmatpush.msra.mxu0 %v503
    %633 = vmatpush.msra.mxu0 %v502
    %634 = vmatpush.msra.mxu0 %v501
    %635 = vmatpush.msra.mxu0 %v500
    %636 = vmatpush.msra.mxu0 %v499
    %637 = vmatpush.msra.mxu0 %v498
    %638 = vmatpush.msra.mxu0 %v497
    %639 = vmatpush.msra.mxu0 %v496
    %640 = vmatpush.msra.mxu0 %v495
    %641 = vmatpush.msra.mxu0 %v494
    %642 = vmatpush.msra.mxu0 %v493
    %643 = vmatmul.f32.gmra.mxu0 %v625
    %v644 = vpop.f32.mrf.mxu0
    %v645 = vadd.f32 0.0, %v644
    %646 = vmatmul.f32.gmra.mxu0 %v626
    %v647 = vpop.f32.mrf.mxu0
    %v648 = vadd.f32 0.0, %v647
    %649 = vdwg.mxu0
    %650 = vmatpush.msra.mxu0 %v489
    %651 = vmatpush.msra.mxu0 %v488
    %652 = vmatpush.msra.mxu0 %v487
    %653 = vmatpush.msra.mxu0 %v486
    %654 = vmatpush.msra.mxu0 %v485
    %655 = vmatpush.msra.mxu0 %v484
    %656 = vmatpush.msra.mxu0 %v483
    %657 = vmatpush.msra.mxu0 %v482
    %658 = vmatpush.msra.mxu0 %v481
    %659 = vmatpush.msra.mxu0 %v480
    %660 = vmatpush.msra.mxu0 %v479
    %661 = vmatpush.msra.mxu0 %v478
    %662 = vmatpush.msra.mxu0 %v477
    %663 = vmatpush.msra.mxu0 %v476
    %664 = vmatpush.msra.mxu0 %v475
    %665 = vmatpush.msra.mxu0 %v474
    %666 = vmatmul.f32.gmra.mxu0 %v623
    %v667 = vpop.f32.mrf.mxu0
    %v668 = vadd.f32 %v645, %v667
    %669 = vmatmul.f32.gmra.mxu0 %v624
    %v670 = vpop.f32.mrf.mxu0
    %v671 = vadd.f32 %v648, %v670
    %672 = vdwg.mxu0
    %v673 = vld [vmem:[%s467 + $0x2] sm:$0xff]
    %v674 = vld [vmem:[%s467 + $0xa] sm:$0xff]
    %675 = vmatpush.msra.mxu0 %v573
    %676 = vmatpush.msra.mxu0 %v572
    %677 = vmatpush.msra.mxu0 %v571
    %678 = vmatpush.msra.mxu0 %v570
    %679 = vmatpush.msra.mxu0 %v569
    %680 = vmatpush.msra.mxu0 %v568
    %681 = vmatpush.msra.mxu0 %v567
    %682 = vmatpush.msra.mxu0 %v566
    %683 = vmatpush.msra.mxu0 %v565
    %684 = vmatpush.msra.mxu0 %v564
    %685 = vmatpush.msra.mxu0 %v563
    %686 = vmatpush.msra.mxu0 %v562
    %687 = vmatpush.msra.mxu0 %v561
    %688 = vmatpush.msra.mxu0 %v560
    %689 = vmatpush.msra.mxu0 %v559
    %690 = vmatpush.msra.mxu0 %v558
    %691 = vmatmul.f32.gmra.mxu0 %v673
    %v692 = vpop.f32.mrf.mxu0
    %v693 = vadd.f32 0.0, %v692
    %694 = vmatmul.f32.gmra.mxu0 %v674
    %v695 = vpop.f32.mrf.mxu0
    %v696 = vadd.f32 0.0, %v695
    %697 = vdwg.mxu0
    %v698 = vadd.f32 %v668, %v693
    %v699 = vadd.f32 %v671, %v696
    %v700 = vadd.f32 %v698, %v601
    %v701 = vadd.f32 %v699, %v601
    %v702 = vmul.f32 %v700, 0.5
    %v703 = vmul.f32 %v701, 0.5
    %v704 = vmul.f32 %v700, 0.044715
    %v705 = vmul.f32 %v701, 0.044715
    %v706 = vmul.f32 %v704, %v700
    %v707 = vmul.f32 %v705, %v701
    %v708 = vmul.f32 %v706, %v700
    %v709 = vmul.f32 %v707, %v701
    %v710 = vadd.f32 %v700, %v708
    %v711 = vadd.f32 %v701, %v709
    %v712 = vmul.f32 %v710, 0.7978846
    %v713 = vmul.f32 %v711, 0.7978846
    %v714 = vtanh.pop %v712
    %v715 = vtanh.pop %v713
    %v716 = vadd.f32 %v714, 1.0
    %v717 = vadd.f32 %v715, 1.0
    %v718 = vmul.f32 %v702, %v716
    %v719 = vmul.f32 %v703, %v717
    %720 = vst [vmem:[#allocation4] sm:$0x1] 0.0
    %721 = vst [vmem:[#allocation4 + $0x1] sm:$0xff] %v621
    %722 = vst [vmem:[#allocation4 + $0x9] sm:$0xff] %v622
    %723 = vst [vmem:[#allocation4 + $0x11] sm:$0x1] 0.0
    %s724 = scalar_lea.vmem [#allocation4], 24
    %725 = vst [vmem:[%s724] sm:$0x1] 0.0
    %726 = vst [vmem:[%s724 + $0x1] sm:$0xff] %v718
    %727 = vst [vmem:[%s724 + $0x9] sm:$0xff] %v719
    %728 = vst [vmem:[%s724 + $0x11] sm:$0x1] 0.0
    %v729 = vld [vmem:[#allocation4] sm:$0xff]
    %v730 = vld [vmem:[#allocation4 + $0x8] sm:$0xff]
    %v731 = vld [vmem:[#allocation13] sm:$0xff]
    %v732 = vld [vmem:[#allocation13 + $0x8] sm:$0xff]
    %v733 = vld [vmem:[#allocation13 + $0x10] sm:$0xff]
    %v734 = vld [vmem:[#allocation13 + $0x18] sm:$0xff]
    %v735 = vld [vmem:[#allocation13 + $0x20] sm:$0xff]
    %v736 = vld [vmem:[#allocation13 + $0x28] sm:$0xff]
    %v737 = vld [vmem:[#allocation13 + $0x30] sm:$0xff]
    %v738 = vld [vmem:[#allocation13 + $0x38] sm:$0xff]
    %v739 = vld [vmem:[#allocation13 + $0x40] sm:$0xff]
    %v740 = vld [vmem:[#allocation13 + $0x48] sm:$0xff]
    %v741 = vld [vmem:[#allocation13 + $0x50] sm:$0xff]
    %v742 = vld [vmem:[#allocation13 + $0x58] sm:$0xff]
    %v743 = vld [vmem:[#allocation13 + $0x60] sm:$0xff]
    %v744 = vld [vmem:[#allocation13 + $0x68] sm:$0xff]
    %v745 = vld [vmem:[#allocation13 + $0x70] sm:$0xff]
    %v746 = vld [vmem:[#allocation13 + $0x78] sm:$0xff]
    %v747 = vld [vmem:[#allocation4 + $0x1] sm:$0xff]
    %v748 = vld [vmem:[#allocation4 + $0x9] sm:$0xff]
    %s749 = scalar_lea.vmem [#allocation13], 128
    %v750 = vld [vmem:[%s749] sm:$0xff]
    %v751 = vld [vmem:[%s749 + $0x8] sm:$0xff]
    %v752 = vld [vmem:[%s749 + $0x10] sm:$0xff]
    %v753 = vld [vmem:[%s749 + $0x18] sm:$0xff]
    %v754 = vld [vmem:[%s749 + $0x20] sm:$0xff]
    %v755 = vld [vmem:[%s749 + $0x28] sm:$0xff]
    %v756 = vld [vmem:[%s749 + $0x30] sm:$0xff]
    %v757 = vld [vmem:[%s749 + $0x38] sm:$0xff]
    %v758 = vld [vmem:[%s749 + $0x40] sm:$0xff]
    %v759 = vld [vmem:[%s749 + $0x48] sm:$0xff]
    %v760 = vld [vmem:[%s749 + $0x50] sm:$0xff]
    %v761 = vld [vmem:[%s749 + $0x58] sm:$0xff]
    %v762 = vld [vmem:[%s749 + $0x60] sm:$0xff]
    %v763 = vld [vmem:[%s749 + $0x68] sm:$0xff]
    %v764 = vld [vmem:[%s749 + $0x70] sm:$0xff]
    %v765 = vld [vmem:[%s749 + $0x78] sm:$0xff]
    %766 = vmatpush.msra.mxu0 %v765
    %767 = vmatpush.msra.mxu0 %v764
    %768 = vmatpush.msra.mxu0 %v763
    %769 = vmatpush.msra.mxu0 %v762
    %770 = vmatpush.msra.mxu0 %v761
    %771 = vmatpush.msra.mxu0 %v760
    %772 = vmatpush.msra.mxu0 %v759
    %773 = vmatpush.msra.mxu0 %v758
    %774 = vmatpush.msra.mxu0 %v757
    %775 = vmatpush.msra.mxu0 %v756
    %776 = vmatpush.msra.mxu0 %v755
    %777 = vmatpush.msra.mxu0 %v754
    %778 = vmatpush.msra.mxu0 %v753
    %779 = vmatpush.msra.mxu0 %v752
    %780 = vmatpush.msra.mxu0 %v751
    %781 = vmatpush.msra.mxu0 %v750
    %782 = vmatmul.f32.gmra.mxu0 %v747
    %v783 = vpop.f32.mrf.mxu0
    %v784 = vadd.f32 0.0, %v783
    %785 = vmatmul.f32.gmra.mxu0 %v748
    %v786 = vpop.f32.mrf.mxu0
    %v787 = vadd.f32 0.0, %v786
    %788 = vdwg.mxu0
    %789 = vmatpush.msra.mxu0 %v746
    %790 = vmatpush.msra.mxu0 %v745
    %791 = vmatpush.msra.mxu0 %v744
    %792 = vmatpush.msra.mxu0 %v743
    %793 = vmatpush.msra.mxu0 %v742
    %794 = vmatpush.msra.mxu0 %v741
    %795 = vmatpush.msra.mxu0 %v740
    %796 = vmatpush.msra.mxu0 %v739
    %797 = vmatpush.msra.mxu0 %v738
    %798 = vmatpush.msra.mxu0 %v737
    %799 = vmatpush.msra.mxu0 %v736
    %800 = vmatpush.msra.mxu0 %v735
    %801 = vmatpush.msra.mxu0 %v734
    %802 = vmatpush.msra.mxu0 %v733
    %803 = vmatpush.msra.mxu0 %v732
    %804 = vmatpush.msra.mxu0 %v731
    %805 = vmatmul.f32.gmra.mxu0 %v729
    %v806 = vpop.f32.mrf.mxu0
    %v807 = vadd.f32 %v784, %v806
    %808 = vmatmul.f32.gmra.mxu0 %v730
    %v809 = vpop.f32.mrf.mxu0
    %v810 = vadd.f32 %v787, %v809
    %811 = vdwg.mxu0
    %v812 = vld [vmem:[#allocation4 + $0x2] sm:$0xff]
    %v813 = vld [vmem:[#allocation4 + $0xa] sm:$0xff]
    %s814 = scalar_lea.vmem [#allocation13], 256
    %v815 = vld [vmem:[%s814] sm:$0xff]
    %v816 = vld [vmem:[%s814 + $0x8] sm:$0xff]
    %v817 = vld [vmem:[%s814 + $0x10] sm:$0xff]
    %v818 = vld [vmem:[%s814 + $0x18] sm:$0xff]
    %v819 = vld [vmem:[%s814 + $0x20] sm:$0xff]
    %v820 = vld [vmem:[%s814 + $0x28] sm:$0xff]
    %v821 = vld [vmem:[%s814 + $0x30] sm:$0xff]
    %v822 = vld [vmem:[%s814 + $0x38] sm:$0xff]
    %v823 = vld [vmem:[%s814 + $0x40] sm:$0xff]
    %v824 = vld [vmem:[%s814 + $0x48] sm:$0xff]
    %v825 = vld [vmem:[%s814 + $0x50] sm:$0xff]
    %v826 = vld [vmem:[%s814 + $0x58] sm:$0xff]
    %v827 = vld [vmem:[%s814 + $0x60] sm:$0xff]
    %v828 = vld [vmem:[%s814 + $0x68] sm:$0xff]
    %v829 = vld [vmem:[%s814 + $0x70] sm:$0xff]
    %v830 = vld [vmem:[%s814 + $0x78] sm:$0xff]
    %831 = vmatpush.msra.mxu0 %v830
    %832 = vmatpush.msra.mxu0 %v829
    %833 = vmatpush.msra.mxu0 %v828
    %834 = vmatpush.msra.mxu0 %v827
    %835 = vmatpush.msra.mxu0 %v826
    %836 = vmatpush.msra.mxu0 %v825
    %837 = vmatpush.msra.mxu0 %v824
    %838 = vmatpush.msra.mxu0 %v823
    %839 = vmatpush.msra.mxu0 %v822
    %840 = vmatpush.msra.mxu0 %v821
    %841 = vmatpush.msra.mxu0 %v820
    %842 = vmatpush.msra.mxu0 %v819
    %843 = vmatpush.msra.mxu0 %v818
    %844 = vmatpush.msra.mxu0 %v817
    %845 = vmatpush.msra.mxu0 %v816
    %846 = vmatpush.msra.mxu0 %v815
    %847 = vmatmul.f32.gmra.mxu0 %v812
    %v848 = vpop.f32.mrf.mxu0
    %v849 = vadd.f32 0.0, %v848
    %850 = vmatmul.f32.gmra.mxu0 %v813
    %v851 = vpop.f32.mrf.mxu0
    %v852 = vadd.f32 0.0, %v851
    %853 = vdwg.mxu0
    %v854 = vadd.f32 %v807, %v849
    %v855 = vadd.f32 %v810, %v852
    %v856 = vld [vmem:[%s6] sm:$0x1]
    %v858 = vperm.slane %v856, 0
    %v860 = vadd.f32 %v854, %v858
    %v861 = vadd.f32 %v855, %v858
    %v862 = vmul.f32 %v860, 0.5
    %v863 = vmul.f32 %v861, 0.5
    %v864 = vmul.f32 %v860, 0.044715
    %v865 = vmul.f32 %v861, 0.044715
    %v866 = vmul.f32 %v864, %v860
    %v867 = vmul.f32 %v865, %v861
    %v868 = vmul.f32 %v866, %v860
    %v869 = vmul.f32 %v867, %v861
    %v870 = vadd.f32 %v860, %v868
    %v871 = vadd.f32 %v861, %v869
    %v872 = vmul.f32 %v870, 0.7978846
    %v873 = vmul.f32 %v871, 0.7978846
    %v874 = vtanh.pop %v872
    %v875 = vtanh.pop %v873
    %v876 = vadd.f32 %v874, 1.0
    %v877 = vadd.f32 %v875, 1.0
    %v878 = vmul.f32 %v862, %v876
    %v879 = vmul.f32 %v863, %v877
    %882 = vrot.lane.b32.xlu0 %v878, 64
    %v883 = vpop.permute.xlu0 %882
    %884 = vrot.lane.b32.xlu0 %v879, 64
    %v885 = vpop.permute.xlu0 %884
    %v888 = vmax.f32 %v878, %v883
    %v889 = vmax.f32 %v879, %v885
    %v892 = vrot.slane %v888, 2
    %v893 = vrot.slane %v888, 4
    %v894 = vrot.slane %v888, 6
    %v895 = vrot.slane %v889, 2
    %v896 = vrot.slane %v889, 4
    %v897 = vrot.slane %v889, 6
    %v904 = vrot.slane %v888, 7
    %v905 = vrot.slane %v904, 2
    %v906 = vrot.slane %v892, 7
    %v907 = vrot.slane %v906, 2
    %v908 = vrot.slane %v893, 7
    %v909 = vrot.slane %v908, 2
    %v910 = vrot.slane %v894, 7
    %v911 = vrot.slane %v910, 2
    %v912 = vrot.slane %v889, 7
    %v913 = vrot.slane %v912, 2
    %v914 = vrot.slane %v895, 7
    %v915 = vrot.slane %v914, 2
    %v916 = vrot.slane %v896, 7
    %v917 = vrot.slane %v916, 2
    %v918 = vrot.slane %v897, 7
    %v919 = vrot.slane %v918, 2
    %v928 = vmax.f32 %v888, %v905
    %v929 = vmax.f32 %v892, %v907
    %v930 = vmax.f32 %v893, %v909
    %v931 = vmax.f32 %v894, %v911
    %v932 = vmax.f32 %v889, %v913
    %v933 = vmax.f32 %v895, %v915
    %v934 = vmax.f32 %v896, %v917
    %v935 = vmax.f32 %v897, %v919
    %v936 = vld [vmem:[%s724] sm:$0xff]
    %v937 = vld [vmem:[%s724 + $0x8] sm:$0xff]
    %v938 = vld [vmem:[%s724 + $0x1] sm:$0xff]
    %v939 = vld [vmem:[%s724 + $0x9] sm:$0xff]
    %940 = vmatpush.msra.mxu0 %v765
    %941 = vmatpush.msra.mxu0 %v764
    %942 = vmatpush.msra.mxu0 %v763
    %943 = vmatpush.msra.mxu0 %v762
    %944 = vmatpush.msra.mxu0 %v761
    %945 = vmatpush.msra.mxu0 %v760
    %946 = vmatpush.msra.mxu0 %v759
    %947 = vmatpush.msra.mxu0 %v758
    %948 = vmatpush.msra.mxu0 %v757
    %949 = vmatpush.msra.mxu0 %v756
    %950 = vmatpush.msra.mxu0 %v755
    %951 = vmatpush.msra.mxu0 %v754
    %952 = vmatpush.msra.mxu0 %v753
    %953 = vmatpush.msra.mxu0 %v752
    %954 = vmatpush.msra.mxu0 %v751
    %955 = vmatpush.msra.mxu0 %v750
    %956 = vmatmul.f32.gmra.mxu0 %v938
    %v957 = vpop.f32.mrf.mxu0
    %v958 = vadd.f32 0.0, %v957
    %959 = vmatmul.f32.gmra.mxu0 %v939
    %v960 = vpop.f32.mrf.mxu0
    %v961 = vadd.f32 0.0, %v960
    %962 = vdwg.mxu0
    %963 = vmatpush.msra.mxu0 %v746
    %964 = vmatpush.msra.mxu0 %v745
    %965 = vmatpush.msra.mxu0 %v744
    %966 = vmatpush.msra.mxu0 %v743
    %967 = vmatpush.msra.mxu0 %v742
    %968 = vmatpush.msra.mxu0 %v741
    %969 = vmatpush.msra.mxu0 %v740
    %970 = vmatpush.msra.mxu0 %v739
    %971 = vmatpush.msra.mxu0 %v738
    %972 = vmatpush.msra.mxu0 %v737
    %973 = vmatpush.msra.mxu0 %v736
    %974 = vmatpush.msra.mxu0 %v735
    %975 = vmatpush.msra.mxu0 %v734
    %976 = vmatpush.msra.mxu0 %v733
    %977 = vmatpush.msra.mxu0 %v732
    %978 = vmatpush.msra.mxu0 %v731
    %979 = vmatmul.f32.gmra.mxu0 %v936
    %v980 = vpop.f32.mrf.mxu0
    %v981 = vadd.f32 %v958, %v980
    %982 = vmatmul.f32.gmra.mxu0 %v937
    %v983 = vpop.f32.mrf.mxu0
    %v984 = vadd.f32 %v961, %v983
    %985 = vdwg.mxu0
    %v986 = vld [vmem:[%s724 + $0x2] sm:$0xff]
    %v987 = vld [vmem:[%s724 + $0xa] sm:$0xff]
    %988 = vmatpush.msra.mxu0 %v830
    %989 = vmatpush.msra.mxu0 %v829
    %990 = vmatpush.msra.mxu0 %v828
    %991 = vmatpush.msra.mxu0 %v827
    %992 = vmatpush.msra.mxu0 %v826
    %993 = vmatpush.msra.mxu0 %v825
    %994 = vmatpush.msra.mxu0 %v824
    %995 = vmatpush.msra.mxu0 %v823
    %996 = vmatpush.msra.mxu0 %v822
    %997 = vmatpush.msra.mxu0 %v821
    %998 = vmatpush.msra.mxu0 %v820
    %999 = vmatpush.msra.mxu0 %v819
    %1000 = vmatpush.msra.mxu0 %v818
    %1001 = vmatpush.msra.mxu0 %v817
    %1002 = vmatpush.msra.mxu0 %v816
    %1003 = vmatpush.msra.mxu0 %v815
    %1004 = vmatmul.f32.gmra.mxu0 %v986
    %v1005 = vpop.f32.mrf.mxu0
    %v1006 = vadd.f32 0.0, %v1005
    %1007 = vmatmul.f32.gmra.mxu0 %v987
    %v1008 = vpop.f32.mrf.mxu0
    %v1009 = vadd.f32 0.0, %v1008
    %1010 = vdwg.mxu0
    %v1011 = vadd.f32 %v981, %v1006
    %v1012 = vadd.f32 %v984, %v1009
    %v1013 = vadd.f32 %v1011, %v858
    %v1014 = vadd.f32 %v1012, %v858
    %v1015 = vmul.f32 %v1013, 0.5
    %v1016 = vmul.f32 %v1014, 0.5
    %v1017 = vmul.f32 %v1013, 0.044715
    %v1018 = vmul.f32 %v1014, 0.044715
    %v1019 = vmul.f32 %v1017, %v1013
    %v1020 = vmul.f32 %v1018, %v1014
    %v1021 = vmul.f32 %v1019, %v1013
    %v1022 = vmul.f32 %v1020, %v1014
    %v1023 = vadd.f32 %v1013, %v1021
    %v1024 = vadd.f32 %v1014, %v1022
    %v1025 = vmul.f32 %v1023, 0.7978846
    %v1026 = vmul.f32 %v1024, 0.7978846
    %v1027 = vtanh.pop %v1025
    %v1028 = vtanh.pop %v1026
    %v1029 = vadd.f32 %v1027, 1.0
    %v1030 = vadd.f32 %v1028, 1.0
    %v1031 = vmul.f32 %v1015, %v1029
    %v1032 = vmul.f32 %v1016, %v1030
    %1035 = vrot.lane.b32.xlu0 %v1031, 64
    %v1036 = vpop.permute.xlu0 %1035
    %1037 = vrot.lane.b32.xlu0 %v1032, 64
    %v1038 = vpop.permute.xlu0 %1037
    %v1041 = vmax.f32 %v1031, %v1036
    %v1042 = vmax.f32 %v1032, %v1038
    %v1045 = vrot.slane %v1041, 2
    %v1046 = vrot.slane %v1041, 4
    %v1047 = vrot.slane %v1041, 6
    %v1048 = vrot.slane %v1042, 2
    %v1049 = vrot.slane %v1042, 4
    %v1050 = vrot.slane %v1042, 6
    %v1057 = vrot.slane %v1041, 7
    %v1058 = vrot.slane %v1057, 2
    %v1059 = vrot.slane %v1045, 7
    %v1060 = vrot.slane %v1059, 2
    %v1061 = vrot.slane %v1046, 7
    %v1062 = vrot.slane %v1061, 2
    %v1063 = vrot.slane %v1047, 7
    %v1064 = vrot.slane %v1063, 2
    %v1065 = vrot.slane %v1042, 7
    %v1066 = vrot.slane %v1065, 2
    %v1067 = vrot.slane %v1048, 7
    %v1068 = vrot.slane %v1067, 2
    %v1069 = vrot.slane %v1049, 7
    %v1070 = vrot.slane %v1069, 2
    %v1071 = vrot.slane %v1050, 7
    %v1072 = vrot.slane %v1071, 2
    %v1081 = vmax.f32 %v1041, %v1058
    %v1082 = vmax.f32 %v1045, %v1060
    %v1083 = vmax.f32 %v1046, %v1062
    %v1084 = vmax.f32 %v1047, %v1064
    %v1085 = vmax.f32 %v1042, %v1066
    %v1086 = vmax.f32 %v1048, %v1068
    %v1087 = vmax.f32 %v1049, %v1070
    %v1088 = vmax.f32 %v1050, %v1072
    %1089 = vst.msk [vmem:[#allocation5] sm:$0x1] %vm192, 0.0
    %v1098 = vperm.slane %v928, 0
    %v1099 = vperm.slane %v929, 0
    %v1100 = vperm.slane %v930, 0
    %v1101 = vperm.slane %v931, 0
    %v1102 = vperm.slane %v932, 0
    %v1103 = vperm.slane %v933, 0
    %v1104 = vperm.slane %v934, 0
    %v1105 = vperm.slane %v935, 0
    %vm1106 = vcmask 1041409
    %v1107 = vsel %vm1106, %v1099, %v1098
    %vm1108 = vcmask 1042434
    %v1109 = vsel %vm1108, %v1100, %v1107
    %vm1110 = vcmask 1043459
    %v1111 = vsel %vm1110, %v1101, %v1109
    %vm1112 = vcmask 1044484
    %v1113 = vsel %vm1112, %v1102, %v1111
    %vm1114 = vcmask 1045509
    %v1115 = vsel %vm1114, %v1103, %v1113
    %vm1116 = vcmask 1046534
    %v1117 = vsel %vm1116, %v1104, %v1115
    %vm1118 = vcmask 1047559
    %v1119 = vsel %vm1118, %v1105, %v1117
    %1121 = vst.msk [vmem:[#allocation5 + $0x1] sm:$0xff] %vm194, %v1119
    %1122 = vst.msk [vmem:[#allocation5 + $0x9] sm:$0x1] %vm192, 0.0
    %s1123 = scalar_lea.vmem [#allocation5], 16
    %1124 = vst.msk [vmem:[%s1123] sm:$0x1] %vm192, 0.0
    %v1133 = vperm.slane %v1081, 0
    %v1134 = vperm.slane %v1082, 0
    %v1135 = vperm.slane %v1083, 0
    %v1136 = vperm.slane %v1084, 0
    %v1137 = vperm.slane %v1085, 0
    %v1138 = vperm.slane %v1086, 0
    %v1139 = vperm.slane %v1087, 0
    %v1140 = vperm.slane %v1088, 0
    %v1141 = vsel %vm1106, %v1134, %v1133
    %v1142 = vsel %vm1108, %v1135, %v1141
    %v1143 = vsel %vm1110, %v1136, %v1142
    %v1144 = vsel %vm1112, %v1137, %v1143
    %v1145 = vsel %vm1114, %v1138, %v1144
    %v1146 = vsel %vm1116, %v1139, %v1145
    %v1147 = vsel %vm1118, %v1140, %v1146
    %1149 = vst.msk [vmem:[%s1123 + $0x1] sm:$0xff] %vm194, %v1147
    %1150 = vst.msk [vmem:[%s1123 + $0x9] sm:$0x1] %vm192, 0.0
    %v1151 = vld [vmem:[#allocation5] sm:$0xff]
    %v1152 = vld [vmem:[#allocation15] sm:$0xff]
    %v1153 = vld [vmem:[#allocation15 + $0x8] sm:$0xff]
    %v1154 = vld [vmem:[#allocation15 + $0x10] sm:$0xff]
    %v1155 = vld [vmem:[#allocation15 + $0x18] sm:$0xff]
    %v1156 = vld [vmem:[#allocation15 + $0x20] sm:$0xff]
    %v1157 = vld [vmem:[#allocation15 + $0x28] sm:$0xff]
    %v1158 = vld [vmem:[#allocation15 + $0x30] sm:$0xff]
    %v1159 = vld [vmem:[#allocation15 + $0x38] sm:$0xff]
    %v1160 = vld [vmem:[#allocation5 + $0x1] sm:$0xff]
    %s1161 = scalar_lea.vmem [#allocation15], 64
    %v1162 = vld [vmem:[%s1161] sm:$0xff]
    %v1163 = vld [vmem:[%s1161 + $0x8] sm:$0xff]
    %v1164 = vld [vmem:[%s1161 + $0x10] sm:$0xff]
    %v1165 = vld [vmem:[%s1161 + $0x18] sm:$0xff]
    %v1166 = vld [vmem:[%s1161 + $0x20] sm:$0xff]
    %v1167 = vld [vmem:[%s1161 + $0x28] sm:$0xff]
    %v1168 = vld [vmem:[%s1161 + $0x30] sm:$0xff]
    %v1169 = vld [vmem:[%s1161 + $0x38] sm:$0xff]
    %v1171 = vsel %vm194, %v1160, 0
    %1173 = vmatpush.msra.mxu0 0.0
    %1174 = vmatpush.msra.mxu0 0.0
    %1175 = vmatpush.msra.mxu0 0.0
    %1176 = vmatpush.msra.mxu0 0.0
    %1177 = vmatpush.msra.mxu0 0.0
    %1178 = vmatpush.msra.mxu0 0.0
    %1179 = vmatpush.msra.mxu0 0.0
    %1180 = vmatpush.msra.mxu0 0.0
    %1181 = vmatpush.msra.mxu0 %v1169
    %1182 = vmatpush.msra.mxu0 %v1168
    %1183 = vmatpush.msra.mxu0 %v1167
    %1184 = vmatpush.msra.mxu0 %v1166
    %1185 = vmatpush.msra.mxu0 %v1165
    %1186 = vmatpush.msra.mxu0 %v1164
    %1187 = vmatpush.msra.mxu0 %v1163
    %1188 = vmatpush.msra.mxu0 %v1162
    %1189 = vmatmul.f32.gmra.mxu0 %v1171
    %v1190 = vpop.f32.mrf.mxu0
    %v1191 = vadd.f32 0.0, %v1190
    %1192 = vdwg.mxu0
    %v1194 = vsel %vm194, %v1151, 0
    %1196 = vmatpush.msra.mxu0 0.0
    %1197 = vmatpush.msra.mxu0 0.0
    %1198 = vmatpush.msra.mxu0 0.0
    %1199 = vmatpush.msra.mxu0 0.0
    %1200 = vmatpush.msra.mxu0 0.0
    %1201 = vmatpush.msra.mxu0 0.0
    %1202 = vmatpush.msra.mxu0 0.0
    %1203 = vmatpush.msra.mxu0 0.0
    %1204 = vmatpush.msra.mxu0 %v1159
    %1205 = vmatpush.msra.mxu0 %v1158
    %1206 = vmatpush.msra.mxu0 %v1157
    %1207 = vmatpush.msra.mxu0 %v1156
    %1208 = vmatpush.msra.mxu0 %v1155
    %1209 = vmatpush.msra.mxu0 %v1154
    %1210 = vmatpush.msra.mxu0 %v1153
    %1211 = vmatpush.msra.mxu0 %v1152
    %1212 = vmatmul.f32.gmra.mxu0 %v1194
    %v1213 = vpop.f32.mrf.mxu0
    %v1214 = vadd.f32 %v1191, %v1213
    %1215 = vdwg.mxu0
    %v1216 = vld [vmem:[#allocation5 + $0x2] sm:$0xff]
    %s1217 = scalar_lea.vmem [#allocation15], 128
    %v1218 = vld [vmem:[%s1217] sm:$0xff]
    %v1219 = vld [vmem:[%s1217 + $0x8] sm:$0xff]
    %v1220 = vld [vmem:[%s1217 + $0x10] sm:$0xff]
    %v1221 = vld [vmem:[%s1217 + $0x18] sm:$0xff]
    %v1222 = vld [vmem:[%s1217 + $0x20] sm:$0xff]
    %v1223 = vld [vmem:[%s1217 + $0x28] sm:$0xff]
    %v1224 = vld [vmem:[%s1217 + $0x30] sm:$0xff]
    %v1225 = vld [vmem:[%s1217 + $0x38] sm:$0xff]
    %v1227 = vsel %vm194, %v1216, 0
    %1229 = vmatpush.msra.mxu0 0.0
    %1230 = vmatpush.msra.mxu0 0.0
    %1231 = vmatpush.msra.mxu0 0.0
    %1232 = vmatpush.msra.mxu0 0.0
    %1233 = vmatpush.msra.mxu0 0.0
    %1234 = vmatpush.msra.mxu0 0.0
    %1235 = vmatpush.msra.mxu0 0.0
    %1236 = vmatpush.msra.mxu0 0.0
    %1237 = vmatpush.msra.mxu0 %v1225
    %1238 = vmatpush.msra.mxu0 %v1224
    %1239 = vmatpush.msra.mxu0 %v1223
    %1240 = vmatpush.msra.mxu0 %v1222
    %1241 = vmatpush.msra.mxu0 %v1221
    %1242 = vmatpush.msra.mxu0 %v1220
    %1243 = vmatpush.msra.mxu0 %v1219
    %1244 = vmatpush.msra.mxu0 %v1218
    %1245 = vmatmul.f32.gmra.mxu0 %v1227
    %v1246 = vpop.f32.mrf.mxu0
    %v1247 = vadd.f32 0.0, %v1246
    %1248 = vdwg.mxu0
    %v1249 = vadd.f32 %v1214, %v1247
    %v1250 = vld [vmem:[%s8] sm:$0x1]
    %v1252 = vperm.slane %v1250, 0
    %v1254 = vadd.f32 %v1249, %v1252
    %v1255 = vmul.f32 %v1254, 0.5
    %v1256 = vmul.f32 %v1254, 0.044715
    %v1257 = vmul.f32 %v1256, %v1254
    %v1258 = vmul.f32 %v1257, %v1254
    %v1259 = vadd.f32 %v1254, %v1258
    %v1260 = vmul.f32 %v1259, 0.7978846
    %v1261 = vtanh.pop %v1260
    %v1262 = vadd.f32 %v1261, 1.0
    %v1263 = vmul.f32 %v1255, %v1262
    %v1264 = vld [vmem:[%s1123] sm:$0xff]
    %v1265 = vld [vmem:[%s1123 + $0x1] sm:$0xff]
    %v1267 = vsel %vm194, %v1265, 0
    %1269 = vmatpush.msra.mxu0 0.0
    %1270 = vmatpush.msra.mxu0 0.0
    %1271 = vmatpush.msra.mxu0 0.0
    %1272 = vmatpush.msra.mxu0 0.0
    %1273 = vmatpush.msra.mxu0 0.0
    %1274 = vmatpush.msra.mxu0 0.0
    %1275 = vmatpush.msra.mxu0 0.0
    %1276 = vmatpush.msra.mxu0 0.0
    %1277 = vmatpush.msra.mxu0 %v1169
    %1278 = vmatpush.msra.mxu0 %v1168
    %1279 = vmatpush.msra.mxu0 %v1167
    %1280 = vmatpush.msra.mxu0 %v1166
    %1281 = vmatpush.msra.mxu0 %v1165
    %1282 = vmatpush.msra.mxu0 %v1164
    %1283 = vmatpush.msra.mxu0 %v1163
    %1284 = vmatpush.msra.mxu0 %v1162
    %1285 = vmatmul.f32.gmra.mxu0 %v1267
    %v1286 = vpop.f32.mrf.mxu0
    %v1287 = vadd.f32 0.0, %v1286
    %1288 = vdwg.mxu0
    %v1290 = vsel %vm194, %v1264, 0
    %1292 = vmatpush.msra.mxu0 0.0
    %1293 = vmatpush.msra.mxu0 0.0
    %1294 = vmatpush.msra.mxu0 0.0
    %1295 = vmatpush.msra.mxu0 0.0
    %1296 = vmatpush.msra.mxu0 0.0
    %1297 = vmatpush.msra.mxu0 0.0
    %1298 = vmatpush.msra.mxu0 0.0
    %1299 = vmatpush.msra.mxu0 0.0
    %1300 = vmatpush.msra.mxu0 %v1159
    %1301 = vmatpush.msra.mxu0 %v1158
    %1302 = vmatpush.msra.mxu0 %v1157
    %1303 = vmatpush.msra.mxu0 %v1156
    %1304 = vmatpush.msra.mxu0 %v1155
    %1305 = vmatpush.msra.mxu0 %v1154
    %1306 = vmatpush.msra.mxu0 %v1153
    %1307 = vmatpush.msra.mxu0 %v1152
    %1308 = vmatmul.f32.gmra.mxu0 %v1290
    %v1309 = vpop.f32.mrf.mxu0
    %v1310 = vadd.f32 %v1287, %v1309
    %1311 = vdwg.mxu0
    %v1312 = vld [vmem:[%s1123 + $0x2] sm:$0xff]
    %v1314 = vsel %vm194, %v1312, 0
    %1316 = vmatpush.msra.mxu0 0.0
    %1317 = vmatpush.msra.mxu0 0.0
    %1318 = vmatpush.msra.mxu0 0.0
    %1319 = vmatpush.msra.mxu0 0.0
    %1320 = vmatpush.msra.mxu0 0.0
    %1321 = vmatpush.msra.mxu0 0.0
    %1322 = vmatpush.msra.mxu0 0.0
    %1323 = vmatpush.msra.mxu0 0.0
    %1324 = vmatpush.msra.mxu0 %v1225
    %1325 = vmatpush.msra.mxu0 %v1224
    %1326 = vmatpush.msra.mxu0 %v1223
    %1327 = vmatpush.msra.mxu0 %v1222
    %1328 = vmatpush.msra.mxu0 %v1221
    %1329 = vmatpush.msra.mxu0 %v1220
    %1330 = vmatpush.msra.mxu0 %v1219
    %1331 = vmatpush.msra.mxu0 %v1218
    %1332 = vmatmul.f32.gmra.mxu0 %v1314
    %v1333 = vpop.f32.mrf.mxu0
    %v1334 = vadd.f32 0.0, %v1333
    %1335 = vdwg.mxu0
    %v1336 = vadd.f32 %v1310, %v1334
    %v1337 = vadd.f32 %v1336, %v1252
    %v1338 = vmul.f32 %v1337, 0.5
    %v1339 = vmul.f32 %v1337, 0.044715
    %v1340 = vmul.f32 %v1339, %v1337
    %v1341 = vmul.f32 %v1340, %v1337
    %v1342 = vadd.f32 %v1337, %v1341
    %v1343 = vmul.f32 %v1342, 0.7978846
    %v1344 = vtanh.pop %v1343
    %v1345 = vadd.f32 %v1344, 1.0
    %v1346 = vmul.f32 %v1338, %v1345
    %1347 = vst [vmem:[#allocation6] sm:$0x1] 0.0
    %1348 = vst [vmem:[#allocation6 + $0x1] sm:$0xff] %v1263
    %1349 = vst [vmem:[#allocation6 + $0x9] sm:$0x1] 0.0
    %s1350 = scalar_lea.vmem [#allocation6], 16
    %1351 = vst [vmem:[%s1350] sm:$0x1] 0.0
    %1352 = vst [vmem:[%s1350 + $0x1] sm:$0xff] %v1346
    %1353 = vst [vmem:[%s1350 + $0x9] sm:$0x1] 0.0
    %v1354 = vld [vmem:[#allocation6] sm:$0xff]
    %v1355 = vld [vmem:[#allocation16] sm:$0xff]
    %v1356 = vld [vmem:[#allocation16 + $0x8] sm:$0xff]
    %v1357 = vld [vmem:[#allocation16 + $0x10] sm:$0xff]
    %v1358 = vld [vmem:[#allocation16 + $0x18] sm:$0xff]
    %v1359 = vld [vmem:[#allocation16 + $0x20] sm:$0xff]
    %v1360 = vld [vmem:[#allocation16 + $0x28] sm:$0xff]
    %v1361 = vld [vmem:[#allocation16 + $0x30] sm:$0xff]
    %v1362 = vld [vmem:[#allocation16 + $0x38] sm:$0xff]
    %v1363 = vld [vmem:[#allocation16 + $0x40] sm:$0xff]
    %v1364 = vld [vmem:[#allocation16 + $0x48] sm:$0xff]
    %v1365 = vld [vmem:[#allocation16 + $0x50] sm:$0xff]
    %v1366 = vld [vmem:[#allocation16 + $0x58] sm:$0xff]
    %v1367 = vld [vmem:[#allocation16 + $0x60] sm:$0xff]
    %v1368 = vld [vmem:[#allocation16 + $0x68] sm:$0xff]
    %v1369 = vld [vmem:[#allocation16 + $0x70] sm:$0xff]
    %v1370 = vld [vmem:[#allocation16 + $0x78] sm:$0xff]
    %v1371 = vld [vmem:[#allocation6 + $0x1] sm:$0xff]
    %s1372 = scalar_lea.vmem [#allocation16], 128
    %v1373 = vld [vmem:[%s1372] sm:$0xff]
    %v1374 = vld [vmem:[%s1372 + $0x8] sm:$0xff]
    %v1375 = vld [vmem:[%s1372 + $0x10] sm:$0xff]
    %v1376 = vld [vmem:[%s1372 + $0x18] sm:$0xff]
    %v1377 = vld [vmem:[%s1372 + $0x20] sm:$0xff]
    %v1378 = vld [vmem:[%s1372 + $0x28] sm:$0xff]
    %v1379 = vld [vmem:[%s1372 + $0x30] sm:$0xff]
    %v1380 = vld [vmem:[%s1372 + $0x38] sm:$0xff]
    %v1381 = vld [vmem:[%s1372 + $0x40] sm:$0xff]
    %v1382 = vld [vmem:[%s1372 + $0x48] sm:$0xff]
    %v1383 = vld [vmem:[%s1372 + $0x50] sm:$0xff]
    %v1384 = vld [vmem:[%s1372 + $0x58] sm:$0xff]
    %v1385 = vld [vmem:[%s1372 + $0x60] sm:$0xff]
    %v1386 = vld [vmem:[%s1372 + $0x68] sm:$0xff]
    %v1387 = vld [vmem:[%s1372 + $0x70] sm:$0xff]
    %v1388 = vld [vmem:[%s1372 + $0x78] sm:$0xff]
    %1389 = vmatpush.msra.mxu0 %v1388
    %1390 = vmatpush.msra.mxu0 %v1387
    %1391 = vmatpush.msra.mxu0 %v1386
    %1392 = vmatpush.msra.mxu0 %v1385
    %1393 = vmatpush.msra.mxu0 %v1384
    %1394 = vmatpush.msra.mxu0 %v1383
    %1395 = vmatpush.msra.mxu0 %v1382
    %1396 = vmatpush.msra.mxu0 %v1381
    %1397 = vmatpush.msra.mxu0 %v1380
    %1398 = vmatpush.msra.mxu0 %v1379
    %1399 = vmatpush.msra.mxu0 %v1378
    %1400 = vmatpush.msra.mxu0 %v1377
    %1401 = vmatpush.msra.mxu0 %v1376
    %1402 = vmatpush.msra.mxu0 %v1375
    %1403 = vmatpush.msra.mxu0 %v1374
    %1404 = vmatpush.msra.mxu0 %v1373
    %1405 = vmatmul.f32.gmra.mxu0 %v1371
    %v1406 = vpop.f32.mrf.mxu0
    %v1407 = vadd.f32 0.0, %v1406
    %1408 = vdwg.mxu0
    %1409 = vmatpush.msra.mxu0 %v1370
    %1410 = vmatpush.msra.mxu0 %v1369
    %1411 = vmatpush.msra.mxu0 %v1368
    %1412 = vmatpush.msra.mxu0 %v1367
    %1413 = vmatpush.msra.mxu0 %v1366
    %1414 = vmatpush.msra.mxu0 %v1365
    %1415 = vmatpush.msra.mxu0 %v1364
    %1416 = vmatpush.msra.mxu0 %v1363
    %1417 = vmatpush.msra.mxu0 %v1362
    %1418 = vmatpush.msra.mxu0 %v1361
    %1419 = vmatpush.msra.mxu0 %v1360
    %1420 = vmatpush.msra.mxu0 %v1359
    %1421 = vmatpush.msra.mxu0 %v1358
    %1422 = vmatpush.msra.mxu0 %v1357
    %1423 = vmatpush.msra.mxu0 %v1356
    %1424 = vmatpush.msra.mxu0 %v1355
    %1425 = vmatmul.f32.gmra.mxu0 %v1354
    %v1426 = vpop.f32.mrf.mxu0
    %v1427 = vadd.f32 %v1407, %v1426
    %1428 = vdwg.mxu0
    %v1429 = vld [vmem:[#allocation6 + $0x2] sm:$0xff]
    %s1430 = scalar_lea.vmem [#allocation16], 256
    %v1431 = vld [vmem:[%s1430] sm:$0xff]
    %v1432 = vld [vmem:[%s1430 + $0x8] sm:$0xff]
    %v1433 = vld [vmem:[%s1430 + $0x10] sm:$0xff]
    %v1434 = vld [vmem:[%s1430 + $0x18] sm:$0xff]
    %v1435 = vld [vmem:[%s1430 + $0x20] sm:$0xff]
    %v1436 = vld [vmem:[%s1430 + $0x28] sm:$0xff]
    %v1437 = vld [vmem:[%s1430 + $0x30] sm:$0xff]
    %v1438 = vld [vmem:[%s1430 + $0x38] sm:$0xff]
    %v1439 = vld [vmem:[%s1430 + $0x40] sm:$0xff]
    %v1440 = vld [vmem:[%s1430 + $0x48] sm:$0xff]
    %v1441 = vld [vmem:[%s1430 + $0x50] sm:$0xff]
    %v1442 = vld [vmem:[%s1430 + $0x58] sm:$0xff]
    %v1443 = vld [vmem:[%s1430 + $0x60] sm:$0xff]
    %v1444 = vld [vmem:[%s1430 + $0x68] sm:$0xff]
    %v1445 = vld [vmem:[%s1430 + $0x70] sm:$0xff]
    %v1446 = vld [vmem:[%s1430 + $0x78] sm:$0xff]
    %1447 = vmatpush.msra.mxu0 %v1446
    %1448 = vmatpush.msra.mxu0 %v1445
    %1449 = vmatpush.msra.mxu0 %v1444
    %1450 = vmatpush.msra.mxu0 %v1443
    %1451 = vmatpush.msra.mxu0 %v1442
    %1452 = vmatpush.msra.mxu0 %v1441
    %1453 = vmatpush.msra.mxu0 %v1440
    %1454 = vmatpush.msra.mxu0 %v1439
    %1455 = vmatpush.msra.mxu0 %v1438
    %1456 = vmatpush.msra.mxu0 %v1437
    %1457 = vmatpush.msra.mxu0 %v1436
    %1458 = vmatpush.msra.mxu0 %v1435
    %1459 = vmatpush.msra.mxu0 %v1434
    %1460 = vmatpush.msra.mxu0 %v1433
    %1461 = vmatpush.msra.mxu0 %v1432
    %1462 = vmatpush.msra.mxu0 %v1431
    %1463 = vmatmul.f32.gmra.mxu0 %v1429
    %v1464 = vpop.f32.mrf.mxu0
    %v1465 = vadd.f32 0.0, %v1464
    %1466 = vdwg.mxu0
    %v1467 = vadd.f32 %v1427, %v1465
    %v1468 = vld [vmem:[%s10] sm:$0x1]
    %v1470 = vperm.slane %v1468, 0
    %v1472 = vadd.f32 %v1467, %v1470
    %v1473 = vmul.f32 %v1472, 0.5
    %v1474 = vmul.f32 %v1472, 0.044715
    %v1475 = vmul.f32 %v1474, %v1472
    %v1476 = vmul.f32 %v1475, %v1472
    %v1477 = vadd.f32 %v1472, %v1476
    %v1478 = vmul.f32 %v1477, 0.7978846
    %v1479 = vtanh.pop %v1478
    %v1480 = vadd.f32 %v1479, 1.0
    %v1481 = vmul.f32 %v1473, %v1480
    %v1482 = vld [vmem:[%s1350] sm:$0xff]
    %v1483 = vld [vmem:[%s1350 + $0x1] sm:$0xff]
    %1484 = vmatpush.msra.mxu0 %v1388
    %1485 = vmatpush.msra.mxu0 %v1387
    %1486 = vmatpush.msra.mxu0 %v1386
    %1487 = vmatpush.msra.mxu0 %v1385
    %1488 = vmatpush.msra.mxu0 %v1384
    %1489 = vmatpush.msra.mxu0 %v1383
    %1490 = vmatpush.msra.mxu0 %v1382
    %1491 = vmatpush.msra.mxu0 %v1381
    %1492 = vmatpush.msra.mxu0 %v1380
    %1493 = vmatpush.msra.mxu0 %v1379
    %1494 = vmatpush.msra.mxu0 %v1378
    %1495 = vmatpush.msra.mxu0 %v1377
    %1496 = vmatpush.msra.mxu0 %v1376
    %1497 = vmatpush.msra.mxu0 %v1375
    %1498 = vmatpush.msra.mxu0 %v1374
    %1499 = vmatpush.msra.mxu0 %v1373
    %1500 = vmatmul.f32.gmra.mxu0 %v1483
    %v1501 = vpop.f32.mrf.mxu0
    %v1502 = vadd.f32 0.0, %v1501
    %1503 = vdwg.mxu0
    %1504 = vmatpush.msra.mxu0 %v1370
    %1505 = vmatpush.msra.mxu0 %v1369
    %1506 = vmatpush.msra.mxu0 %v1368
    %1507 = vmatpush.msra.mxu0 %v1367
    %1508 = vmatpush.msra.mxu0 %v1366
    %1509 = vmatpush.msra.mxu0 %v1365
    %1510 = vmatpush.msra.mxu0 %v1364
    %1511 = vmatpush.msra.mxu0 %v1363
    %1512 = vmatpush.msra.mxu0 %v1362
    %1513 = vmatpush.msra.mxu0 %v1361
    %1514 = vmatpush.msra.mxu0 %v1360
    %1515 = vmatpush.msra.mxu0 %v1359
    %1516 = vmatpush.msra.mxu0 %v1358
    %1517 = vmatpush.msra.mxu0 %v1357
    %1518 = vmatpush.msra.mxu0 %v1356
    %1519 = vmatpush.msra.mxu0 %v1355
    %1520 = vmatmul.f32.gmra.mxu0 %v1482
    %v1521 = vpop.f32.mrf.mxu0
    %v1522 = vadd.f32 %v1502, %v1521
    %1523 = vdwg.mxu0
    %v1524 = vld [vmem:[%s1350 + $0x2] sm:$0xff]
    %1525 = vmatpush.msra.mxu0 %v1446
    %1526 = vmatpush.msra.mxu0 %v1445
    %1527 = vmatpush.msra.mxu0 %v1444
    %1528 = vmatpush.msra.mxu0 %v1443
    %1529 = vmatpush.msra.mxu0 %v1442
    %1530 = vmatpush.msra.mxu0 %v1441
    %1531 = vmatpush.msra.mxu0 %v1440
    %1532 = vmatpush.msra.mxu0 %v1439
    %1533 = vmatpush.msra.mxu0 %v1438
    %1534 = vmatpush.msra.mxu0 %v1437
    %1535 = vmatpush.msra.mxu0 %v1436
    %1536 = vmatpush.msra.mxu0 %v1435
    %1537 = vmatpush.msra.mxu0 %v1434
    %1538 = vmatpush.msra.mxu0 %v1433
    %1539 = vmatpush.msra.mxu0 %v1432
    %1540 = vmatpush.msra.mxu0 %v1431
    %1541 = vmatmul.f32.gmra.mxu0 %v1524
    %v1542 = vpop.f32.mrf.mxu0
    %v1543 = vadd.f32 0.0, %v1542
    %1544 = vdwg.mxu0
    %v1545 = vadd.f32 %v1522, %v1543
    %v1546 = vadd.f32 %v1545, %v1470
    %v1547 = vmul.f32 %v1546, 0.5
    %v1548 = vmul.f32 %v1546, 0.044715
    %v1549 = vmul.f32 %v1548, %v1546
    %v1550 = vmul.f32 %v1549, %v1546
    %v1551 = vadd.f32 %v1546, %v1550
    %v1552 = vmul.f32 %v1551, 0.7978846
    %v1553 = vtanh.pop %v1552
    %v1554 = vadd.f32 %v1553, 1.0
    %v1555 = vmul.f32 %v1547, %v1554
    %1556 = vst [vmem:[#allocation7] sm:$0x1] 0.0
    %1557 = vst [vmem:[#allocation7 + $0x1] sm:$0xff] %v1481
    %1558 = vst [vmem:[#allocation7 + $0x9] sm:$0x1] 0.0
    %s1559 = scalar_lea.vmem [#allocation7], 16
    %1560 = vst [vmem:[%s1559] sm:$0x1] 0.0
    %1561 = vst [vmem:[%s1559 + $0x1] sm:$0xff] %v1555
    %1562 = vst [vmem:[%s1559 + $0x9] sm:$0x1] 0.0
    %v1563 = vld [vmem:[#allocation7] sm:$0xff]
    %v1564 = vld [vmem:[#allocation18] sm:$0xff]
    %v1565 = vld [vmem:[#allocation18 + $0x8] sm:$0xff]
    %v1566 = vld [vmem:[#allocation18 + $0x10] sm:$0xff]
    %v1567 = vld [vmem:[#allocation18 + $0x18] sm:$0xff]
    %v1568 = vld [vmem:[#allocation18 + $0x20] sm:$0xff]
    %v1569 = vld [vmem:[#allocation18 + $0x28] sm:$0xff]
    %v1570 = vld [vmem:[#allocation18 + $0x30] sm:$0xff]
    %v1571 = vld [vmem:[#allocation18 + $0x38] sm:$0xff]
    %v1572 = vld [vmem:[#allocation18 + $0x40] sm:$0xff]
    %v1573 = vld [vmem:[#allocation18 + $0x48] sm:$0xff]
    %v1574 = vld [vmem:[#allocation18 + $0x50] sm:$0xff]
    %v1575 = vld [vmem:[#allocation18 + $0x58] sm:$0xff]
    %v1576 = vld [vmem:[#allocation18 + $0x60] sm:$0xff]
    %v1577 = vld [vmem:[#allocation18 + $0x68] sm:$0xff]
    %v1578 = vld [vmem:[#allocation18 + $0x70] sm:$0xff]
    %v1579 = vld [vmem:[#allocation18 + $0x78] sm:$0xff]
    %v1580 = vld [vmem:[#allocation7 + $0x1] sm:$0xff]
    %s1581 = scalar_lea.vmem [#allocation18], 128
    %v1582 = vld [vmem:[%s1581] sm:$0xff]
    %v1583 = vld [vmem:[%s1581 + $0x8] sm:$0xff]
    %v1584 = vld [vmem:[%s1581 + $0x10] sm:$0xff]
    %v1585 = vld [vmem:[%s1581 + $0x18] sm:$0xff]
    %v1586 = vld [vmem:[%s1581 + $0x20] sm:$0xff]
    %v1587 = vld [vmem:[%s1581 + $0x28] sm:$0xff]
    %v1588 = vld [vmem:[%s1581 + $0x30] sm:$0xff]
    %v1589 = vld [vmem:[%s1581 + $0x38] sm:$0xff]
    %v1590 = vld [vmem:[%s1581 + $0x40] sm:$0xff]
    %v1591 = vld [vmem:[%s1581 + $0x48] sm:$0xff]
    %v1592 = vld [vmem:[%s1581 + $0x50] sm:$0xff]
    %v1593 = vld [vmem:[%s1581 + $0x58] sm:$0xff]
    %v1594 = vld [vmem:[%s1581 + $0x60] sm:$0xff]
    %v1595 = vld [vmem:[%s1581 + $0x68] sm:$0xff]
    %v1596 = vld [vmem:[%s1581 + $0x70] sm:$0xff]
    %v1597 = vld [vmem:[%s1581 + $0x78] sm:$0xff]
    %1598 = vmatpush.msra.mxu0 %v1597
    %1599 = vmatpush.msra.mxu0 %v1596
    %1600 = vmatpush.msra.mxu0 %v1595
    %1601 = vmatpush.msra.mxu0 %v1594
    %1602 = vmatpush.msra.mxu0 %v1593
    %1603 = vmatpush.msra.mxu0 %v1592
    %1604 = vmatpush.msra.mxu0 %v1591
    %1605 = vmatpush.msra.mxu0 %v1590
    %1606 = vmatpush.msra.mxu0 %v1589
    %1607 = vmatpush.msra.mxu0 %v1588
    %1608 = vmatpush.msra.mxu0 %v1587
    %1609 = vmatpush.msra.mxu0 %v1586
    %1610 = vmatpush.msra.mxu0 %v1585
    %1611 = vmatpush.msra.mxu0 %v1584
    %1612 = vmatpush.msra.mxu0 %v1583
    %1613 = vmatpush.msra.mxu0 %v1582
    %1614 = vmatmul.f32.gmra.mxu0 %v1580
    %v1615 = vpop.f32.mrf.mxu0
    %v1616 = vadd.f32 0.0, %v1615
    %1617 = vdwg.mxu0
    %1618 = vmatpush.msra.mxu0 %v1579
    %1619 = vmatpush.msra.mxu0 %v1578
    %1620 = vmatpush.msra.mxu0 %v1577
    %1621 = vmatpush.msra.mxu0 %v1576
    %1622 = vmatpush.msra.mxu0 %v1575
    %1623 = vmatpush.msra.mxu0 %v1574
    %1624 = vmatpush.msra.mxu0 %v1573
    %1625 = vmatpush.msra.mxu0 %v1572
    %1626 = vmatpush.msra.mxu0 %v1571
    %1627 = vmatpush.msra.mxu0 %v1570
    %1628 = vmatpush.msra.mxu0 %v1569
    %1629 = vmatpush.msra.mxu0 %v1568
    %1630 = vmatpush.msra.mxu0 %v1567
    %1631 = vmatpush.msra.mxu0 %v1566
    %1632 = vmatpush.msra.mxu0 %v1565
    %1633 = vmatpush.msra.mxu0 %v1564
    %1634 = vmatmul.f32.gmra.mxu0 %v1563
    %v1635 = vpop.f32.mrf.mxu0
    %v1636 = vadd.f32 %v1616, %v1635
    %1637 = vdwg.mxu0
    %v1638 = vld [vmem:[#allocation7 + $0x2] sm:$0xff]
    %s1639 = scalar_lea.vmem [#allocation18], 256
    %v1640 = vld [vmem:[%s1639] sm:$0xff]
    %v1641 = vld [vmem:[%s1639 + $0x8] sm:$0xff]
    %v1642 = vld [vmem:[%s1639 + $0x10] sm:$0xff]
    %v1643 = vld [vmem:[%s1639 + $0x18] sm:$0xff]
    %v1644 = vld [vmem:[%s1639 + $0x20] sm:$0xff]
    %v1645 = vld [vmem:[%s1639 + $0x28] sm:$0xff]
    %v1646 = vld [vmem:[%s1639 + $0x30] sm:$0xff]
    %v1647 = vld [vmem:[%s1639 + $0x38] sm:$0xff]
    %v1648 = vld [vmem:[%s1639 + $0x40] sm:$0xff]
    %v1649 = vld [vmem:[%s1639 + $0x48] sm:$0xff]
    %v1650 = vld [vmem:[%s1639 + $0x50] sm:$0xff]
    %v1651 = vld [vmem:[%s1639 + $0x58] sm:$0xff]
    %v1652 = vld [vmem:[%s1639 + $0x60] sm:$0xff]
    %v1653 = vld [vmem:[%s1639 + $0x68] sm:$0xff]
    %v1654 = vld [vmem:[%s1639 + $0x70] sm:$0xff]
    %v1655 = vld [vmem:[%s1639 + $0x78] sm:$0xff]
    %1656 = vmatpush.msra.mxu0 %v1655
    %1657 = vmatpush.msra.mxu0 %v1654
    %1658 = vmatpush.msra.mxu0 %v1653
    %1659 = vmatpush.msra.mxu0 %v1652
    %1660 = vmatpush.msra.mxu0 %v1651
    %1661 = vmatpush.msra.mxu0 %v1650
    %1662 = vmatpush.msra.mxu0 %v1649
    %1663 = vmatpush.msra.mxu0 %v1648
    %1664 = vmatpush.msra.mxu0 %v1647
    %1665 = vmatpush.msra.mxu0 %v1646
    %1666 = vmatpush.msra.mxu0 %v1645
    %1667 = vmatpush.msra.mxu0 %v1644
    %1668 = vmatpush.msra.mxu0 %v1643
    %1669 = vmatpush.msra.mxu0 %v1642
    %1670 = vmatpush.msra.mxu0 %v1641
    %1671 = vmatpush.msra.mxu0 %v1640
    %1672 = vmatmul.f32.gmra.mxu0 %v1638
    %v1673 = vpop.f32.mrf.mxu0
    %v1674 = vadd.f32 0.0, %v1673
    %1675 = vdwg.mxu0
    %v1676 = vadd.f32 %v1636, %v1674
    %v1677 = vld [vmem:[%s12] sm:$0x1]
    %v1679 = vperm.slane %v1677, 0
    %v1681 = vadd.f32 %v1676, %v1679
    %v1682 = vmul.f32 %v1681, 0.5
    %v1683 = vmul.f32 %v1681, 0.044715
    %v1684 = vmul.f32 %v1683, %v1681
    %v1685 = vmul.f32 %v1684, %v1681
    %v1686 = vadd.f32 %v1681, %v1685
    %v1687 = vmul.f32 %v1686, 0.7978846
    %v1688 = vtanh.pop %v1687
    %v1689 = vadd.f32 %v1688, 1.0
    %v1690 = vmul.f32 %v1682, %v1689
    %1692 = vrot.lane.b32.xlu0 %v1690, 64
    %v1693 = vpop.permute.xlu0 %1692
    %v1695 = vmax.f32 %v1690, %v1693
    %v1697 = vrot.slane %v1695, 2
    %v1698 = vrot.slane %v1695, 4
    %v1699 = vrot.slane %v1695, 6
    %v1703 = vrot.slane %v1695, 7
    %v1704 = vrot.slane %v1703, 2
    %v1705 = vrot.slane %v1697, 7
    %v1706 = vrot.slane %v1705, 2
    %v1707 = vrot.slane %v1698, 7
    %v1708 = vrot.slane %v1707, 2
    %v1709 = vrot.slane %v1699, 7
    %v1710 = vrot.slane %v1709, 2
    %v1715 = vmax.f32 %v1695, %v1704
    %v1716 = vmax.f32 %v1697, %v1706
    %v1717 = vmax.f32 %v1698, %v1708
    %v1718 = vmax.f32 %v1699, %v1710
    %v1719 = vld [vmem:[%s1559] sm:$0xff]
    %v1720 = vld [vmem:[%s1559 + $0x1] sm:$0xff]
    %1721 = vmatpush.msra.mxu0 %v1597
    %1722 = vmatpush.msra.mxu0 %v1596
    %1723 = vmatpush.msra.mxu0 %v1595
    %1724 = vmatpush.msra.mxu0 %v1594
    %1725 = vmatpush.msra.mxu0 %v1593
    %1726 = vmatpush.msra.mxu0 %v1592
    %1727 = vmatpush.msra.mxu0 %v1591
    %1728 = vmatpush.msra.mxu0 %v1590
    %1729 = vmatpush.msra.mxu0 %v1589
    %1730 = vmatpush.msra.mxu0 %v1588
    %1731 = vmatpush.msra.mxu0 %v1587
    %1732 = vmatpush.msra.mxu0 %v1586
    %1733 = vmatpush.msra.mxu0 %v1585
    %1734 = vmatpush.msra.mxu0 %v1584
    %1735 = vmatpush.msra.mxu0 %v1583
    %1736 = vmatpush.msra.mxu0 %v1582
    %1737 = vmatmul.f32.gmra.mxu0 %v1720
    %v1738 = vpop.f32.mrf.mxu0
    %v1739 = vadd.f32 0.0, %v1738
    %1740 = vdwg.mxu0
    %1741 = vmatpush.msra.mxu0 %v1579
    %1742 = vmatpush.msra.mxu0 %v1578
    %1743 = vmatpush.msra.mxu0 %v1577
    %1744 = vmatpush.msra.mxu0 %v1576
    %1745 = vmatpush.msra.mxu0 %v1575
    %1746 = vmatpush.msra.mxu0 %v1574
    %1747 = vmatpush.msra.mxu0 %v1573
    %1748 = vmatpush.msra.mxu0 %v1572
    %1749 = vmatpush.msra.mxu0 %v1571
    %1750 = vmatpush.msra.mxu0 %v1570
    %1751 = vmatpush.msra.mxu0 %v1569
    %1752 = vmatpush.msra.mxu0 %v1568
    %1753 = vmatpush.msra.mxu0 %v1567
    %1754 = vmatpush.msra.mxu0 %v1566
    %1755 = vmatpush.msra.mxu0 %v1565
    %1756 = vmatpush.msra.mxu0 %v1564
    %1757 = vmatmul.f32.gmra.mxu0 %v1719
    %v1758 = vpop.f32.mrf.mxu0
    %v1759 = vadd.f32 %v1739, %v1758
    %1760 = vdwg.mxu0
    %v1761 = vld [vmem:[%s1559 + $0x2] sm:$0xff]
    %1762 = vmatpush.msra.mxu0 %v1655
    %1763 = vmatpush.msra.mxu0 %v1654
    %1764 = vmatpush.msra.mxu0 %v1653
    %1765 = vmatpush.msra.mxu0 %v1652
    %1766 = vmatpush.msra.mxu0 %v1651
    %1767 = vmatpush.msra.mxu0 %v1650
    %1768 = vmatpush.msra.mxu0 %v1649
    %1769 = vmatpush.msra.mxu0 %v1648
    %1770 = vmatpush.msra.mxu0 %v1647
    %1771 = vmatpush.msra.mxu0 %v1646
    %1772 = vmatpush.msra.mxu0 %v1645
    %1773 = vmatpush.msra.mxu0 %v1644
    %1774 = vmatpush.msra.mxu0 %v1643
    %1775 = vmatpush.msra.mxu0 %v1642
    %1776 = vmatpush.msra.mxu0 %v1641
    %1777 = vmatpush.msra.mxu0 %v1640
    %1778 = vmatmul.f32.gmra.mxu0 %v1761
    %v1779 = vpop.f32.mrf.mxu0
    %v1780 = vadd.f32 0.0, %v1779
    %1781 = vdwg.mxu0
    %v1782 = vadd.f32 %v1759, %v1780
    %v1783 = vadd.f32 %v1782, %v1679
    %v1784 = vmul.f32 %v1783, 0.5
    %v1785 = vmul.f32 %v1783, 0.044715
    %v1786 = vmul.f32 %v1785, %v1783
    %v1787 = vmul.f32 %v1786, %v1783
    %v1788 = vadd.f32 %v1783, %v1787
    %v1789 = vmul.f32 %v1788, 0.7978846
    %v1790 = vtanh.pop %v1789
    %v1791 = vadd.f32 %v1790, 1.0
    %v1792 = vmul.f32 %v1784, %v1791
    %1794 = vrot.lane.b32.xlu0 %v1792, 64
    %v1795 = vpop.permute.xlu0 %1794
    %v1797 = vmax.f32 %v1792, %v1795
    %v1799 = vrot.slane %v1797, 2
    %v1800 = vrot.slane %v1797, 4
    %v1801 = vrot.slane %v1797, 6
    %v1805 = vrot.slane %v1797, 7
    %v1806 = vrot.slane %v1805, 2
    %v1807 = vrot.slane %v1799, 7
    %v1808 = vrot.slane %v1807, 2
    %v1809 = vrot.slane %v1800, 7
    %v1810 = vrot.slane %v1809, 2
    %v1811 = vrot.slane %v1801, 7
    %v1812 = vrot.slane %v1811, 2
    %v1817 = vmax.f32 %v1797, %v1806
    %v1818 = vmax.f32 %v1799, %v1808
    %v1819 = vmax.f32 %v1800, %v1810
    %v1820 = vmax.f32 %v1801, %v1812
    %1821 = vst.msk [vmem:[#allocation8] sm:$0x1] %vm192, 0.0
    %v1826 = vperm.slane %v1715, 0
    %v1827 = vperm.slane %v1716, 0
    %v1828 = vperm.slane %v1717, 0
    %v1829 = vperm.slane %v1718, 0
    %v1830 = vsel %vm1106, %v1827, %v1826
    %v1831 = vsel %vm1108, %v1828, %v1830
    %v1832 = vsel %vm1110, %v1829, %v1831
    %vm1834 = vcmask 519168
    %1835 = vst.msk [vmem:[#allocation8 + $0x1] sm:$0xf] %vm1834, %v1832
    %1836 = vst.msk [vmem:[#allocation8 + $0x5] sm:$0x1] %vm192, 0.0
    %s1837 = scalar_lea.vmem [#allocation8], 8
    %1838 = vst.msk [vmem:[%s1837] sm:$0x1] %vm192, 0.0
    %v1843 = vperm.slane %v1817, 0
    %v1844 = vperm.slane %v1818, 0
    %v1845 = vperm.slane %v1819, 0
    %v1846 = vperm.slane %v1820, 0
    %v1847 = vsel %vm1106, %v1844, %v1843
    %v1848 = vsel %vm1108, %v1845, %v1847
    %v1849 = vsel %vm1110, %v1846, %v1848
    %1851 = vst.msk [vmem:[%s1837 + $0x1] sm:$0xf] %vm1834, %v1849
    %1852 = vst.msk [vmem:[%s1837 + $0x5] sm:$0x1] %vm192, 0.0
    %v1853 = vld [vmem:[#allocation8] sm:$0xf]
    %v1854 = vld [vmem:[#allocation19] sm:$0xff]
    %v1855 = vld [vmem:[#allocation19 + $0x8] sm:$0xff]
    %v1856 = vld [vmem:[#allocation19 + $0x10] sm:$0xff]
    %v1857 = vld [vmem:[#allocation19 + $0x18] sm:$0xff]
    %v1858 = vld [vmem:[#allocation19 + $0x20] sm:$0xff]
    %v1859 = vld [vmem:[#allocation19 + $0x28] sm:$0xff]
    %v1860 = vld [vmem:[#allocation19 + $0x30] sm:$0xff]
    %v1861 = vld [vmem:[#allocation19 + $0x38] sm:$0xff]
    %v1862 = vld [vmem:[#allocation8 + $0x1] sm:$0xf]
    %s1863 = scalar_lea.vmem [#allocation19], 64
    %v1864 = vld [vmem:[%s1863] sm:$0xff]
    %v1865 = vld [vmem:[%s1863 + $0x8] sm:$0xff]
    %v1866 = vld [vmem:[%s1863 + $0x10] sm:$0xff]
    %v1867 = vld [vmem:[%s1863 + $0x18] sm:$0xff]
    %v1868 = vld [vmem:[%s1863 + $0x20] sm:$0xff]
    %v1869 = vld [vmem:[%s1863 + $0x28] sm:$0xff]
    %v1870 = vld [vmem:[%s1863 + $0x30] sm:$0xff]
    %v1871 = vld [vmem:[%s1863 + $0x38] sm:$0xff]
    %v1873 = vsel %vm194, %v1862, 0
    %1875 = vmatpush.msra.mxu0 0.0
    %1876 = vmatpush.msra.mxu0 0.0
    %1877 = vmatpush.msra.mxu0 0.0
    %1878 = vmatpush.msra.mxu0 0.0
    %1879 = vmatpush.msra.mxu0 0.0
    %1880 = vmatpush.msra.mxu0 0.0
    %1881 = vmatpush.msra.mxu0 0.0
    %1882 = vmatpush.msra.mxu0 0.0
    %1883 = vmatpush.msra.mxu0 %v1871
    %1884 = vmatpush.msra.mxu0 %v1870
    %1885 = vmatpush.msra.mxu0 %v1869
    %1886 = vmatpush.msra.mxu0 %v1868
    %1887 = vmatpush.msra.mxu0 %v1867
    %1888 = vmatpush.msra.mxu0 %v1866
    %1889 = vmatpush.msra.mxu0 %v1865
    %1890 = vmatpush.msra.mxu0 %v1864
    %1891 = vmatmul.f32.gmra.mxu0 %v1873
    %v1892 = vpop.f32.mrf.mxu0
    %v1893 = vadd.f32 0.0, %v1892
    %1894 = vdwg.mxu0
    %v1896 = vsel %vm194, %v1853, 0
    %1898 = vmatpush.msra.mxu0 0.0
    %1899 = vmatpush.msra.mxu0 0.0
    %1900 = vmatpush.msra.mxu0 0.0
    %1901 = vmatpush.msra.mxu0 0.0
    %1902 = vmatpush.msra.mxu0 0.0
    %1903 = vmatpush.msra.mxu0 0.0
    %1904 = vmatpush.msra.mxu0 0.0
    %1905 = vmatpush.msra.mxu0 0.0
    %1906 = vmatpush.msra.mxu0 %v1861
    %1907 = vmatpush.msra.mxu0 %v1860
    %1908 = vmatpush.msra.mxu0 %v1859
    %1909 = vmatpush.msra.mxu0 %v1858
    %1910 = vmatpush.msra.mxu0 %v1857
    %1911 = vmatpush.msra.mxu0 %v1856
    %1912 = vmatpush.msra.mxu0 %v1855
    %1913 = vmatpush.msra.mxu0 %v1854
    %1914 = vmatmul.f32.gmra.mxu0 %v1896
    %v1915 = vpop.f32.mrf.mxu0
    %v1916 = vadd.f32 %v1893, %v1915
    %1917 = vdwg.mxu0
    %v1918 = vld [vmem:[#allocation8 + $0x2] sm:$0xf]
    %s1919 = scalar_lea.vmem [#allocation19], 128
    %v1920 = vld [vmem:[%s1919] sm:$0xff]
    %v1921 = vld [vmem:[%s1919 + $0x8] sm:$0xff]
    %v1922 = vld [vmem:[%s1919 + $0x10] sm:$0xff]
    %v1923 = vld [vmem:[%s1919 + $0x18] sm:$0xff]
    %v1924 = vld [vmem:[%s1919 + $0x20] sm:$0xff]
    %v1925 = vld [vmem:[%s1919 + $0x28] sm:$0xff]
    %v1926 = vld [vmem:[%s1919 + $0x30] sm:$0xff]
    %v1927 = vld [vmem:[%s1919 + $0x38] sm:$0xff]
    %v1929 = vsel %vm194, %v1918, 0
    %1931 = vmatpush.msra.mxu0 0.0
    %1932 = vmatpush.msra.mxu0 0.0
    %1933 = vmatpush.msra.mxu0 0.0
    %1934 = vmatpush.msra.mxu0 0.0
    %1935 = vmatpush.msra.mxu0 0.0
    %1936 = vmatpush.msra.mxu0 0.0
    %1937 = vmatpush.msra.mxu0 0.0
    %1938 = vmatpush.msra.mxu0 0.0
    %1939 = vmatpush.msra.mxu0 %v1927
    %1940 = vmatpush.msra.mxu0 %v1926
    %1941 = vmatpush.msra.mxu0 %v1925
    %1942 = vmatpush.msra.mxu0 %v1924
    %1943 = vmatpush.msra.mxu0 %v1923
    %1944 = vmatpush.msra.mxu0 %v1922
    %1945 = vmatpush.msra.mxu0 %v1921
    %1946 = vmatpush.msra.mxu0 %v1920
    %1947 = vmatmul.f32.gmra.mxu0 %v1929
    %v1948 = vpop.f32.mrf.mxu0
    %v1949 = vadd.f32 0.0, %v1948
    %1950 = vdwg.mxu0
    %v1951 = vadd.f32 %v1916, %v1949
    %v1952 = vld [vmem:[%s14] sm:$0x1]
    %v1954 = vperm.slane %v1952, 0
    %v1956 = vadd.f32 %v1951, %v1954
    %v1957 = vmul.f32 %v1956, 0.5
    %v1958 = vmul.f32 %v1956, 0.044715
    %v1959 = vmul.f32 %v1958, %v1956
    %v1960 = vmul.f32 %v1959, %v1956
    %v1961 = vadd.f32 %v1956, %v1960
    %v1962 = vmul.f32 %v1961, 0.7978846
    %v1963 = vtanh.pop %v1962
    %v1964 = vadd.f32 %v1963, 1.0
    %v1965 = vmul.f32 %v1957, %v1964
    %v1966 = vld [vmem:[%s1837] sm:$0xf]
    %v1967 = vld [vmem:[%s1837 + $0x1] sm:$0xf]
    %v1969 = vsel %vm194, %v1967, 0
    %1971 = vmatpush.msra.mxu0 0.0
    %1972 = vmatpush.msra.mxu0 0.0
    %1973 = vmatpush.msra.mxu0 0.0
    %1974 = vmatpush.msra.mxu0 0.0
    %1975 = vmatpush.msra.mxu0 0.0
    %1976 = vmatpush.msra.mxu0 0.0
    %1977 = vmatpush.msra.mxu0 0.0
    %1978 = vmatpush.msra.mxu0 0.0
    %1979 = vmatpush.msra.mxu0 %v1871
    %1980 = vmatpush.msra.mxu0 %v1870
    %1981 = vmatpush.msra.mxu0 %v1869
    %1982 = vmatpush.msra.mxu0 %v1868
    %1983 = vmatpush.msra.mxu0 %v1867
    %1984 = vmatpush.msra.mxu0 %v1866
    %1985 = vmatpush.msra.mxu0 %v1865
    %1986 = vmatpush.msra.mxu0 %v1864
    %1987 = vmatmul.f32.gmra.mxu0 %v1969
    %v1988 = vpop.f32.mrf.mxu0
    %v1989 = vadd.f32 0.0, %v1988
    %1990 = vdwg.mxu0
    %v1992 = vsel %vm194, %v1966, 0
    %1994 = vmatpush.msra.mxu0 0.0
    %1995 = vmatpush.msra.mxu0 0.0
    %1996 = vmatpush.msra.mxu0 0.0
    %1997 = vmatpush.msra.mxu0 0.0
    %1998 = vmatpush.msra.mxu0 0.0
    %1999 = vmatpush.msra.mxu0 0.0
    %2000 = vmatpush.msra.mxu0 0.0
    %2001 = vmatpush.msra.mxu0 0.0
    %2002 = vmatpush.msra.mxu0 %v1861
    %2003 = vmatpush.msra.mxu0 %v1860
    %2004 = vmatpush.msra.mxu0 %v1859
    %2005 = vmatpush.msra.mxu0 %v1858
    %2006 = vmatpush.msra.mxu0 %v1857
    %2007 = vmatpush.msra.mxu0 %v1856
    %2008 = vmatpush.msra.mxu0 %v1855
    %2009 = vmatpush.msra.mxu0 %v1854
    %2010 = vmatmul.f32.gmra.mxu0 %v1992
    %v2011 = vpop.f32.mrf.mxu0
    %v2012 = vadd.f32 %v1989, %v2011
    %2013 = vdwg.mxu0
    %v2014 = vld [vmem:[%s1837 + $0x2] sm:$0xf]
    %v2016 = vsel %vm194, %v2014, 0
    %2018 = vmatpush.msra.mxu0 0.0
    %2019 = vmatpush.msra.mxu0 0.0
    %2020 = vmatpush.msra.mxu0 0.0
    %2021 = vmatpush.msra.mxu0 0.0
    %2022 = vmatpush.msra.mxu0 0.0
    %2023 = vmatpush.msra.mxu0 0.0
    %2024 = vmatpush.msra.mxu0 0.0
    %2025 = vmatpush.msra.mxu0 0.0
    %2026 = vmatpush.msra.mxu0 %v1927
    %2027 = vmatpush.msra.mxu0 %v1926
    %2028 = vmatpush.msra.mxu0 %v1925
    %2029 = vmatpush.msra.mxu0 %v1924
    %2030 = vmatpush.msra.mxu0 %v1923
    %2031 = vmatpush.msra.mxu0 %v1922
    %2032 = vmatpush.msra.mxu0 %v1921
    %2033 = vmatpush.msra.mxu0 %v1920
    %2034 = vmatmul.f32.gmra.mxu0 %v2016
    %v2035 = vpop.f32.mrf.mxu0
    %v2036 = vadd.f32 0.0, %v2035
    %2037 = vdwg.mxu0
    %v2038 = vadd.f32 %v2012, %v2036
    %v2039 = vadd.f32 %v2038, %v1954
    %v2040 = vmul.f32 %v2039, 0.5
    %v2041 = vmul.f32 %v2039, 0.044715
    %v2042 = vmul.f32 %v2041, %v2039
    %v2043 = vmul.f32 %v2042, %v2039
    %v2044 = vadd.f32 %v2039, %v2043
    %v2045 = vmul.f32 %v2044, 0.7978846
    %v2046 = vtanh.pop %v2045
    %v2047 = vadd.f32 %v2046, 1.0
    %v2048 = vmul.f32 %v2040, %v2047
    %2049 = vst [vmem:[#allocation9] sm:$0x1] 0.0
    %2050 = vst [vmem:[#allocation9 + $0x1] sm:$0xf] %v1965
    %2051 = vst [vmem:[#allocation9 + $0x5] sm:$0x1] 0.0
    %s2052 = scalar_lea.vmem [#allocation9], 8
    %2053 = vst [vmem:[%s2052] sm:$0x1] 0.0
    %2054 = vst [vmem:[%s2052 + $0x1] sm:$0xf] %v2048
    %2055 = vst [vmem:[%s2052 + $0x5] sm:$0x1] 0.0
    %v2056 = vld [vmem:[#allocation9] sm:$0xf]
    %v2057 = vld [vmem:[#allocation21] sm:$0xff]
    %v2058 = vld [vmem:[#allocation21 + $0x8] sm:$0xff]
    %v2059 = vld [vmem:[#allocation21 + $0x10] sm:$0xff]
    %v2060 = vld [vmem:[#allocation21 + $0x18] sm:$0xff]
    %v2061 = vld [vmem:[#allocation21 + $0x20] sm:$0xff]
    %v2062 = vld [vmem:[#allocation21 + $0x28] sm:$0xff]
    %v2063 = vld [vmem:[#allocation21 + $0x30] sm:$0xff]
    %v2064 = vld [vmem:[#allocation21 + $0x38] sm:$0xff]
    %v2065 = vld [vmem:[#allocation21 + $0x40] sm:$0xff]
    %v2066 = vld [vmem:[#allocation21 + $0x48] sm:$0xff]
    %v2067 = vld [vmem:[#allocation21 + $0x50] sm:$0xff]
    %v2068 = vld [vmem:[#allocation21 + $0x58] sm:$0xff]
    %v2069 = vld [vmem:[#allocation21 + $0x60] sm:$0xff]
    %v2070 = vld [vmem:[#allocation21 + $0x68] sm:$0xff]
    %v2071 = vld [vmem:[#allocation21 + $0x70] sm:$0xff]
    %v2072 = vld [vmem:[#allocation21 + $0x78] sm:$0xff]
    %v2073 = vld [vmem:[#allocation9 + $0x1] sm:$0xf]
    %s2074 = scalar_lea.vmem [#allocation21], 128
    %v2075 = vld [vmem:[%s2074] sm:$0xff]
    %v2076 = vld [vmem:[%s2074 + $0x8] sm:$0xff]
    %v2077 = vld [vmem:[%s2074 + $0x10] sm:$0xff]
    %v2078 = vld [vmem:[%s2074 + $0x18] sm:$0xff]
    %v2079 = vld [vmem:[%s2074 + $0x20] sm:$0xff]
    %v2080 = vld [vmem:[%s2074 + $0x28] sm:$0xff]
    %v2081 = vld [vmem:[%s2074 + $0x30] sm:$0xff]
    %v2082 = vld [vmem:[%s2074 + $0x38] sm:$0xff]
    %v2083 = vld [vmem:[%s2074 + $0x40] sm:$0xff]
    %v2084 = vld [vmem:[%s2074 + $0x48] sm:$0xff]
    %v2085 = vld [vmem:[%s2074 + $0x50] sm:$0xff]
    %v2086 = vld [vmem:[%s2074 + $0x58] sm:$0xff]
    %v2087 = vld [vmem:[%s2074 + $0x60] sm:$0xff]
    %v2088 = vld [vmem:[%s2074 + $0x68] sm:$0xff]
    %v2089 = vld [vmem:[%s2074 + $0x70] sm:$0xff]
    %v2090 = vld [vmem:[%s2074 + $0x78] sm:$0xff]
    %2091 = vmatpush.msra.mxu0 %v2090
    %2092 = vmatpush.msra.mxu0 %v2089
    %2093 = vmatpush.msra.mxu0 %v2088
    %2094 = vmatpush.msra.mxu0 %v2087
    %2095 = vmatpush.msra.mxu0 %v2086
    %2096 = vmatpush.msra.mxu0 %v2085
    %2097 = vmatpush.msra.mxu0 %v2084
    %2098 = vmatpush.msra.mxu0 %v2083
    %2099 = vmatpush.msra.mxu0 %v2082
    %2100 = vmatpush.msra.mxu0 %v2081
    %2101 = vmatpush.msra.mxu0 %v2080
    %2102 = vmatpush.msra.mxu0 %v2079
    %2103 = vmatpush.msra.mxu0 %v2078
    %2104 = vmatpush.msra.mxu0 %v2077
    %2105 = vmatpush.msra.mxu0 %v2076
    %2106 = vmatpush.msra.mxu0 %v2075
    %2107 = vmatmul.f32.gmra.mxu0 %v2073
    %v2108 = vpop.f32.mrf.mxu0
    %v2109 = vadd.f32 0.0, %v2108
    %2110 = vdwg.mxu0
    %2111 = vmatpush.msra.mxu0 %v2072
    %2112 = vmatpush.msra.mxu0 %v2071
    %2113 = vmatpush.msra.mxu0 %v2070
    %2114 = vmatpush.msra.mxu0 %v2069
    %2115 = vmatpush.msra.mxu0 %v2068
    %2116 = vmatpush.msra.mxu0 %v2067
    %2117 = vmatpush.msra.mxu0 %v2066
    %2118 = vmatpush.msra.mxu0 %v2065
    %2119 = vmatpush.msra.mxu0 %v2064
    %2120 = vmatpush.msra.mxu0 %v2063
    %2121 = vmatpush.msra.mxu0 %v2062
    %2122 = vmatpush.msra.mxu0 %v2061
    %2123 = vmatpush.msra.mxu0 %v2060
    %2124 = vmatpush.msra.mxu0 %v2059
    %2125 = vmatpush.msra.mxu0 %v2058
    %2126 = vmatpush.msra.mxu0 %v2057
    %2127 = vmatmul.f32.gmra.mxu0 %v2056
    %v2128 = vpop.f32.mrf.mxu0
    %v2129 = vadd.f32 %v2109, %v2128
    %2130 = vdwg.mxu0
    %v2131 = vld [vmem:[#allocation9 + $0x2] sm:$0xf]
    %s2132 = scalar_lea.vmem [#allocation21], 256
    %v2133 = vld [vmem:[%s2132] sm:$0xff]
    %v2134 = vld [vmem:[%s2132 + $0x8] sm:$0xff]
    %v2135 = vld [vmem:[%s2132 + $0x10] sm:$0xff]
    %v2136 = vld [vmem:[%s2132 + $0x18] sm:$0xff]
    %v2137 = vld [vmem:[%s2132 + $0x20] sm:$0xff]
    %v2138 = vld [vmem:[%s2132 + $0x28] sm:$0xff]
    %v2139 = vld [vmem:[%s2132 + $0x30] sm:$0xff]
    %v2140 = vld [vmem:[%s2132 + $0x38] sm:$0xff]
    %v2141 = vld [vmem:[%s2132 + $0x40] sm:$0xff]
    %v2142 = vld [vmem:[%s2132 + $0x48] sm:$0xff]
    %v2143 = vld [vmem:[%s2132 + $0x50] sm:$0xff]
    %v2144 = vld [vmem:[%s2132 + $0x58] sm:$0xff]
    %v2145 = vld [vmem:[%s2132 + $0x60] sm:$0xff]
    %v2146 = vld [vmem:[%s2132 + $0x68] sm:$0xff]
    %v2147 = vld [vmem:[%s2132 + $0x70] sm:$0xff]
    %v2148 = vld [vmem:[%s2132 + $0x78] sm:$0xff]
    %2149 = vmatpush.msra.mxu0 %v2148
    %2150 = vmatpush.msra.mxu0 %v2147
    %2151 = vmatpush.msra.mxu0 %v2146
    %2152 = vmatpush.msra.mxu0 %v2145
    %2153 = vmatpush.msra.mxu0 %v2144
    %2154 = vmatpush.msra.mxu0 %v2143
    %2155 = vmatpush.msra.mxu0 %v2142
    %2156 = vmatpush.msra.mxu0 %v2141
    %2157 = vmatpush.msra.mxu0 %v2140
    %2158 = vmatpush.msra.mxu0 %v2139
    %2159 = vmatpush.msra.mxu0 %v2138
    %2160 = vmatpush.msra.mxu0 %v2137
    %2161 = vmatpush.msra.mxu0 %v2136
    %2162 = vmatpush.msra.mxu0 %v2135
    %2163 = vmatpush.msra.mxu0 %v2134
    %2164 = vmatpush.msra.mxu0 %v2133
    %2165 = vmatmul.f32.gmra.mxu0 %v2131
    %v2166 = vpop.f32.mrf.mxu0
    %v2167 = vadd.f32 0.0, %v2166
    %2168 = vdwg.mxu0
    %v2169 = vadd.f32 %v2129, %v2167
    %v2170 = vld [vmem:[%s16] sm:$0x1]
    %v2172 = vperm.slane %v2170, 0
    %v2174 = vadd.f32 %v2169, %v2172
    %v2175 = vmul.f32 %v2174, 0.5
    %v2176 = vmul.f32 %v2174, 0.044715
    %v2177 = vmul.f32 %v2176, %v2174
    %v2178 = vmul.f32 %v2177, %v2174
    %v2179 = vadd.f32 %v2174, %v2178
    %v2180 = vmul.f32 %v2179, 0.7978846
    %v2181 = vtanh.pop %v2180
    %v2182 = vadd.f32 %v2181, 1.0
    %v2183 = vmul.f32 %v2175, %v2182
    %v2184 = vld [vmem:[%s2052] sm:$0xf]
    %v2185 = vld [vmem:[%s2052 + $0x1] sm:$0xf]
    %2186 = vmatpush.msra.mxu0 %v2090
    %2187 = vmatpush.msra.mxu0 %v2089
    %2188 = vmatpush.msra.mxu0 %v2088
    %2189 = vmatpush.msra.mxu0 %v2087
    %2190 = vmatpush.msra.mxu0 %v2086
    %2191 = vmatpush.msra.mxu0 %v2085
    %2192 = vmatpush.msra.mxu0 %v2084
    %2193 = vmatpush.msra.mxu0 %v2083
    %2194 = vmatpush.msra.mxu0 %v2082
    %2195 = vmatpush.msra.mxu0 %v2081
    %2196 = vmatpush.msra.mxu0 %v2080
    %2197 = vmatpush.msra.mxu0 %v2079
    %2198 = vmatpush.msra.mxu0 %v2078
    %2199 = vmatpush.msra.mxu0 %v2077
    %2200 = vmatpush.msra.mxu0 %v2076
    %2201 = vmatpush.msra.mxu0 %v2075
    %2202 = vmatmul.f32.gmra.mxu0 %v2185
    %v2203 = vpop.f32.mrf.mxu0
    %v2204 = vadd.f32 0.0, %v2203
    %2205 = vdwg.mxu0
    %2206 = vmatpush.msra.mxu0 %v2072
    %2207 = vmatpush.msra.mxu0 %v2071
    %2208 = vmatpush.msra.mxu0 %v2070
    %2209 = vmatpush.msra.mxu0 %v2069
    %2210 = vmatpush.msra.mxu0 %v2068
    %2211 = vmatpush.msra.mxu0 %v2067
    %2212 = vmatpush.msra.mxu0 %v2066
    %2213 = vmatpush.msra.mxu0 %v2065
    %2214 = vmatpush.msra.mxu0 %v2064
    %2215 = vmatpush.msra.mxu0 %v2063
    %2216 = vmatpush.msra.mxu0 %v2062
    %2217 = vmatpush.msra.mxu0 %v2061
    %2218 = vmatpush.msra.mxu0 %v2060
    %2219 = vmatpush.msra.mxu0 %v2059
    %2220 = vmatpush.msra.mxu0 %v2058
    %2221 = vmatpush.msra.mxu0 %v2057
    %2222 = vmatmul.f32.gmra.mxu0 %v2184
    %v2223 = vpop.f32.mrf.mxu0
    %v2224 = vadd.f32 %v2204, %v2223
    %2225 = vdwg.mxu0
    %v2226 = vld [vmem:[%s2052 + $0x2] sm:$0xf]
    %2227 = vmatpush.msra.mxu0 %v2148
    %2228 = vmatpush.msra.mxu0 %v2147
    %2229 = vmatpush.msra.mxu0 %v2146
    %2230 = vmatpush.msra.mxu0 %v2145
    %2231 = vmatpush.msra.mxu0 %v2144
    %2232 = vmatpush.msra.mxu0 %v2143
    %2233 = vmatpush.msra.mxu0 %v2142
    %2234 = vmatpush.msra.mxu0 %v2141
    %2235 = vmatpush.msra.mxu0 %v2140
    %2236 = vmatpush.msra.mxu0 %v2139
    %2237 = vmatpush.msra.mxu0 %v2138
    %2238 = vmatpush.msra.mxu0 %v2137
    %2239 = vmatpush.msra.mxu0 %v2136
    %2240 = vmatpush.msra.mxu0 %v2135
    %2241 = vmatpush.msra.mxu0 %v2134
    %2242 = vmatpush.msra.mxu0 %v2133
    %2243 = vmatmul.f32.gmra.mxu0 %v2226
    %v2244 = vpop.f32.mrf.mxu0
    %v2245 = vadd.f32 0.0, %v2244
    %2246 = vdwg.mxu0
    %v2247 = vadd.f32 %v2224, %v2245
    %v2248 = vadd.f32 %v2247, %v2172
    %v2249 = vmul.f32 %v2248, 0.5
    %v2250 = vmul.f32 %v2248, 0.044715
    %v2251 = vmul.f32 %v2250, %v2248
    %v2252 = vmul.f32 %v2251, %v2248
    %v2253 = vadd.f32 %v2248, %v2252
    %v2254 = vmul.f32 %v2253, 0.7978846
    %v2255 = vtanh.pop %v2254
    %v2256 = vadd.f32 %v2255, 1.0
    %v2257 = vmul.f32 %v2249, %v2256
    %2258 = vst [vmem:[#allocation10] sm:$0x1] 0.0
    %2259 = vst [vmem:[#allocation10 + $0x1] sm:$0xf] %v2183
    %2260 = vst [vmem:[#allocation10 + $0x5] sm:$0x1] 0.0
    %s2261 = scalar_lea.vmem [#allocation10], 8
    %2262 = vst [vmem:[%s2261] sm:$0x1] 0.0
    %2263 = vst [vmem:[%s2261 + $0x1] sm:$0xf] %v2257
    %2264 = vst [vmem:[%s2261 + $0x5] sm:$0x1] 0.0
    %v2265 = vld [vmem:[#allocation10] sm:$0xf]
    %v2266 = vld [vmem:[#allocation22] sm:$0xff]
    %v2267 = vld [vmem:[#allocation22 + $0x8] sm:$0xff]
    %v2268 = vld [vmem:[#allocation22 + $0x10] sm:$0xff]
    %v2269 = vld [vmem:[#allocation22 + $0x18] sm:$0xff]
    %v2270 = vld [vmem:[#allocation22 + $0x20] sm:$0xff]
    %v2271 = vld [vmem:[#allocation22 + $0x28] sm:$0xff]
    %v2272 = vld [vmem:[#allocation22 + $0x30] sm:$0xff]
    %v2273 = vld [vmem:[#allocation22 + $0x38] sm:$0xff]
    %v2274 = vld [vmem:[#allocation22 + $0x40] sm:$0xff]
    %v2275 = vld [vmem:[#allocation22 + $0x48] sm:$0xff]
    %v2276 = vld [vmem:[#allocation22 + $0x50] sm:$0xff]
    %v2277 = vld [vmem:[#allocation22 + $0x58] sm:$0xff]
    %v2278 = vld [vmem:[#allocation22 + $0x60] sm:$0xff]
    %v2279 = vld [vmem:[#allocation22 + $0x68] sm:$0xff]
    %v2280 = vld [vmem:[#allocation22 + $0x70] sm:$0xff]
    %v2281 = vld [vmem:[#allocation22 + $0x78] sm:$0xff]
    %v2282 = vld [vmem:[#allocation10 + $0x1] sm:$0xf]
    %s2283 = scalar_lea.vmem [#allocation22], 128
    %v2284 = vld [vmem:[%s2283] sm:$0xff]
    %v2285 = vld [vmem:[%s2283 + $0x8] sm:$0xff]
    %v2286 = vld [vmem:[%s2283 + $0x10] sm:$0xff]
    %v2287 = vld [vmem:[%s2283 + $0x18] sm:$0xff]
    %v2288 = vld [vmem:[%s2283 + $0x20] sm:$0xff]
    %v2289 = vld [vmem:[%s2283 + $0x28] sm:$0xff]
    %v2290 = vld [vmem:[%s2283 + $0x30] sm:$0xff]
    %v2291 = vld [vmem:[%s2283 + $0x38] sm:$0xff]
    %v2292 = vld [vmem:[%s2283 + $0x40] sm:$0xff]
    %v2293 = vld [vmem:[%s2283 + $0x48] sm:$0xff]
    %v2294 = vld [vmem:[%s2283 + $0x50] sm:$0xff]
    %v2295 = vld [vmem:[%s2283 + $0x58] sm:$0xff]
    %v2296 = vld [vmem:[%s2283 + $0x60] sm:$0xff]
    %v2297 = vld [vmem:[%s2283 + $0x68] sm:$0xff]
    %v2298 = vld [vmem:[%s2283 + $0x70] sm:$0xff]
    %v2299 = vld [vmem:[%s2283 + $0x78] sm:$0xff]
    %2300 = vmatpush.msra.mxu0 %v2299
    %2301 = vmatpush.msra.mxu0 %v2298
    %2302 = vmatpush.msra.mxu0 %v2297
    %2303 = vmatpush.msra.mxu0 %v2296
    %2304 = vmatpush.msra.mxu0 %v2295
    %2305 = vmatpush.msra.mxu0 %v2294
    %2306 = vmatpush.msra.mxu0 %v2293
    %2307 = vmatpush.msra.mxu0 %v2292
    %2308 = vmatpush.msra.mxu0 %v2291
    %2309 = vmatpush.msra.mxu0 %v2290
    %2310 = vmatpush.msra.mxu0 %v2289
    %2311 = vmatpush.msra.mxu0 %v2288
    %2312 = vmatpush.msra.mxu0 %v2287
    %2313 = vmatpush.msra.mxu0 %v2286
    %2314 = vmatpush.msra.mxu0 %v2285
    %2315 = vmatpush.msra.mxu0 %v2284
    %2316 = vmatmul.f32.gmra.mxu0 %v2282
    %v2317 = vpop.f32.mrf.mxu0
    %v2318 = vadd.f32 0.0, %v2317
    %2319 = vdwg.mxu0
    %2320 = vmatpush.msra.mxu0 %v2281
    %2321 = vmatpush.msra.mxu0 %v2280
    %2322 = vmatpush.msra.mxu0 %v2279
    %2323 = vmatpush.msra.mxu0 %v2278
    %2324 = vmatpush.msra.mxu0 %v2277
    %2325 = vmatpush.msra.mxu0 %v2276
    %2326 = vmatpush.msra.mxu0 %v2275
    %2327 = vmatpush.msra.mxu0 %v2274
    %2328 = vmatpush.msra.mxu0 %v2273
    %2329 = vmatpush.msra.mxu0 %v2272
    %2330 = vmatpush.msra.mxu0 %v2271
    %2331 = vmatpush.msra.mxu0 %v2270
    %2332 = vmatpush.msra.mxu0 %v2269
    %2333 = vmatpush.msra.mxu0 %v2268
    %2334 = vmatpush.msra.mxu0 %v2267
    %2335 = vmatpush.msra.mxu0 %v2266
    %2336 = vmatmul.f32.gmra.mxu0 %v2265
    %v2337 = vpop.f32.mrf.mxu0
    %v2338 = vadd.f32 %v2318, %v2337
    %2339 = vdwg.mxu0
    %v2340 = vld [vmem:[#allocation10 + $0x2] sm:$0xf]
    %s2341 = scalar_lea.vmem [#allocation22], 256
    %v2342 = vld [vmem:[%s2341] sm:$0xff]
    %v2343 = vld [vmem:[%s2341 + $0x8] sm:$0xff]
    %v2344 = vld [vmem:[%s2341 + $0x10] sm:$0xff]
    %v2345 = vld [vmem:[%s2341 + $0x18] sm:$0xff]
    %v2346 = vld [vmem:[%s2341 + $0x20] sm:$0xff]
    %v2347 = vld [vmem:[%s2341 + $0x28] sm:$0xff]
    %v2348 = vld [vmem:[%s2341 + $0x30] sm:$0xff]
    %v2349 = vld [vmem:[%s2341 + $0x38] sm:$0xff]
    %v2350 = vld [vmem:[%s2341 + $0x40] sm:$0xff]
    %v2351 = vld [vmem:[%s2341 + $0x48] sm:$0xff]
    %v2352 = vld [vmem:[%s2341 + $0x50] sm:$0xff]
    %v2353 = vld [vmem:[%s2341 + $0x58] sm:$0xff]
    %v2354 = vld [vmem:[%s2341 + $0x60] sm:$0xff]
    %v2355 = vld [vmem:[%s2341 + $0x68] sm:$0xff]
    %v2356 = vld [vmem:[%s2341 + $0x70] sm:$0xff]
    %v2357 = vld [vmem:[%s2341 + $0x78] sm:$0xff]
    %2358 = vmatpush.msra.mxu0 %v2357
    %2359 = vmatpush.msra.mxu0 %v2356
    %2360 = vmatpush.msra.mxu0 %v2355
    %2361 = vmatpush.msra.mxu0 %v2354
    %2362 = vmatpush.msra.mxu0 %v2353
    %2363 = vmatpush.msra.mxu0 %v2352
    %2364 = vmatpush.msra.mxu0 %v2351
    %2365 = vmatpush.msra.mxu0 %v2350
    %2366 = vmatpush.msra.mxu0 %v2349
    %2367 = vmatpush.msra.mxu0 %v2348
    %2368 = vmatpush.msra.mxu0 %v2347
    %2369 = vmatpush.msra.mxu0 %v2346
    %2370 = vmatpush.msra.mxu0 %v2345
    %2371 = vmatpush.msra.mxu0 %v2344
    %2372 = vmatpush.msra.mxu0 %v2343
    %2373 = vmatpush.msra.mxu0 %v2342
    %2374 = vmatmul.f32.gmra.mxu0 %v2340
    %v2375 = vpop.f32.mrf.mxu0
    %v2376 = vadd.f32 0.0, %v2375
    %2377 = vdwg.mxu0
    %v2378 = vadd.f32 %v2338, %v2376
    %v2379 = vld [vmem:[%s18] sm:$0x1]
    %v2381 = vperm.slane %v2379, 0
    %v2383 = vadd.f32 %v2378, %v2381
    %v2384 = vmul.f32 %v2383, 0.5
    %v2385 = vmul.f32 %v2383, 0.044715
    %v2386 = vmul.f32 %v2385, %v2383
    %v2387 = vmul.f32 %v2386, %v2383
    %v2388 = vadd.f32 %v2383, %v2387
    %v2389 = vmul.f32 %v2388, 0.7978846
    %v2390 = vtanh.pop %v2389
    %v2391 = vadd.f32 %v2390, 1.0
    %v2392 = vmul.f32 %v2384, %v2391
    %v2393 = vld [vmem:[%s2261] sm:$0xf]
    %v2394 = vld [vmem:[%s2261 + $0x1] sm:$0xf]
    %2395 = vmatpush.msra.mxu0 %v2299
    %2396 = vmatpush.msra.mxu0 %v2298
    %2397 = vmatpush.msra.mxu0 %v2297
    %2398 = vmatpush.msra.mxu0 %v2296
    %2399 = vmatpush.msra.mxu0 %v2295
    %2400 = vmatpush.msra.mxu0 %v2294
    %2401 = vmatpush.msra.mxu0 %v2293
    %2402 = vmatpush.msra.mxu0 %v2292
    %2403 = vmatpush.msra.mxu0 %v2291
    %2404 = vmatpush.msra.mxu0 %v2290
    %2405 = vmatpush.msra.mxu0 %v2289
    %2406 = vmatpush.msra.mxu0 %v2288
    %2407 = vmatpush.msra.mxu0 %v2287
    %2408 = vmatpush.msra.mxu0 %v2286
    %2409 = vmatpush.msra.mxu0 %v2285
    %2410 = vmatpush.msra.mxu0 %v2284
    %2411 = vmatmul.f32.gmra.mxu0 %v2394
    %v2412 = vpop.f32.mrf.mxu0
    %v2413 = vadd.f32 0.0, %v2412
    %2414 = vdwg.mxu0
    %2415 = vmatpush.msra.mxu0 %v2281
    %2416 = vmatpush.msra.mxu0 %v2280
    %2417 = vmatpush.msra.mxu0 %v2279
    %2418 = vmatpush.msra.mxu0 %v2278
    %2419 = vmatpush.msra.mxu0 %v2277
    %2420 = vmatpush.msra.mxu0 %v2276
    %2421 = vmatpush.msra.mxu0 %v2275
    %2422 = vmatpush.msra.mxu0 %v2274
    %2423 = vmatpush.msra.mxu0 %v2273
    %2424 = vmatpush.msra.mxu0 %v2272
    %2425 = vmatpush.msra.mxu0 %v2271
    %2426 = vmatpush.msra.mxu0 %v2270
    %2427 = vmatpush.msra.mxu0 %v2269
    %2428 = vmatpush.msra.mxu0 %v2268
    %2429 = vmatpush.msra.mxu0 %v2267
    %2430 = vmatpush.msra.mxu0 %v2266
    %2431 = vmatmul.f32.gmra.mxu0 %v2393
    %v2432 = vpop.f32.mrf.mxu0
    %v2433 = vadd.f32 %v2413, %v2432
    %2434 = vdwg.mxu0
    %v2435 = vld [vmem:[%s2261 + $0x2] sm:$0xf]
    %2436 = vmatpush.msra.mxu0 %v2357
    %2437 = vmatpush.msra.mxu0 %v2356
    %2438 = vmatpush.msra.mxu0 %v2355
    %2439 = vmatpush.msra.mxu0 %v2354
    %2440 = vmatpush.msra.mxu0 %v2353
    %2441 = vmatpush.msra.mxu0 %v2352
    %2442 = vmatpush.msra.mxu0 %v2351
    %2443 = vmatpush.msra.mxu0 %v2350
    %2444 = vmatpush.msra.mxu0 %v2349
    %2445 = vmatpush.msra.mxu0 %v2348
    %2446 = vmatpush.msra.mxu0 %v2347
    %2447 = vmatpush.msra.mxu0 %v2346
    %2448 = vmatpush.msra.mxu0 %v2345
    %2449 = vmatpush.msra.mxu0 %v2344
    %2450 = vmatpush.msra.mxu0 %v2343
    %2451 = vmatpush.msra.mxu0 %v2342
    %2452 = vmatmul.f32.gmra.mxu0 %v2435
    %v2453 = vpop.f32.mrf.mxu0
    %v2454 = vadd.f32 0.0, %v2453
    %2455 = vdwg.mxu0
    %v2456 = vadd.f32 %v2433, %v2454
    %v2457 = vadd.f32 %v2456, %v2381
    %v2458 = vmul.f32 %v2457, 0.5
    %v2459 = vmul.f32 %v2457, 0.044715
    %v2460 = vmul.f32 %v2459, %v2457
    %v2461 = vmul.f32 %v2460, %v2457
    %v2462 = vadd.f32 %v2457, %v2461
    %v2463 = vmul.f32 %v2462, 0.7978846
    %v2464 = vtanh.pop %v2463
    %v2465 = vadd.f32 %v2464, 1.0
    %v2466 = vmul.f32 %v2458, %v2465
    %2467 = vst [vmem:[%s19] sm:$0xf] %v2392
    %s2468 = scalar_lea.vmem %s19, 4
    %2469 = vst [vmem:[%s2468] sm:$0xf] %v2466
    // Predicated region
    $region110: #{forward.1} parent=1 // pred_check
      _
    $region111: #{forward.1} parent=1 // pred_check_branch
      %2471 = sbr.rel (0) target = $region113
    $region112: #{forward.1} parent=1 // pred_region
      _
    $region113: #{forward.1} parent=1 // pred_fallthru
      _
    // Predicated region
    $region114: #{forward.1} parent=1 // pred_check
      _
    $region115: #{forward.1} parent=1 // pred_check_branch
      %2473 = sbr.rel (0) target = $region117
    $region116: #{forward.1} parent=1 // pred_region
      _
    $region117: #{forward.1} parent=1 // pred_fallthru
      _
    %2474 = vsyncpa [#allocation12], 1
    %2475 = vsyncpa [#allocation14], 1
    %2476 = vsyncpa [#allocation17], 1
    %2477 = vsyncpa [#allocation20], 1
    %2478 = vsyncpa [#allocation23], 1

</llo_original>
